<compile_context>
chip_gen: v6e
topology: v6e:2x2x1
jax: 0.10.0
libtpu: 0.0.40
codegen_flags: <defaults>
</compile_context>

<pallas_src>
import jax
import jax.numpy as jnp
from jax import lax
from jax.experimental import pallas as pl
from jax.experimental.pallas import tpu as pltpu
from functools import partial


def _elu(x):
    # ELU(alpha=1): x if x>0 else exp(x)-1  (clamp arg so exp never overflows)
    return jnp.where(x > 0, x, jnp.exp(jnp.minimum(x, 0.0)) - 1.0)


# --------------------------- fused decoder kernel ---------------------------
def _make_decoder_block_kernel(S, C, L, B):
    """S: upsample stride, C: out channels, L: input length, B: batch."""
    SC = S * C
    BL = B * L

    def kernel(x_ref, wa_ref, wb_ref, bt_ref,
               w7a_ref, b7a_ref, w1a_ref, b1a_ref,
               w7b_ref, b7b_ref, w1b_ref, b1b_ref,
               w7c_ref, b7c_ref, w1c_ref, b1c_ref,
               o_ref):
        x = x_ref[...]                                   # (B*L, 2C) bf16

        # Hoisted index tensors reused by every causal shift below.
        row_idx = lax.broadcasted_iota(jnp.int32, (BL, SC), 0)
        col_idx = lax.broadcasted_iota(jnp.int32, (BL, SC), 1)
        if (L & (L - 1)) == 0:                           # per-sequence row index
            loc_row = jnp.bitwise_and(row_idx, L - 1)
        else:
            loc_row = row_idx % L

        def row_shift(y, q):
            # out[b, m] = y[b, m-q], zero-filled (sublane roll + per-seq mask).
            if q == 0:
                return y
            if q >= L:
                return jnp.zeros_like(y)
            return jnp.where(loc_row >= q, pltpu.roll(y, shift=q, axis=0), 0.0)

        # ---- causal ConvTranspose1d (k=2S, stride=S) as two matmuls --------
        # out[b, m*S + p] = x[b, m] @ W[:, :, p] + x[b, m-1] @ W[:, :, p+S]
        # The m-1 shift is applied AFTER the matmul (row_shift of x@Wb), so the
        # input is never duplicated and the MXU sees clean unshifted operands.
        h = jnp.dot(x, wa_ref[...], preferred_element_type=jnp.float32)
        g = jnp.dot(x, wb_ref[...], preferred_element_type=jnp.float32)
        h = h + row_shift(g, 1) + bt_ref[...]            # phase-major (BL, S*C) f32

        def shift_phase_major(y, a):
            # Phase-major image of a causal shift by `a` output samples.
            # y[b*L+m, p*C+c] = v[b, m*S+p, c] -> image of v[b, n-a] (zeros n<a)
            if a == 0:
                return y
            q, r = a // S, a % S
            if r == 0:
                return row_shift(y, q)
            yr = pltpu.roll(y, shift=r * C, axis=1)      # rotate whole phase blocks
            hi = row_shift(yr, q)                        # phases p >= r
            lo = row_shift(yr, q + 1)                    # phases p <  r (wrapped)
            return jnp.where(col_idx >= r * C, hi, lo)

        def residual_unit(y, w7_ref, b7_ref, w1_ref, b1_ref, dilation):
            # 7-tap dilated causal conv as ONE (BL, 7*S*C) @ (7*S*C, S*C) matmul
            taps = [shift_phase_major(y, j * dilation).astype(jnp.bfloat16)
                    for j in range(7)]
            hc = jnp.concatenate(taps, axis=1)
            z = jnp.dot(hc, w7_ref[...], preferred_element_type=jnp.float32)
            z = _elu(z + b7_ref[...])
            z = jnp.dot(z.astype(jnp.bfloat16), w1_ref[...],
                        preferred_element_type=jnp.float32) + b1_ref[...]
            return y + z

        h = _elu(h)
        h = residual_unit(h, w7a_ref, b7a_ref, w1a_ref, b1a_ref, 1)
        h = _elu(h)
        h = residual_unit(h, w7b_ref, b7b_ref, w1b_ref, b1b_ref, 3)
        h = _elu(h)
        h = residual_unit(h, w7c_ref, b7c_ref, w1c_ref, b1c_ref, 9)
        o_ref[...] = h                                   # lane-dense (BL, S*C) store

    return kernel


# -------------------- one-time weight packing (off the fwd path) ------------
def pack_decoder_params(params, stride):
    """Repack PyTorch-layout weights into kernel layout. Call ONCE."""
    wt, bt = params["wt"], params["bt"]                  # (2C, C, 2S), (C,)
    two_c, C, _ = wt.shape
    S = stride
    SC = S * C

    # conv-transpose weight, phase-concatenated: column p*C+c <-> W[:, c, p]
    wa = jnp.transpose(wt[:, :, :S], (0, 2, 1)).reshape(two_c, SC)
    wb = jnp.transpose(wt[:, :, S:], (0, 2, 1)).reshape(two_c, SC)

    packed = {
        "wa": wa.astype(jnp.bfloat16),                   # (2C, S*C)
        "wb": wb.astype(jnp.bfloat16),                   # (2C, S*C)
        "bt": jnp.tile(bt, S).reshape(1, SC).astype(jnp.float32),
        "rus": [],
    }

    # residual-unit weights: block-diagonal (per-phase) phase-major form.
    # TODO(synk): for production C>=128 use sample-major (7C, C) weights
    # instead (the kron form wastes S x MXU FLOPs and S^2 x weight VMEM).
    eye_s = jnp.eye(S, dtype=jnp.float32)
    for (w7, b7, w1, b1) in params["rus"]:
        # tap j (causal shift by j*dil samples) multiplies W_torch[:, :, 6-j].T
        blocks = [jnp.kron(eye_s, jnp.transpose(w7[:, :, 6 - j])) for j in range(7)]
        packed["rus"].append((
            jnp.concatenate(blocks, axis=0).astype(jnp.bfloat16),     # (7*S*C, S*C)
            jnp.tile(b7, S).reshape(1, SC).astype(jnp.float32),
            jnp.kron(eye_s, jnp.transpose(w1[:, :, 0])).astype(jnp.bfloat16),
            jnp.tile(b1, S).reshape(1, SC).astype(jnp.float32),
        ))
    return packed


# ------------------------------ jitted forward -------------------------------
@partial(jax.jit, static_argnames=("stride",))
def decoder_block_forward(x_ncl, packed, *, stride):
    B, Cin, L_in = x_ncl.shape
    C = Cin // 2
    S = stride
    SC = S * C
    L_out = L_in * S

    # sample-major with batch folded into the sublane (M) dimension
    x2 = jnp.transpose(x_ncl, (0, 2, 1)).reshape(B * L_in, Cin).astype(jnp.bfloat16)

    ru_args = []
    for (w7c_, b7c_, w1c_, b1c_) in packed["rus"]:
        ru_args += [w7c_, b7c_, w1c_, b1c_]

    kernel = _make_decoder_block_kernel(S, C, L_in, B)
    # No grid: single invocation, whole arrays in VMEM (tiny at test sizes).
    # TODO(synk): at production sizes tile L with a 6*max_dilation causal halo
    # and set pltpu.CompilerParams(vmem_limit_bytes=...) explicitly.
    out_wide = pl.pallas_call(
        kernel,
        out_shape=jax.ShapeDtypeStruct((B * L_in, SC), jnp.float32),
    )(x2, packed["wa"], packed["wb"], packed["bt"], *ru_args)

    # phase-major (B*L_in, S*C) is row-major identical to (B, L_out, C);
    # final NCL transpose kept in the jitted wrapper (tiny at test sizes).
    out = out_wide.reshape(B, L_out, C)
    return jnp.transpose(out, (0, 2, 1))


# -------------------- deterministic parameter initialization ----------------
def init_params(key, out_channels, stride):
    C, S = out_channels, stride
    keys = iter(jax.random.split(key, 16))

    def weight_norm(v):
        # PyTorch weight_norm(dim=0) at init: g = ||v|| over all dims != 0
        norm = jnp.sqrt(jnp.sum(v * v, axis=tuple(range(1, v.ndim)), keepdims=True))
        g = norm.reshape(-1)
        return g.reshape((-1,) + (1,) * (v.ndim - 1)) * v / norm

    vt = jax.random.normal(next(keys), (2 * C, C, 2 * S), jnp.float32) * 0.1
    wt = weight_norm(vt)                                 # ConvTranspose1d weight
    bt = jax.random.normal(next(keys), (C,), jnp.float32) * 0.1

    rus = []
    for _ in range(3):
        v7 = jax.random.normal(next(keys), (C, C, 7), jnp.float32) * 0.05
        b7 = jax.random.normal(next(keys), (C,), jnp.float32) * 0.1
        v1 = jax.random.normal(next(keys), (C, C, 1), jnp.float32) * 0.1
        b1 = jax.random.normal(next(keys), (C,), jnp.float32) * 0.1
        rus.append((weight_norm(v7), b7, weight_norm(v1), b1))

    return {"wt": wt, "bt": bt, "rus": rus}


# ------------------------- pure-JAX reference (NCL) --------------------------
def ref_decoder_block(x_ncl, params, stride):
    S = stride
    wt, bt = params["wt"], params["bt"]
    B, Cin, L = x_ncl.shape
    C, K = wt.shape[1], wt.shape[2]
    L_full = (L - 1) * S + K
    y = jnp.zeros((B, C, L_full), jnp.float32)
    for i in range(L):
        for k in range(K):
            y = y.at[:, :, i * S + k].add(
                jnp.einsum("bi,io->bo", x_ncl[:, :, i], wt[:, :, k]))
    y = y[:, :, :L * S] + bt[None, :, None]              # causal crop
    h = _elu(y)
    for (w7, b7, w1, b1), d in zip(params["rus"], (1, 3, 9)):
        pad = d * 6
        xp = jnp.pad(h, ((0, 0), (0, 0), (pad, 0)))
        Lh = h.shape[-1]
        z = jnp.zeros_like(h)
        for t in range(7):
            z = z + jnp.einsum("bcl,oc->bol", xp[:, :, t * d:t * d + Lh], w7[:, :, t])
        z = _elu(z + b7[None, :, None])
        z = jnp.einsum("bcl,oc->bol", z, w1[:, :, 0]) + b1[None, :, None]
        h = h + z
        if d != 9:
            h = _elu(h)
    return h


if __name__ == "__main__":
    B, C, S, L_in = 2, 32, 4, 16          # input is (B, 2C, L_in) in PyTorch NCL
    key = jax.random.PRNGKey(0)
    kx, kp = jax.random.split(key)
    x = jax.random.normal(kx, (B, 2 * C, L_in), jnp.float32)
    params = init_params(kp, C, S)

    packed = pack_decoder_params(params, S)              # one-time repacking
    packed = jax.block_until_ready(packed)

    out = decoder_block_forward(x, packed, stride=S)
    out = jax.block_until_ready(out)
    assert out.shape == (B, C, L_in * S)

    ref = ref_decoder_block(x, params, S)
    err = float(jnp.max(jnp.abs(out - ref)))
    # bf16 matmul operands (f32 accumulation) -> slightly looser tolerance
    if not jnp.allclose(out, ref, atol=1e-1, rtol=1e-1):
        raise AssertionError(f"Pallas/reference mismatch, max abs err = {err}")

    print("KERNEL_OK")
</pallas_src>

<mosaic_0001>
module attributes {stable_mosaic.version = 11 : i64} {
  func.func @kernel(%arg0: memref<32x64xbf16, #tpu.memory_space<vmem>>, %arg1: memref<64x128xbf16, #tpu.memory_space<vmem>>, %arg2: memref<64x128xbf16, #tpu.memory_space<vmem>>, %arg3: memref<1x128xf32, #tpu.memory_space<vmem>>, %arg4: memref<896x128xbf16, #tpu.memory_space<vmem>>, %arg5: memref<1x128xf32, #tpu.memory_space<vmem>>, %arg6: memref<128x128xbf16, #tpu.memory_space<vmem>>, %arg7: memref<1x128xf32, #tpu.memory_space<vmem>>, %arg8: memref<896x128xbf16, #tpu.memory_space<vmem>>, %arg9: memref<1x128xf32, #tpu.memory_space<vmem>>, %arg10: memref<128x128xbf16, #tpu.memory_space<vmem>>, %arg11: memref<1x128xf32, #tpu.memory_space<vmem>>, %arg12: memref<896x128xbf16, #tpu.memory_space<vmem>>, %arg13: memref<1x128xf32, #tpu.memory_space<vmem>>, %arg14: memref<128x128xbf16, #tpu.memory_space<vmem>>, %arg15: memref<1x128xf32, #tpu.memory_space<vmem>>, %arg16: memref<32x128xf32, #tpu.memory_space<vmem>>) attributes {dimension_semantics = [], scalar_prefetch = 0 : i64, scratch_operands = 0 : i64, tpu.core_type = #tpu.core_type<tc>} {
    %c0 = arith.constant 0 : index
    %c0_0 = arith.constant 0 : index
    %0 = vector.load %arg0[%c0, %c0_0] : memref<32x64xbf16, #tpu.memory_space<vmem>>, vector<32x64xbf16>
    %1 = tpu.iota {dimensions = array<i32: 0>} : vector<32x128xi32>
    %2 = tpu.iota {dimensions = array<i32: 1>} : vector<32x128xi32>
    %c15_i32 = arith.constant 15 : i32
    %3 = vector.broadcast %c15_i32 : i32 to vector<32x128xi32>
    %4 = arith.andi %1, %3 : vector<32x128xi32>
    %c0_1 = arith.constant 0 : index
    %c0_2 = arith.constant 0 : index
    %5 = vector.load %arg1[%c0_1, %c0_2] : memref<64x128xbf16, #tpu.memory_space<vmem>>, vector<64x128xbf16>
    %cst = arith.constant dense<0.000000e+00> : vector<32x128xf32>
    %6 = tpu.matmul %0, %5, %cst {dimension_numbers = #tpu.dot_dimension_numbers<[1], [0], [0], [1], [0, 0, 1, 1], [], []>} : vector<32x64xbf16>, vector<64x128xbf16>, vector<32x128xf32> -> vector<32x128xf32>
    %c0_3 = arith.constant 0 : index
    %c0_4 = arith.constant 0 : index
    %7 = vector.load %arg2[%c0_3, %c0_4] : memref<64x128xbf16, #tpu.memory_space<vmem>>, vector<64x128xbf16>
    %cst_5 = arith.constant dense<0.000000e+00> : vector<32x128xf32>
    %8 = tpu.matmul %0, %7, %cst_5 {dimension_numbers = #tpu.dot_dimension_numbers<[1], [0], [0], [1], [0, 0, 1, 1], [], []>} : vector<32x64xbf16>, vector<64x128xbf16>, vector<32x128xf32> -> vector<32x128xf32>
    %c1_i32 = arith.constant 1 : i32
    %9 = vector.broadcast %c1_i32 : i32 to vector<32x128xi32>
    %10 = arith.cmpi sge, %4, %9 : vector<32x128xi32>
    %c1_i32_6 = arith.constant 1 : i32
    %11 = tpu.dynamic_rotate %8 by %c1_i32_6 dim 0 : vector<32x128xf32>, i32 -> vector<32x128xf32>
    %cst_7 = arith.constant 0.000000e+00 : f32
    %12 = vector.broadcast %cst_7 : f32 to vector<32x128xf32>
    %13 = arith.select %10, %11, %12 : vector<32x128xi1>, vector<32x128xf32>
    %14 = arith.addf %6, %13 : vector<32x128xf32>
    %c0_8 = arith.constant 0 : index
    %c0_9 = arith.constant 0 : index
    %15 = vector.load %arg3[%c0_8, %c0_9] : memref<1x128xf32, #tpu.memory_space<vmem>>, vector<1x128xf32>
    %16 = vector.broadcast %15 : vector<1x128xf32> to vector<32x128xf32>
    %17 = arith.addf %14, %16 : vector<32x128xf32>
    %cst_10 = arith.constant 0.000000e+00 : f32
    %18 = vector.broadcast %cst_10 : f32 to vector<32x128xf32>
    %19 = arith.cmpf ogt, %17, %18 : vector<32x128xf32>
    %cst_11 = arith.constant 0.000000e+00 : f32
    %20 = vector.broadcast %cst_11 : f32 to vector<32x128xf32>
    %21 = arith.minimumf %17, %20 : vector<32x128xf32>
    %22 = math.exp %21 : vector<32x128xf32>
    %cst_12 = arith.constant 1.000000e+00 : f32
    %23 = vector.broadcast %cst_12 : f32 to vector<32x128xf32>
    %24 = arith.subf %22, %23 : vector<32x128xf32>
    %25 = arith.select %19, %17, %24 : vector<32x128xi1>, vector<32x128xf32>
    %26 = arith.truncf %25 : vector<32x128xf32> to vector<32x128xbf16>
    %c32_i32 = arith.constant 32 : i32
    %27 = tpu.dynamic_rotate %25 by %c32_i32 dim 1 : vector<32x128xf32>, i32 -> vector<32x128xf32>
    %c1_i32_13 = arith.constant 1 : i32
    %28 = vector.broadcast %c1_i32_13 : i32 to vector<32x128xi32>
    %29 = arith.cmpi sge, %4, %28 : vector<32x128xi32>
    %c1_i32_14 = arith.constant 1 : i32
    %30 = tpu.dynamic_rotate %27 by %c1_i32_14 dim 0 : vector<32x128xf32>, i32 -> vector<32x128xf32>
    %cst_15 = arith.constant 0.000000e+00 : f32
    %31 = vector.broadcast %cst_15 : f32 to vector<32x128xf32>
    %32 = arith.select %29, %30, %31 : vector<32x128xi1>, vector<32x128xf32>
    %c32_i32_16 = arith.constant 32 : i32
    %33 = vector.broadcast %c32_i32_16 : i32 to vector<32x128xi32>
    %34 = arith.cmpi sge, %2, %33 : vector<32x128xi32>
    %35 = arith.select %34, %27, %32 : vector<32x128xi1>, vector<32x128xf32>
    %36 = arith.truncf %35 : vector<32x128xf32> to vector<32x128xbf16>
    %c64_i32 = arith.constant 64 : i32
    %37 = tpu.dynamic_rotate %25 by %c64_i32 dim 1 : vector<32x128xf32>, i32 -> vector<32x128xf32>
    %c1_i32_17 = arith.constant 1 : i32
    %38 = vector.broadcast %c1_i32_17 : i32 to vector<32x128xi32>
    %39 = arith.cmpi sge, %4, %38 : vector<32x128xi32>
    %c1_i32_18 = arith.constant 1 : i32
    %40 = tpu.dynamic_rotate %37 by %c1_i32_18 dim 0 : vector<32x128xf32>, i32 -> vector<32x128xf32>
    %cst_19 = arith.constant 0.000000e+00 : f32
    %41 = vector.broadcast %cst_19 : f32 to vector<32x128xf32>
    %42 = arith.select %39, %40, %41 : vector<32x128xi1>, vector<32x128xf32>
    %c64_i32_20 = arith.constant 64 : i32
    %43 = vector.broadcast %c64_i32_20 : i32 to vector<32x128xi32>
    %44 = arith.cmpi sge, %2, %43 : vector<32x128xi32>
    %45 = arith.select %44, %37, %42 : vector<32x128xi1>, vector<32x128xf32>
    %46 = arith.truncf %45 : vector<32x128xf32> to vector<32x128xbf16>
    %c96_i32 = arith.constant 96 : i32
    %47 = tpu.dynamic_rotate %25 by %c96_i32 dim 1 : vector<32x128xf32>, i32 -> vector<32x128xf32>
    %c1_i32_21 = arith.constant 1 : i32
    %48 = vector.broadcast %c1_i32_21 : i32 to vector<32x128xi32>
    %49 = arith.cmpi sge, %4, %48 : vector<32x128xi32>
    %c1_i32_22 = arith.constant 1 : i32
    %50 = tpu.dynamic_rotate %47 by %c1_i32_22 dim 0 : vector<32x128xf32>, i32 -> vector<32x128xf32>
    %cst_23 = arith.constant 0.000000e+00 : f32
    %51 = vector.broadcast %cst_23 : f32 to vector<32x128xf32>
    %52 = arith.select %49, %50, %51 : vector<32x128xi1>, vector<32x128xf32>
    %c96_i32_24 = arith.constant 96 : i32
    %53 = vector.broadcast %c96_i32_24 : i32 to vector<32x128xi32>
    %54 = arith.cmpi sge, %2, %53 : vector<32x128xi32>
    %55 = arith.select %54, %47, %52 : vector<32x128xi1>, vector<32x128xf32>
    %56 = arith.truncf %55 : vector<32x128xf32> to vector<32x128xbf16>
    %c1_i32_25 = arith.constant 1 : i32
    %57 = vector.broadcast %c1_i32_25 : i32 to vector<32x128xi32>
    %58 = arith.cmpi sge, %4, %57 : vector<32x128xi32>
    %c1_i32_26 = arith.constant 1 : i32
    %59 = tpu.dynamic_rotate %25 by %c1_i32_26 dim 0 : vector<32x128xf32>, i32 -> vector<32x128xf32>
    %cst_27 = arith.constant 0.000000e+00 : f32
    %60 = vector.broadcast %cst_27 : f32 to vector<32x128xf32>
    %61 = arith.select %58, %59, %60 : vector<32x128xi1>, vector<32x128xf32>
    %62 = arith.truncf %61 : vector<32x128xf32> to vector<32x128xbf16>
    %c32_i32_28 = arith.constant 32 : i32
    %63 = tpu.dynamic_rotate %25 by %c32_i32_28 dim 1 : vector<32x128xf32>, i32 -> vector<32x128xf32>
    %c1_i32_29 = arith.constant 1 : i32
    %64 = vector.broadcast %c1_i32_29 : i32 to vector<32x128xi32>
    %65 = arith.cmpi sge, %4, %64 : vector<32x128xi32>
    %c1_i32_30 = arith.constant 1 : i32
    %66 = tpu.dynamic_rotate %63 by %c1_i32_30 dim 0 : vector<32x128xf32>, i32 -> vector<32x128xf32>
    %cst_31 = arith.constant 0.000000e+00 : f32
    %67 = vector.broadcast %cst_31 : f32 to vector<32x128xf32>
    %68 = arith.select %65, %66, %67 : vector<32x128xi1>, vector<32x128xf32>
    %c2_i32 = arith.constant 2 : i32
    %69 = vector.broadcast %c2_i32 : i32 to vector<32x128xi32>
    %70 = arith.cmpi sge, %4, %69 : vector<32x128xi32>
    %c2_i32_32 = arith.constant 2 : i32
    %71 = tpu.dynamic_rotate %63 by %c2_i32_32 dim 0 : vector<32x128xf32>, i32 -> vector<32x128xf32>
    %cst_33 = arith.constant 0.000000e+00 : f32
    %72 = vector.broadcast %cst_33 : f32 to vector<32x128xf32>
    %73 = arith.select %70, %71, %72 : vector<32x128xi1>, vector<32x128xf32>
    %c32_i32_34 = arith.constant 32 : i32
    %74 = vector.broadcast %c32_i32_34 : i32 to vector<32x128xi32>
    %75 = arith.cmpi sge, %2, %74 : vector<32x128xi32>
    %76 = arith.select %75, %68, %73 : vector<32x128xi1>, vector<32x128xf32>
    %77 = arith.truncf %76 : vector<32x128xf32> to vector<32x128xbf16>
    %c64_i32_35 = arith.constant 64 : i32
    %78 = tpu.dynamic_rotate %25 by %c64_i32_35 dim 1 : vector<32x128xf32>, i32 -> vector<32x128xf32>
    %c1_i32_36 = arith.constant 1 : i32
    %79 = vector.broadcast %c1_i32_36 : i32 to vector<32x128xi32>
    %80 = arith.cmpi sge, %4, %79 : vector<32x128xi32>
    %c1_i32_37 = arith.constant 1 : i32
    %81 = tpu.dynamic_rotate %78 by %c1_i32_37 dim 0 : vector<32x128xf32>, i32 -> vector<32x128xf32>
    %cst_38 = arith.constant 0.000000e+00 : f32
    %82 = vector.broadcast %cst_38 : f32 to vector<32x128xf32>
    %83 = arith.select %80, %81, %82 : vector<32x128xi1>, vector<32x128xf32>
    %c2_i32_39 = arith.constant 2 : i32
    %84 = vector.broadcast %c2_i32_39 : i32 to vector<32x128xi32>
    %85 = arith.cmpi sge, %4, %84 : vector<32x128xi32>
    %c2_i32_40 = arith.constant 2 : i32
    %86 = tpu.dynamic_rotate %78 by %c2_i32_40 dim 0 : vector<32x128xf32>, i32 -> vector<32x128xf32>
    %cst_41 = arith.constant 0.000000e+00 : f32
    %87 = vector.broadcast %cst_41 : f32 to vector<32x128xf32>
    %88 = arith.select %85, %86, %87 : vector<32x128xi1>, vector<32x128xf32>
    %c64_i32_42 = arith.constant 64 : i32
    %89 = vector.broadcast %c64_i32_42 : i32 to vector<32x128xi32>
    %90 = arith.cmpi sge, %2, %89 : vector<32x128xi32>
    %91 = arith.select %90, %83, %88 : vector<32x128xi1>, vector<32x128xf32>
    %92 = arith.truncf %91 : vector<32x128xf32> to vector<32x128xbf16>
    %93 = tpu.concatenate %26, %36, %46, %56, %62, %77, %92 in 1 : vector<32x128xbf16>, vector<32x128xbf16>, vector<32x128xbf16>, vector<32x128xbf16>, vector<32x128xbf16>, vector<32x128xbf16>, vector<32x128xbf16> -> vector<32x896xbf16>
    %c0_43 = arith.constant 0 : index
    %c0_44 = arith.constant 0 : index
    %94 = vector.load %arg4[%c0_43, %c0_44] : memref<896x128xbf16, #tpu.memory_space<vmem>>, vector<896x128xbf16>
    %cst_45 = arith.constant dense<0.000000e+00> : vector<32x128xf32>
    %95 = tpu.matmul %93, %94, %cst_45 {dimension_numbers = #tpu.dot_dimension_numbers<[1], [0], [0], [1], [0, 0, 1, 1], [], []>} : vector<32x896xbf16>, vector<896x128xbf16>, vector<32x128xf32> -> vector<32x128xf32>
    %c0_46 = arith.constant 0 : index
    %c0_47 = arith.constant 0 : index
    %96 = vector.load %arg5[%c0_46, %c0_47] : memref<1x128xf32, #tpu.memory_space<vmem>>, vector<1x128xf32>
    %97 = vector.broadcast %96 : vector<1x128xf32> to vector<32x128xf32>
    %98 = arith.addf %95, %97 : vector<32x128xf32>
    %cst_48 = arith.constant 0.000000e+00 : f32
    %99 = vector.broadcast %cst_48 : f32 to vector<32x128xf32>
    %100 = arith.cmpf ogt, %98, %99 : vector<32x128xf32>
    %cst_49 = arith.constant 0.000000e+00 : f32
    %101 = vector.broadcast %cst_49 : f32 to vector<32x128xf32>
    %102 = arith.minimumf %98, %101 : vector<32x128xf32>
    %103 = math.exp %102 : vector<32x128xf32>
    %cst_50 = arith.constant 1.000000e+00 : f32
    %104 = vector.broadcast %cst_50 : f32 to vector<32x128xf32>
    %105 = arith.subf %103, %104 : vector<32x128xf32>
    %106 = arith.select %100, %98, %105 : vector<32x128xi1>, vector<32x128xf32>
    %107 = arith.truncf %106 : vector<32x128xf32> to vector<32x128xbf16>
    %c0_51 = arith.constant 0 : index
    %c0_52 = arith.constant 0 : index
    %108 = vector.load %arg6[%c0_51, %c0_52] : memref<128x128xbf16, #tpu.memory_space<vmem>>, vector<128x128xbf16>
    %cst_53 = arith.constant dense<0.000000e+00> : vector<32x128xf32>
    %109 = tpu.matmul %107, %108, %cst_53 {dimension_numbers = #tpu.dot_dimension_numbers<[1], [0], [0], [1], [0, 0, 1, 1], [], []>} : vector<32x128xbf16>, vector<128x128xbf16>, vector<32x128xf32> -> vector<32x128xf32>
    %c0_54 = arith.constant 0 : index
    %c0_55 = arith.constant 0 : index
    %110 = vector.load %arg7[%c0_54, %c0_55] : memref<1x128xf32, #tpu.memory_space<vmem>>, vector<1x128xf32>
    %111 = vector.broadcast %110 : vector<1x128xf32> to vector<32x128xf32>
    %112 = arith.addf %109, %111 : vector<32x128xf32>
    %113 = arith.addf %25, %112 : vector<32x128xf32>
    %cst_56 = arith.constant 0.000000e+00 : f32
    %114 = vector.broadcast %cst_56 : f32 to vector<32x128xf32>
    %115 = arith.cmpf ogt, %113, %114 : vector<32x128xf32>
    %cst_57 = arith.constant 0.000000e+00 : f32
    %116 = vector.broadcast %cst_57 : f32 to vector<32x128xf32>
    %117 = arith.minimumf %113, %116 : vector<32x128xf32>
    %118 = math.exp %117 : vector<32x128xf32>
    %cst_58 = arith.constant 1.000000e+00 : f32
    %119 = vector.broadcast %cst_58 : f32 to vector<32x128xf32>
    %120 = arith.subf %118, %119 : vector<32x128xf32>
    %121 = arith.select %115, %113, %120 : vector<32x128xi1>, vector<32x128xf32>
    %122 = arith.truncf %121 : vector<32x128xf32> to vector<32x128xbf16>
    %c96_i32_59 = arith.constant 96 : i32
    %123 = tpu.dynamic_rotate %121 by %c96_i32_59 dim 1 : vector<32x128xf32>, i32 -> vector<32x128xf32>
    %c1_i32_60 = arith.constant 1 : i32
    %124 = vector.broadcast %c1_i32_60 : i32 to vector<32x128xi32>
    %125 = arith.cmpi sge, %4, %124 : vector<32x128xi32>
    %c1_i32_61 = arith.constant 1 : i32
    %126 = tpu.dynamic_rotate %123 by %c1_i32_61 dim 0 : vector<32x128xf32>, i32 -> vector<32x128xf32>
    %cst_62 = arith.constant 0.000000e+00 : f32
    %127 = vector.broadcast %cst_62 : f32 to vector<32x128xf32>
    %128 = arith.select %125, %126, %127 : vector<32x128xi1>, vector<32x128xf32>
    %c96_i32_63 = arith.constant 96 : i32
    %129 = vector.broadcast %c96_i32_63 : i32 to vector<32x128xi32>
    %130 = arith.cmpi sge, %2, %129 : vector<32x128xi32>
    %131 = arith.select %130, %123, %128 : vector<32x128xi1>, vector<32x128xf32>
    %132 = arith.truncf %131 : vector<32x128xf32> to vector<32x128xbf16>
    %c64_i32_64 = arith.constant 64 : i32
    %133 = tpu.dynamic_rotate %121 by %c64_i32_64 dim 1 : vector<32x128xf32>, i32 -> vector<32x128xf32>
    %c1_i32_65 = arith.constant 1 : i32
    %134 = vector.broadcast %c1_i32_65 : i32 to vector<32x128xi32>
    %135 = arith.cmpi sge, %4, %134 : vector<32x128xi32>
    %c1_i32_66 = arith.constant 1 : i32
    %136 = tpu.dynamic_rotate %133 by %c1_i32_66 dim 0 : vector<32x128xf32>, i32 -> vector<32x128xf32>
    %cst_67 = arith.constant 0.000000e+00 : f32
    %137 = vector.broadcast %cst_67 : f32 to vector<32x128xf32>
    %138 = arith.select %135, %136, %137 : vector<32x128xi1>, vector<32x128xf32>
    %c2_i32_68 = arith.constant 2 : i32
    %139 = vector.broadcast %c2_i32_68 : i32 to vector<32x128xi32>
    %140 = arith.cmpi sge, %4, %139 : vector<32x128xi32>
    %c2_i32_69 = arith.constant 2 : i32
    %141 = tpu.dynamic_rotate %133 by %c2_i32_69 dim 0 : vector<32x128xf32>, i32 -> vector<32x128xf32>
    %cst_70 = arith.constant 0.000000e+00 : f32
    %142 = vector.broadcast %cst_70 : f32 to vector<32x128xf32>
    %143 = arith.select %140, %141, %142 : vector<32x128xi1>, vector<32x128xf32>
    %c64_i32_71 = arith.constant 64 : i32
    %144 = vector.broadcast %c64_i32_71 : i32 to vector<32x128xi32>
    %145 = arith.cmpi sge, %2, %144 : vector<32x128xi32>
    %146 = arith.select %145, %138, %143 : vector<32x128xi1>, vector<32x128xf32>
    %147 = arith.truncf %146 : vector<32x128xf32> to vector<32x128xbf16>
    %c32_i32_72 = arith.constant 32 : i32
    %148 = tpu.dynamic_rotate %121 by %c32_i32_72 dim 1 : vector<32x128xf32>, i32 -> vector<32x128xf32>
    %c2_i32_73 = arith.constant 2 : i32
    %149 = vector.broadcast %c2_i32_73 : i32 to vector<32x128xi32>
    %150 = arith.cmpi sge, %4, %149 : vector<32x128xi32>
    %c2_i32_74 = arith.constant 2 : i32
    %151 = tpu.dynamic_rotate %148 by %c2_i32_74 dim 0 : vector<32x128xf32>, i32 -> vector<32x128xf32>
    %cst_75 = arith.constant 0.000000e+00 : f32
    %152 = vector.broadcast %cst_75 : f32 to vector<32x128xf32>
    %153 = arith.select %150, %151, %152 : vector<32x128xi1>, vector<32x128xf32>
    %c3_i32 = arith.constant 3 : i32
    %154 = vector.broadcast %c3_i32 : i32 to vector<32x128xi32>
    %155 = arith.cmpi sge, %4, %154 : vector<32x128xi32>
    %c3_i32_76 = arith.constant 3 : i32
    %156 = tpu.dynamic_rotate %148 by %c3_i32_76 dim 0 : vector<32x128xf32>, i32 -> vector<32x128xf32>
    %cst_77 = arith.constant 0.000000e+00 : f32
    %157 = vector.broadcast %cst_77 : f32 to vector<32x128xf32>
    %158 = arith.select %155, %156, %157 : vector<32x128xi1>, vector<32x128xf32>
    %c32_i32_78 = arith.constant 32 : i32
    %159 = vector.broadcast %c32_i32_78 : i32 to vector<32x128xi32>
    %160 = arith.cmpi sge, %2, %159 : vector<32x128xi32>
    %161 = arith.select %160, %153, %158 : vector<32x128xi1>, vector<32x128xf32>
    %162 = arith.truncf %161 : vector<32x128xf32> to vector<32x128xbf16>
    %c3_i32_79 = arith.constant 3 : i32
    %163 = vector.broadcast %c3_i32_79 : i32 to vector<32x128xi32>
    %164 = arith.cmpi sge, %4, %163 : vector<32x128xi32>
    %c3_i32_80 = arith.constant 3 : i32
    %165 = tpu.dynamic_rotate %121 by %c3_i32_80 dim 0 : vector<32x128xf32>, i32 -> vector<32x128xf32>
    %cst_81 = arith.constant 0.000000e+00 : f32
    %166 = vector.broadcast %cst_81 : f32 to vector<32x128xf32>
    %167 = arith.select %164, %165, %166 : vector<32x128xi1>, vector<32x128xf32>
    %168 = arith.truncf %167 : vector<32x128xf32> to vector<32x128xbf16>
    %c96_i32_82 = arith.constant 96 : i32
    %169 = tpu.dynamic_rotate %121 by %c96_i32_82 dim 1 : vector<32x128xf32>, i32 -> vector<32x128xf32>
    %c3_i32_83 = arith.constant 3 : i32
    %170 = vector.broadcast %c3_i32_83 : i32 to vector<32x128xi32>
    %171 = arith.cmpi sge, %4, %170 : vector<32x128xi32>
    %c3_i32_84 = arith.constant 3 : i32
    %172 = tpu.dynamic_rotate %169 by %c3_i32_84 dim 0 : vector<32x128xf32>, i32 -> vector<32x128xf32>
    %cst_85 = arith.constant 0.000000e+00 : f32
    %173 = vector.broadcast %cst_85 : f32 to vector<32x128xf32>
    %174 = arith.select %171, %172, %173 : vector<32x128xi1>, vector<32x128xf32>
    %c4_i32 = arith.constant 4 : i32
    %175 = vector.broadcast %c4_i32 : i32 to vector<32x128xi32>
    %176 = arith.cmpi sge, %4, %175 : vector<32x128xi32>
    %c4_i32_86 = arith.constant 4 : i32
    %177 = tpu.dynamic_rotate %169 by %c4_i32_86 dim 0 : vector<32x128xf32>, i32 -> vector<32x128xf32>
    %cst_87 = arith.constant 0.000000e+00 : f32
    %178 = vector.broadcast %cst_87 : f32 to vector<32x128xf32>
    %179 = arith.select %176, %177, %178 : vector<32x128xi1>, vector<32x128xf32>
    %c96_i32_88 = arith.constant 96 : i32
    %180 = vector.broadcast %c96_i32_88 : i32 to vector<32x128xi32>
    %181 = arith.cmpi sge, %2, %180 : vector<32x128xi32>
    %182 = arith.select %181, %174, %179 : vector<32x128xi1>, vector<32x128xf32>
    %183 = arith.truncf %182 : vector<32x128xf32> to vector<32x128xbf16>
    %c64_i32_89 = arith.constant 64 : i32
    %184 = tpu.dynamic_rotate %121 by %c64_i32_89 dim 1 : vector<32x128xf32>, i32 -> vector<32x128xf32>
    %c4_i32_90 = arith.constant 4 : i32
    %185 = vector.broadcast %c4_i32_90 : i32 to vector<32x128xi32>
    %186 = arith.cmpi sge, %4, %185 : vector<32x128xi32>
    %c4_i32_91 = arith.constant 4 : i32
    %187 = tpu.dynamic_rotate %184 by %c4_i32_91 dim 0 : vector<32x128xf32>, i32 -> vector<32x128xf32>
    %cst_92 = arith.constant 0.000000e+00 : f32
    %188 = vector.broadcast %cst_92 : f32 to vector<32x128xf32>
    %189 = arith.select %186, %187, %188 : vector<32x128xi1>, vector<32x128xf32>
    %c5_i32 = arith.constant 5 : i32
    %190 = vector.broadcast %c5_i32 : i32 to vector<32x128xi32>
    %191 = arith.cmpi sge, %4, %190 : vector<32x128xi32>
    %c5_i32_93 = arith.constant 5 : i32
    %192 = tpu.dynamic_rotate %184 by %c5_i32_93 dim 0 : vector<32x128xf32>, i32 -> vector<32x128xf32>
    %cst_94 = arith.constant 0.000000e+00 : f32
    %193 = vector.broadcast %cst_94 : f32 to vector<32x128xf32>
    %194 = arith.select %191, %192, %193 : vector<32x128xi1>, vector<32x128xf32>
    %c64_i32_95 = arith.constant 64 : i32
    %195 = vector.broadcast %c64_i32_95 : i32 to vector<32x128xi32>
    %196 = arith.cmpi sge, %2, %195 : vector<32x128xi32>
    %197 = arith.select %196, %189, %194 : vector<32x128xi1>, vector<32x128xf32>
    %198 = arith.truncf %197 : vector<32x128xf32> to vector<32x128xbf16>
    %199 = tpu.concatenate %122, %132, %147, %162, %168, %183, %198 in 1 : vector<32x128xbf16>, vector<32x128xbf16>, vector<32x128xbf16>, vector<32x128xbf16>, vector<32x128xbf16>, vector<32x128xbf16>, vector<32x128xbf16> -> vector<32x896xbf16>
    %c0_96 = arith.constant 0 : index
    %c0_97 = arith.constant 0 : index
    %200 = vector.load %arg8[%c0_96, %c0_97] : memref<896x128xbf16, #tpu.memory_space<vmem>>, vector<896x128xbf16>
    %cst_98 = arith.constant dense<0.000000e+00> : vector<32x128xf32>
    %201 = tpu.matmul %199, %200, %cst_98 {dimension_numbers = #tpu.dot_dimension_numbers<[1], [0], [0], [1], [0, 0, 1, 1], [], []>} : vector<32x896xbf16>, vector<896x128xbf16>, vector<32x128xf32> -> vector<32x128xf32>
    %c0_99 = arith.constant 0 : index
    %c0_100 = arith.constant 0 : index
    %202 = vector.load %arg9[%c0_99, %c0_100] : memref<1x128xf32, #tpu.memory_space<vmem>>, vector<1x128xf32>
    %203 = vector.broadcast %202 : vector<1x128xf32> to vector<32x128xf32>
    %204 = arith.addf %201, %203 : vector<32x128xf32>
    %cst_101 = arith.constant 0.000000e+00 : f32
    %205 = vector.broadcast %cst_101 : f32 to vector<32x128xf32>
    %206 = arith.cmpf ogt, %204, %205 : vector<32x128xf32>
    %cst_102 = arith.constant 0.000000e+00 : f32
    %207 = vector.broadcast %cst_102 : f32 to vector<32x128xf32>
    %208 = arith.minimumf %204, %207 : vector<32x128xf32>
    %209 = math.exp %208 : vector<32x128xf32>
    %cst_103 = arith.constant 1.000000e+00 : f32
    %210 = vector.broadcast %cst_103 : f32 to vector<32x128xf32>
    %211 = arith.subf %209, %210 : vector<32x128xf32>
    %212 = arith.select %206, %204, %211 : vector<32x128xi1>, vector<32x128xf32>
    %213 = arith.truncf %212 : vector<32x128xf32> to vector<32x128xbf16>
    %c0_104 = arith.constant 0 : index
    %c0_105 = arith.constant 0 : index
    %214 = vector.load %arg10[%c0_104, %c0_105] : memref<128x128xbf16, #tpu.memory_space<vmem>>, vector<128x128xbf16>
    %cst_106 = arith.constant dense<0.000000e+00> : vector<32x128xf32>
    %215 = tpu.matmul %213, %214, %cst_106 {dimension_numbers = #tpu.dot_dimension_numbers<[1], [0], [0], [1], [0, 0, 1, 1], [], []>} : vector<32x128xbf16>, vector<128x128xbf16>, vector<32x128xf32> -> vector<32x128xf32>
    %c0_107 = arith.constant 0 : index
    %c0_108 = arith.constant 0 : index
    %216 = vector.load %arg11[%c0_107, %c0_108] : memref<1x128xf32, #tpu.memory_space<vmem>>, vector<1x128xf32>
    %217 = vector.broadcast %216 : vector<1x128xf32> to vector<32x128xf32>
    %218 = arith.addf %215, %217 : vector<32x128xf32>
    %219 = arith.addf %121, %218 : vector<32x128xf32>
    %cst_109 = arith.constant 0.000000e+00 : f32
    %220 = vector.broadcast %cst_109 : f32 to vector<32x128xf32>
    %221 = arith.cmpf ogt, %219, %220 : vector<32x128xf32>
    %cst_110 = arith.constant 0.000000e+00 : f32
    %222 = vector.broadcast %cst_110 : f32 to vector<32x128xf32>
    %223 = arith.minimumf %219, %222 : vector<32x128xf32>
    %224 = math.exp %223 : vector<32x128xf32>
    %cst_111 = arith.constant 1.000000e+00 : f32
    %225 = vector.broadcast %cst_111 : f32 to vector<32x128xf32>
    %226 = arith.subf %224, %225 : vector<32x128xf32>
    %227 = arith.select %221, %219, %226 : vector<32x128xi1>, vector<32x128xf32>
    %228 = arith.truncf %227 : vector<32x128xf32> to vector<32x128xbf16>
    %c32_i32_112 = arith.constant 32 : i32
    %229 = tpu.dynamic_rotate %227 by %c32_i32_112 dim 1 : vector<32x128xf32>, i32 -> vector<32x128xf32>
    %c2_i32_113 = arith.constant 2 : i32
    %230 = vector.broadcast %c2_i32_113 : i32 to vector<32x128xi32>
    %231 = arith.cmpi sge, %4, %230 : vector<32x128xi32>
    %c2_i32_114 = arith.constant 2 : i32
    %232 = tpu.dynamic_rotate %229 by %c2_i32_114 dim 0 : vector<32x128xf32>, i32 -> vector<32x128xf32>
    %cst_115 = arith.constant 0.000000e+00 : f32
    %233 = vector.broadcast %cst_115 : f32 to vector<32x128xf32>
    %234 = arith.select %231, %232, %233 : vector<32x128xi1>, vector<32x128xf32>
    %c3_i32_116 = arith.constant 3 : i32
    %235 = vector.broadcast %c3_i32_116 : i32 to vector<32x128xi32>
    %236 = arith.cmpi sge, %4, %235 : vector<32x128xi32>
    %c3_i32_117 = arith.constant 3 : i32
    %237 = tpu.dynamic_rotate %229 by %c3_i32_117 dim 0 : vector<32x128xf32>, i32 -> vector<32x128xf32>
    %cst_118 = arith.constant 0.000000e+00 : f32
    %238 = vector.broadcast %cst_118 : f32 to vector<32x128xf32>
    %239 = arith.select %236, %237, %238 : vector<32x128xi1>, vector<32x128xf32>
    %c32_i32_119 = arith.constant 32 : i32
    %240 = vector.broadcast %c32_i32_119 : i32 to vector<32x128xi32>
    %241 = arith.cmpi sge, %2, %240 : vector<32x128xi32>
    %242 = arith.select %241, %234, %239 : vector<32x128xi1>, vector<32x128xf32>
    %243 = arith.truncf %242 : vector<32x128xf32> to vector<32x128xbf16>
    %c64_i32_120 = arith.constant 64 : i32
    %244 = tpu.dynamic_rotate %227 by %c64_i32_120 dim 1 : vector<32x128xf32>, i32 -> vector<32x128xf32>
    %c4_i32_121 = arith.constant 4 : i32
    %245 = vector.broadcast %c4_i32_121 : i32 to vector<32x128xi32>
    %246 = arith.cmpi sge, %4, %245 : vector<32x128xi32>
    %c4_i32_122 = arith.constant 4 : i32
    %247 = tpu.dynamic_rotate %244 by %c4_i32_122 dim 0 : vector<32x128xf32>, i32 -> vector<32x128xf32>
    %cst_123 = arith.constant 0.000000e+00 : f32
    %248 = vector.broadcast %cst_123 : f32 to vector<32x128xf32>
    %249 = arith.select %246, %247, %248 : vector<32x128xi1>, vector<32x128xf32>
    %c5_i32_124 = arith.constant 5 : i32
    %250 = vector.broadcast %c5_i32_124 : i32 to vector<32x128xi32>
    %251 = arith.cmpi sge, %4, %250 : vector<32x128xi32>
    %c5_i32_125 = arith.constant 5 : i32
    %252 = tpu.dynamic_rotate %244 by %c5_i32_125 dim 0 : vector<32x128xf32>, i32 -> vector<32x128xf32>
    %cst_126 = arith.constant 0.000000e+00 : f32
    %253 = vector.broadcast %cst_126 : f32 to vector<32x128xf32>
    %254 = arith.select %251, %252, %253 : vector<32x128xi1>, vector<32x128xf32>
    %c64_i32_127 = arith.constant 64 : i32
    %255 = vector.broadcast %c64_i32_127 : i32 to vector<32x128xi32>
    %256 = arith.cmpi sge, %2, %255 : vector<32x128xi32>
    %257 = arith.select %256, %249, %254 : vector<32x128xi1>, vector<32x128xf32>
    %258 = arith.truncf %257 : vector<32x128xf32> to vector<32x128xbf16>
    %c96_i32_128 = arith.constant 96 : i32
    %259 = tpu.dynamic_rotate %227 by %c96_i32_128 dim 1 : vector<32x128xf32>, i32 -> vector<32x128xf32>
    %c6_i32 = arith.constant 6 : i32
    %260 = vector.broadcast %c6_i32 : i32 to vector<32x128xi32>
    %261 = arith.cmpi sge, %4, %260 : vector<32x128xi32>
    %c6_i32_129 = arith.constant 6 : i32
    %262 = tpu.dynamic_rotate %259 by %c6_i32_129 dim 0 : vector<32x128xf32>, i32 -> vector<32x128xf32>
    %cst_130 = arith.constant 0.000000e+00 : f32
    %263 = vector.broadcast %cst_130 : f32 to vector<32x128xf32>
    %264 = arith.select %261, %262, %263 : vector<32x128xi1>, vector<32x128xf32>
    %c7_i32 = arith.constant 7 : i32
    %265 = vector.broadcast %c7_i32 : i32 to vector<32x128xi32>
    %266 = arith.cmpi sge, %4, %265 : vector<32x128xi32>
    %c7_i32_131 = arith.constant 7 : i32
    %267 = tpu.dynamic_rotate %259 by %c7_i32_131 dim 0 : vector<32x128xf32>, i32 -> vector<32x128xf32>
    %cst_132 = arith.constant 0.000000e+00 : f32
    %268 = vector.broadcast %cst_132 : f32 to vector<32x128xf32>
    %269 = arith.select %266, %267, %268 : vector<32x128xi1>, vector<32x128xf32>
    %c96_i32_133 = arith.constant 96 : i32
    %270 = vector.broadcast %c96_i32_133 : i32 to vector<32x128xi32>
    %271 = arith.cmpi sge, %2, %270 : vector<32x128xi32>
    %272 = arith.select %271, %264, %269 : vector<32x128xi1>, vector<32x128xf32>
    %273 = arith.truncf %272 : vector<32x128xf32> to vector<32x128xbf16>
    %c9_i32 = arith.constant 9 : i32
    %274 = vector.broadcast %c9_i32 : i32 to vector<32x128xi32>
    %275 = arith.cmpi sge, %4, %274 : vector<32x128xi32>
    %c9_i32_134 = arith.constant 9 : i32
    %276 = tpu.dynamic_rotate %227 by %c9_i32_134 dim 0 : vector<32x128xf32>, i32 -> vector<32x128xf32>
    %cst_135 = arith.constant 0.000000e+00 : f32
    %277 = vector.broadcast %cst_135 : f32 to vector<32x128xf32>
    %278 = arith.select %275, %276, %277 : vector<32x128xi1>, vector<32x128xf32>
    %279 = arith.truncf %278 : vector<32x128xf32> to vector<32x128xbf16>
    %c32_i32_136 = arith.constant 32 : i32
    %280 = tpu.dynamic_rotate %227 by %c32_i32_136 dim 1 : vector<32x128xf32>, i32 -> vector<32x128xf32>
    %c11_i32 = arith.constant 11 : i32
    %281 = vector.broadcast %c11_i32 : i32 to vector<32x128xi32>
    %282 = arith.cmpi sge, %4, %281 : vector<32x128xi32>
    %c11_i32_137 = arith.constant 11 : i32
    %283 = tpu.dynamic_rotate %280 by %c11_i32_137 dim 0 : vector<32x128xf32>, i32 -> vector<32x128xf32>
    %cst_138 = arith.constant 0.000000e+00 : f32
    %284 = vector.broadcast %cst_138 : f32 to vector<32x128xf32>
    %285 = arith.select %282, %283, %284 : vector<32x128xi1>, vector<32x128xf32>
    %c12_i32 = arith.constant 12 : i32
    %286 = vector.broadcast %c12_i32 : i32 to vector<32x128xi32>
    %287 = arith.cmpi sge, %4, %286 : vector<32x128xi32>
    %c12_i32_139 = arith.constant 12 : i32
    %288 = tpu.dynamic_rotate %280 by %c12_i32_139 dim 0 : vector<32x128xf32>, i32 -> vector<32x128xf32>
    %cst_140 = arith.constant 0.000000e+00 : f32
    %289 = vector.broadcast %cst_140 : f32 to vector<32x128xf32>
    %290 = arith.select %287, %288, %289 : vector<32x128xi1>, vector<32x128xf32>
    %c32_i32_141 = arith.constant 32 : i32
    %291 = vector.broadcast %c32_i32_141 : i32 to vector<32x128xi32>
    %292 = arith.cmpi sge, %2, %291 : vector<32x128xi32>
    %293 = arith.select %292, %285, %290 : vector<32x128xi1>, vector<32x128xf32>
    %294 = arith.truncf %293 : vector<32x128xf32> to vector<32x128xbf16>
    %c64_i32_142 = arith.constant 64 : i32
    %295 = tpu.dynamic_rotate %227 by %c64_i32_142 dim 1 : vector<32x128xf32>, i32 -> vector<32x128xf32>
    %c13_i32 = arith.constant 13 : i32
    %296 = vector.broadcast %c13_i32 : i32 to vector<32x128xi32>
    %297 = arith.cmpi sge, %4, %296 : vector<32x128xi32>
    %c13_i32_143 = arith.constant 13 : i32
    %298 = tpu.dynamic_rotate %295 by %c13_i32_143 dim 0 : vector<32x128xf32>, i32 -> vector<32x128xf32>
    %cst_144 = arith.constant 0.000000e+00 : f32
    %299 = vector.broadcast %cst_144 : f32 to vector<32x128xf32>
    %300 = arith.select %297, %298, %299 : vector<32x128xi1>, vector<32x128xf32>
    %c14_i32 = arith.constant 14 : i32
    %301 = vector.broadcast %c14_i32 : i32 to vector<32x128xi32>
    %302 = arith.cmpi sge, %4, %301 : vector<32x128xi32>
    %c14_i32_145 = arith.constant 14 : i32
    %303 = tpu.dynamic_rotate %295 by %c14_i32_145 dim 0 : vector<32x128xf32>, i32 -> vector<32x128xf32>
    %cst_146 = arith.constant 0.000000e+00 : f32
    %304 = vector.broadcast %cst_146 : f32 to vector<32x128xf32>
    %305 = arith.select %302, %303, %304 : vector<32x128xi1>, vector<32x128xf32>
    %c64_i32_147 = arith.constant 64 : i32
    %306 = vector.broadcast %c64_i32_147 : i32 to vector<32x128xi32>
    %307 = arith.cmpi sge, %2, %306 : vector<32x128xi32>
    %308 = arith.select %307, %300, %305 : vector<32x128xi1>, vector<32x128xf32>
    %309 = arith.truncf %308 : vector<32x128xf32> to vector<32x128xbf16>
    %310 = tpu.concatenate %228, %243, %258, %273, %279, %294, %309 in 1 : vector<32x128xbf16>, vector<32x128xbf16>, vector<32x128xbf16>, vector<32x128xbf16>, vector<32x128xbf16>, vector<32x128xbf16>, vector<32x128xbf16> -> vector<32x896xbf16>
    %c0_148 = arith.constant 0 : index
    %c0_149 = arith.constant 0 : index
    %311 = vector.load %arg12[%c0_148, %c0_149] : memref<896x128xbf16, #tpu.memory_space<vmem>>, vector<896x128xbf16>
    %cst_150 = arith.constant dense<0.000000e+00> : vector<32x128xf32>
    %312 = tpu.matmul %310, %311, %cst_150 {dimension_numbers = #tpu.dot_dimension_numbers<[1], [0], [0], [1], [0, 0, 1, 1], [], []>} : vector<32x896xbf16>, vector<896x128xbf16>, vector<32x128xf32> -> vector<32x128xf32>
    %c0_151 = arith.constant 0 : index
    %c0_152 = arith.constant 0 : index
    %313 = vector.load %arg13[%c0_151, %c0_152] : memref<1x128xf32, #tpu.memory_space<vmem>>, vector<1x128xf32>
    %314 = vector.broadcast %313 : vector<1x128xf32> to vector<32x128xf32>
    %315 = arith.addf %312, %314 : vector<32x128xf32>
    %cst_153 = arith.constant 0.000000e+00 : f32
    %316 = vector.broadcast %cst_153 : f32 to vector<32x128xf32>
    %317 = arith.cmpf ogt, %315, %316 : vector<32x128xf32>
    %cst_154 = arith.constant 0.000000e+00 : f32
    %318 = vector.broadcast %cst_154 : f32 to vector<32x128xf32>
    %319 = arith.minimumf %315, %318 : vector<32x128xf32>
    %320 = math.exp %319 : vector<32x128xf32>
    %cst_155 = arith.constant 1.000000e+00 : f32
    %321 = vector.broadcast %cst_155 : f32 to vector<32x128xf32>
    %322 = arith.subf %320, %321 : vector<32x128xf32>
    %323 = arith.select %317, %315, %322 : vector<32x128xi1>, vector<32x128xf32>
    %324 = arith.truncf %323 : vector<32x128xf32> to vector<32x128xbf16>
    %c0_156 = arith.constant 0 : index
    %c0_157 = arith.constant 0 : index
    %325 = vector.load %arg14[%c0_156, %c0_157] : memref<128x128xbf16, #tpu.memory_space<vmem>>, vector<128x128xbf16>
    %cst_158 = arith.constant dense<0.000000e+00> : vector<32x128xf32>
    %326 = tpu.matmul %324, %325, %cst_158 {dimension_numbers = #tpu.dot_dimension_numbers<[1], [0], [0], [1], [0, 0, 1, 1], [], []>} : vector<32x128xbf16>, vector<128x128xbf16>, vector<32x128xf32> -> vector<32x128xf32>
    %c0_159 = arith.constant 0 : index
    %c0_160 = arith.constant 0 : index
    %327 = vector.load %arg15[%c0_159, %c0_160] : memref<1x128xf32, #tpu.memory_space<vmem>>, vector<1x128xf32>
    %328 = vector.broadcast %327 : vector<1x128xf32> to vector<32x128xf32>
    %329 = arith.addf %326, %328 : vector<32x128xf32>
    %330 = arith.addf %227, %329 : vector<32x128xf32>
    %c0_161 = arith.constant 0 : index
    %c0_162 = arith.constant 0 : index
    %331 = vector.load %arg16[%c0_161, %c0_162] : memref<32x128xf32, #tpu.memory_space<vmem>>, vector<32x128xf32>
    tpu.vector_store %arg16[%c0_161, %c0_162], %330 {strides = array<i32>} : memref<32x128xf32, #tpu.memory_space<vmem>>, vector<32x128xf32>,
    return
  }
}

</mosaic_0001>

<llo_original>
// kernel: decoder_block_forward.1
$region0: #{decoder_block_forward.1}
  #allocation0 [shape = 'u32[]', space=smem, size = 0x4, offset = 0x4, fixed_abs, tag = 'smem constant byte address 0x4 - core index']
  #allocation1 [shape = 'u32[144,128]{1,0:T(1,128)}', space=vmem, size = 0x12000, scoped, tag = 'internal scratch']
  %s0 = inlined_call_operand.vmem [shape: bf16[32,64], index: 0, kind: input, shape index: {}]
  %s1 = inlined_call_operand.hbm [shape: bf16[64,128], index: 1, kind: input, shape index: {}]
  %s2 = inlined_call_operand.hbm [shape: bf16[64,128], index: 2, kind: input, shape index: {}]
  %s3 = inlined_call_operand.hbm [shape: f32[1,128], index: 3, kind: input, shape index: {}]
  %s4 = inlined_call_operand.hbm [shape: bf16[896,128], index: 4, kind: input, shape index: {}]
  %s5 = inlined_call_operand.hbm [shape: f32[1,128], index: 5, kind: input, shape index: {}]
  %s6 = inlined_call_operand.hbm [shape: bf16[128,128], index: 6, kind: input, shape index: {}]
  %s7 = inlined_call_operand.hbm [shape: f32[1,128], index: 7, kind: input, shape index: {}]
  %s8 = inlined_call_operand.hbm [shape: bf16[896,128], index: 8, kind: input, shape index: {}]
  %s9 = inlined_call_operand.hbm [shape: f32[1,128], index: 9, kind: input, shape index: {}]
  %s10 = inlined_call_operand.vmem [shape: bf16[128,128], index: 10, kind: input, shape index: {}]
  %s11 = inlined_call_operand.vmem [shape: f32[1,128], index: 11, kind: input, shape index: {}]
  %s12 = inlined_call_operand.hbm [shape: bf16[896,128], index: 12, kind: input, shape index: {}]
  %s13 = inlined_call_operand.vmem [shape: f32[1,128], index: 13, kind: input, shape index: {}]
  %s14 = inlined_call_operand.hbm [shape: bf16[128,128], index: 14, kind: input, shape index: {}]
  %s15 = inlined_call_operand.vmem [shape: f32[1,128], index: 15, kind: input, shape index: {}]
  %s16 = inlined_call_operand.vmem [shape: f32[32,128], index: 16, kind: output, shape index: {}]
  %s17 = sld [smem:[#allocation0]]
  $region118: #{decoder_block_forward.1} parent=0
    _
  %s19 = ssub.s32 1, %s17
  %s20 = scalar_select 0, %s19, %s17
  $region1: #{decoder_block_forward.1} parent=0
    #allocation2 [shape = 'u8[16384]{0}', space=vmem, size = 0x4000, scoped, tag = 'input window, operand 1, single buffered']
    #allocation3 [shape = 's32[1]{0}', space=sflag, size = 0x4, scoped, tag = 'scoped memory for decoder_block_forward.1']
    #allocation4 [shape = 'u8[16384]{0}', space=vmem, size = 0x4000, scoped, tag = 'input window, operand 2, single buffered']
    #allocation5 [shape = 's32[1]{0}', space=sflag, size = 0x4, scoped, tag = 'scoped memory for decoder_block_forward.1']
    #allocation6 [shape = 'u8[512]{0}', space=vmem, size = 0x400, scoped, tag = 'input window, operand 3, single buffered']
    #allocation7 [shape = 'u8[229376]{0}', space=vmem, size = 0x38000, scoped, tag = 'input window, operand 4, single buffered']
    #allocation8 [shape = 's32[1]{0}', space=sflag, size = 0x4, scoped, tag = 'scoped memory for decoder_block_forward.1']
    #allocation9 [shape = 'u8[512]{0}', space=vmem, size = 0x400, scoped, tag = 'input window, operand 5, single buffered']
    #allocation10 [shape = 'u8[32768]{0}', space=vmem, size = 0x8000, scoped, tag = 'input window, operand 6, single buffered']
    #allocation11 [shape = 's32[1]{0}', space=sflag, size = 0x4, scoped, tag = 'scoped memory for decoder_block_forward.1']
    #allocation12 [shape = 'u8[512]{0}', space=vmem, size = 0x400, scoped, tag = 'input window, operand 7, single buffered']
    #allocation13 [shape = 'u8[229376]{0}', space=vmem, size = 0x38000, scoped, tag = 'input window, operand 8, single buffered']
    #allocation14 [shape = 's32[1]{0}', space=sflag, size = 0x4, scoped, tag = 'scoped memory for decoder_block_forward.1']
    #allocation15 [shape = 'u8[512]{0}', space=vmem, size = 0x400, scoped, tag = 'input window, operand 9, single buffered']
    #allocation16 [shape = 'u8[229376]{0}', space=vmem, size = 0x38000, scoped, tag = 'input window, operand 12, single buffered']
    #allocation17 [shape = 's32[1]{0}', space=sflag, size = 0x4, scoped, tag = 'scoped memory for decoder_block_forward.1']
    #allocation18 [shape = 'u8[32768]{0}', space=vmem, size = 0x8000, scoped, tag = 'input window, operand 14, single buffered']
    %21 = vsyncpa [#allocation3], 0
    %22 = vsyncpa [#allocation5], 0
    %23 = vsyncpa [#allocation8], 0
    %24 = vsyncpa [#allocation11], 0
    %25 = vsyncpa [#allocation14], 0
    %26 = vsyncpa [#allocation17], 0
    // Predicated region
    $region2: #{decoder_block_forward.1} parent=1 // pred_check
      _
    $region3: #{decoder_block_forward.1} parent=1 // pred_check_branch
      %28 = sbr.rel (0) target = $region5
    $region4: #{decoder_block_forward.1} parent=1 // pred_region
      _
    $region5: #{decoder_block_forward.1} parent=1 // pred_fallthru
      _
    // Predicated region
    $region6: #{decoder_block_forward.1} parent=1 // pred_check
      _
    $region7: #{decoder_block_forward.1} parent=1 // pred_check_branch
      %30 = sbr.rel (0) target = $region9
    $region8: #{decoder_block_forward.1} parent=1 // pred_region
      %s32 = ssub.s32 512, 512
      %33 = vsyncadd [#allocation3], %s32
      %s34 = sshll.u32 [#allocation2], 4
      %s35 = int_to_ptr.vmem [resolvable:$true] %s34
      %40 = dma.hbm_to_vmem [thread:$0]  %s1, 512, %s35, [#allocation3], 64, 64, 4
    $region9: #{decoder_block_forward.1} parent=1 // pred_fallthru
      _
    // Predicated region
    $region10: #{decoder_block_forward.1} parent=1 // pred_check
      _
    $region11: #{decoder_block_forward.1} parent=1 // pred_check_branch
      %42 = sbr.rel (0) target = $region13
    $region12: #{decoder_block_forward.1} parent=1 // pred_region
      %s44 = ssub.s32 512, 512
      %45 = vsyncadd [#allocation5], %s44
      %s46 = sshll.u32 [#allocation4], 4
      %s47 = int_to_ptr.vmem [resolvable:$true] %s46
      %52 = dma.hbm_to_vmem [thread:$0]  %s2, 512, %s47, [#allocation5], 64, 64, 4
    $region13: #{decoder_block_forward.1} parent=1 // pred_fallthru
      _
    // Predicated region
    $region14: #{decoder_block_forward.1} parent=1 // pred_check
      _
    $region15: #{decoder_block_forward.1} parent=1 // pred_check_branch
      %54 = sbr.rel (0) target = $region17
    $region16: #{decoder_block_forward.1} parent=1 // pred_region
      %s56 = ssub.s32 16, 16
      %57 = vsyncadd [#allocation5], %s56
      %s59 = sshll.u32 [#allocation6], 4
      %s60 = int_to_ptr.vmem [resolvable:$true] %s59
      %62 = dma.hbm_to_vmem [thread:$0]  %s3, 16, %s60, [#allocation5]
    $region17: #{decoder_block_forward.1} parent=1 // pred_fallthru
      _
    // Predicated region
    $region18: #{decoder_block_forward.1} parent=1 // pred_check
      _
    $region19: #{decoder_block_forward.1} parent=1 // pred_check_branch
      %64 = sbr.rel (0) target = $region21
    $region20: #{decoder_block_forward.1} parent=1 // pred_region
      %s66 = ssub.s32 7168, 7168
      %67 = vsyncadd [#allocation8], %s66
      %s68 = sshll.u32 [#allocation7], 4
      %s69 = int_to_ptr.vmem [resolvable:$true] %s68
      %74 = dma.hbm_to_vmem [thread:$0]  %s4, 7168, %s69, [#allocation8], 64, 64, 4
    $region21: #{decoder_block_forward.1} parent=1 // pred_fallthru
      _
    // Predicated region
    $region22: #{decoder_block_forward.1} parent=1 // pred_check
      _
    $region23: #{decoder_block_forward.1} parent=1 // pred_check_branch
      %76 = sbr.rel (0) target = $region25
    $region24: #{decoder_block_forward.1} parent=1 // pred_region
      %s78 = ssub.s32 16, 16
      %79 = vsyncadd [#allocation8], %s78
      %s81 = sshll.u32 [#allocation9], 4
      %s82 = int_to_ptr.vmem [resolvable:$true] %s81
      %84 = dma.hbm_to_vmem [thread:$0]  %s5, 16, %s82, [#allocation8]
    $region25: #{decoder_block_forward.1} parent=1 // pred_fallthru
      _
    // Predicated region
    $region26: #{decoder_block_forward.1} parent=1 // pred_check
      _
    $region27: #{decoder_block_forward.1} parent=1 // pred_check_branch
      %86 = sbr.rel (0) target = $region29
    $region28: #{decoder_block_forward.1} parent=1 // pred_region
      %s88 = ssub.s32 1024, 1024
      %89 = vsyncadd [#allocation11], %s88
      %s90 = sshll.u32 [#allocation10], 4
      %s91 = int_to_ptr.vmem [resolvable:$true] %s90
      %96 = dma.hbm_to_vmem [thread:$0]  %s6, 1024, %s91, [#allocation11], 64, 64, 4
    $region29: #{decoder_block_forward.1} parent=1 // pred_fallthru
      _
    // Predicated region
    $region30: #{decoder_block_forward.1} parent=1 // pred_check
      _
    $region31: #{decoder_block_forward.1} parent=1 // pred_check_branch
      %98 = sbr.rel (0) target = $region33
    $region32: #{decoder_block_forward.1} parent=1 // pred_region
      %s100 = ssub.s32 16, 16
      %101 = vsyncadd [#allocation11], %s100
      %s103 = sshll.u32 [#allocation12], 4
      %s104 = int_to_ptr.vmem [resolvable:$true] %s103
      %106 = dma.hbm_to_vmem [thread:$0]  %s7, 16, %s104, [#allocation11]
    $region33: #{decoder_block_forward.1} parent=1 // pred_fallthru
      _
    // Predicated region
    $region34: #{decoder_block_forward.1} parent=1 // pred_check
      _
    $region35: #{decoder_block_forward.1} parent=1 // pred_check_branch
      %108 = sbr.rel (0) target = $region37
    $region36: #{decoder_block_forward.1} parent=1 // pred_region
      %s110 = ssub.s32 7168, 7168
      %111 = vsyncadd [#allocation14], %s110
      %s112 = sshll.u32 [#allocation13], 4
      %s113 = int_to_ptr.vmem [resolvable:$true] %s112
      %118 = dma.hbm_to_vmem [thread:$0]  %s8, 7168, %s113, [#allocation14], 64, 64, 4
    $region37: #{decoder_block_forward.1} parent=1 // pred_fallthru
      _
    // Predicated region
    $region38: #{decoder_block_forward.1} parent=1 // pred_check
      _
    $region39: #{decoder_block_forward.1} parent=1 // pred_check_branch
      %120 = sbr.rel (0) target = $region41
    $region40: #{decoder_block_forward.1} parent=1 // pred_region
      %s122 = ssub.s32 16, 16
      %123 = vsyncadd [#allocation14], %s122
      %s125 = sshll.u32 [#allocation15], 4
      %s126 = int_to_ptr.vmem [resolvable:$true] %s125
      %128 = dma.hbm_to_vmem [thread:$0]  %s9, 16, %s126, [#allocation14]
    $region41: #{decoder_block_forward.1} parent=1 // pred_fallthru
      _
    // Predicated region
    $region42: #{decoder_block_forward.1} parent=1 // pred_check
      _
    $region43: #{decoder_block_forward.1} parent=1 // pred_check_branch
      %130 = sbr.rel (0) target = $region45
    $region44: #{decoder_block_forward.1} parent=1 // pred_region
      _
    $region45: #{decoder_block_forward.1} parent=1 // pred_fallthru
      _
    // Predicated region
    $region46: #{decoder_block_forward.1} parent=1 // pred_check
      _
    $region47: #{decoder_block_forward.1} parent=1 // pred_check_branch
      %132 = sbr.rel (0) target = $region49
    $region48: #{decoder_block_forward.1} parent=1 // pred_region
      _
    $region49: #{decoder_block_forward.1} parent=1 // pred_fallthru
      _
    // Predicated region
    $region50: #{decoder_block_forward.1} parent=1 // pred_check
      _
    $region51: #{decoder_block_forward.1} parent=1 // pred_check_branch
      %134 = sbr.rel (0) target = $region53
    $region52: #{decoder_block_forward.1} parent=1 // pred_region
      %s136 = ssub.s32 7168, 7168
      %137 = vsyncadd [#allocation17], %s136
      %s138 = sshll.u32 [#allocation16], 4
      %s139 = int_to_ptr.vmem [resolvable:$true] %s138
      %144 = dma.hbm_to_vmem [thread:$0]  %s12, 7168, %s139, [#allocation17], 64, 64, 4
    $region53: #{decoder_block_forward.1} parent=1 // pred_fallthru
      _
    // Predicated region
    $region54: #{decoder_block_forward.1} parent=1 // pred_check
      _
    $region55: #{decoder_block_forward.1} parent=1 // pred_check_branch
      %146 = sbr.rel (0) target = $region57
    $region56: #{decoder_block_forward.1} parent=1 // pred_region
      _
    $region57: #{decoder_block_forward.1} parent=1 // pred_fallthru
      _
    // Predicated region
    $region58: #{decoder_block_forward.1} parent=1 // pred_check
      _
    $region59: #{decoder_block_forward.1} parent=1 // pred_check_branch
      %148 = sbr.rel (0) target = $region61
    $region60: #{decoder_block_forward.1} parent=1 // pred_region
      %s150 = ssub.s32 1024, 1024
      %151 = vsyncadd [#allocation17], %s150
      %s152 = sshll.u32 [#allocation18], 4
      %s153 = int_to_ptr.vmem [resolvable:$true] %s152
      %158 = dma.hbm_to_vmem [thread:$0]  %s14, 1024, %s153, [#allocation17], 64, 64, 4
    $region61: #{decoder_block_forward.1} parent=1 // pred_fallthru
      _
    // Predicated region
    $region62: #{decoder_block_forward.1} parent=1 // pred_check
      _
    $region63: #{decoder_block_forward.1} parent=1 // pred_check_branch
      %160 = sbr.rel (0) target = $region65
    $region64: #{decoder_block_forward.1} parent=1 // pred_region
      _
    $region65: #{decoder_block_forward.1} parent=1 // pred_fallthru
      _
    // Predicated region
    $region66: #{decoder_block_forward.1} parent=1 // pred_check
      _
    $region67: #{decoder_block_forward.1} parent=1 // pred_check_branch
      %162 = sbr.rel (0) target = $region69
    $region68: #{decoder_block_forward.1} parent=1 // pred_region
      %163 = dma.done [#allocation3], 512
    $region69: #{decoder_block_forward.1} parent=1 // pred_fallthru
      _
    // Predicated region
    $region70: #{decoder_block_forward.1} parent=1 // pred_check
      _
    $region71: #{decoder_block_forward.1} parent=1 // pred_check_branch
      %165 = sbr.rel (0) target = $region73
    $region72: #{decoder_block_forward.1} parent=1 // pred_region
      %166 = dma.done [#allocation5], 512
    $region73: #{decoder_block_forward.1} parent=1 // pred_fallthru
      _
    // Predicated region
    $region74: #{decoder_block_forward.1} parent=1 // pred_check
      _
    $region75: #{decoder_block_forward.1} parent=1 // pred_check_branch
      %168 = sbr.rel (0) target = $region77
    $region76: #{decoder_block_forward.1} parent=1 // pred_region
      %169 = dma.done [#allocation5], 16
    $region77: #{decoder_block_forward.1} parent=1 // pred_fallthru
      _
    // Predicated region
    $region78: #{decoder_block_forward.1} parent=1 // pred_check
      _
    $region79: #{decoder_block_forward.1} parent=1 // pred_check_branch
      %171 = sbr.rel (0) target = $region81
    $region80: #{decoder_block_forward.1} parent=1 // pred_region
      %172 = dma.done [#allocation8], 7168
    $region81: #{decoder_block_forward.1} parent=1 // pred_fallthru
      _
    // Predicated region
    $region82: #{decoder_block_forward.1} parent=1 // pred_check
      _
    $region83: #{decoder_block_forward.1} parent=1 // pred_check_branch
      %174 = sbr.rel (0) target = $region85
    $region84: #{decoder_block_forward.1} parent=1 // pred_region
      %175 = dma.done [#allocation8], 16
    $region85: #{decoder_block_forward.1} parent=1 // pred_fallthru
      _
    // Predicated region
    $region86: #{decoder_block_forward.1} parent=1 // pred_check
      _
    $region87: #{decoder_block_forward.1} parent=1 // pred_check_branch
      %177 = sbr.rel (0) target = $region89
    $region88: #{decoder_block_forward.1} parent=1 // pred_region
      %178 = dma.done [#allocation11], 1024
    $region89: #{decoder_block_forward.1} parent=1 // pred_fallthru
      _
    // Predicated region
    $region90: #{decoder_block_forward.1} parent=1 // pred_check
      _
    $region91: #{decoder_block_forward.1} parent=1 // pred_check_branch
      %180 = sbr.rel (0) target = $region93
    $region92: #{decoder_block_forward.1} parent=1 // pred_region
      %181 = dma.done [#allocation11], 16
    $region93: #{decoder_block_forward.1} parent=1 // pred_fallthru
      _
    // Predicated region
    $region94: #{decoder_block_forward.1} parent=1 // pred_check
      _
    $region95: #{decoder_block_forward.1} parent=1 // pred_check_branch
      %183 = sbr.rel (0) target = $region97
    $region96: #{decoder_block_forward.1} parent=1 // pred_region
      %184 = dma.done [#allocation14], 7168
    $region97: #{decoder_block_forward.1} parent=1 // pred_fallthru
      _
    // Predicated region
    $region98: #{decoder_block_forward.1} parent=1 // pred_check
      _
    $region99: #{decoder_block_forward.1} parent=1 // pred_check_branch
      %186 = sbr.rel (0) target = $region101
    $region100: #{decoder_block_forward.1} parent=1 // pred_region
      %187 = dma.done [#allocation14], 16
    $region101: #{decoder_block_forward.1} parent=1 // pred_fallthru
      _
    // Predicated region
    $region102: #{decoder_block_forward.1} parent=1 // pred_check
      _
    $region103: #{decoder_block_forward.1} parent=1 // pred_check_branch
      %189 = sbr.rel (0) target = $region105
    $region104: #{decoder_block_forward.1} parent=1 // pred_region
      %190 = dma.done [#allocation17], 7168
    $region105: #{decoder_block_forward.1} parent=1 // pred_fallthru
      _
    // Predicated region
    $region106: #{decoder_block_forward.1} parent=1 // pred_check
      _
    $region107: #{decoder_block_forward.1} parent=1 // pred_check_branch
      %192 = sbr.rel (0) target = $region109
    $region108: #{decoder_block_forward.1} parent=1 // pred_region
      %193 = dma.done [#allocation17], 1024
    $region109: #{decoder_block_forward.1} parent=1 // pred_fallthru
      _
    %v195 = vld [vmem:[%s0] sm:$0xf]
    %v196 = vld [vmem:[%s0 + $0x4] sm:$0xf]
    %v197 = vld [vmem:[%s0 + $0x8] sm:$0xf]
    %v198 = vld [vmem:[%s0 + $0xc] sm:$0xf]
    %v199 = vlaneseq
    %v200 = vshrl.u32 %v199, 7
    %v201 = vadd.s32 %v200, 8
    %v202 = vadd.s32 %v200, 16
    %v203 = vadd.s32 %v200, 24
    %v204 = vlaneseq
    %v205 = vand.u32 %v204, 127
    %v206 = vand.u32 %v200, 15
    %v207 = vand.u32 %v201, 15
    %v208 = vand.u32 %v202, 15
    %v209 = vand.u32 %v203, 15
    %v210 = vld [vmem:[#allocation2] sm:$0xf]
    %v211 = vld [vmem:[#allocation2 + $0x4] sm:$0xf]
    %v212 = vld [vmem:[#allocation2 + $0x8] sm:$0xf]
    %v213 = vld [vmem:[#allocation2 + $0xc] sm:$0xf]
    %v214 = vld [vmem:[#allocation2 + $0x10] sm:$0xf]
    %v215 = vld [vmem:[#allocation2 + $0x14] sm:$0xf]
    %v216 = vld [vmem:[#allocation2 + $0x18] sm:$0xf]
    %v217 = vld [vmem:[#allocation2 + $0x1c] sm:$0xf]
    %v218 = vld [vmem:[#allocation4] sm:$0xf]
    %v219 = vld [vmem:[#allocation4 + $0x4] sm:$0xf]
    %v220 = vld [vmem:[#allocation4 + $0x8] sm:$0xf]
    %v221 = vld [vmem:[#allocation4 + $0xc] sm:$0xf]
    %v222 = vld [vmem:[#allocation4 + $0x10] sm:$0xf]
    %v223 = vld [vmem:[#allocation4 + $0x14] sm:$0xf]
    %v224 = vld [vmem:[#allocation4 + $0x18] sm:$0xf]
    %v225 = vld [vmem:[#allocation4 + $0x1c] sm:$0xf]
    %v230 = vunpack.c.l.b16 %v195
    %v231 = vunpack.c.l.b16 %v196
    %v232 = vunpack.c.l.b16 %v197
    %v233 = vunpack.c.l.b16 %v198
    %v234 = vpack.c.b16 %v231, %v230
    %v235 = vpack.c.b16 %v233, %v232
    %v244 = vunpack.c.l.b16 %v218
    %v245 = vunpack.c.l.b16 %v219
    %v246 = vunpack.c.l.b16 %v220
    %v247 = vunpack.c.l.b16 %v221
    %v248 = vunpack.c.l.b16 %v222
    %v249 = vunpack.c.l.b16 %v223
    %v250 = vunpack.c.l.b16 %v224
    %v251 = vunpack.c.l.b16 %v225
    %v252 = vpack.c.b16 %v245, %v244
    %v253 = vpack.c.b16 %v247, %v246
    %v254 = vpack.c.b16 %v249, %v248
    %v255 = vpack.c.b16 %v251, %v250
    %vm260 = vcmask 523264
    %v262 = vsel %vm260, %v234, 0
    %v265 = vsel %vm260, %v235, 0
    %267 = vmatprep.subr.bf16.mxu0 0
    %268 = vmatpush1.bf16.msra.mxu0 0
    %269 = vmatprep.subr.bf16.mxu0 0
    %270 = vmatpush1.bf16.msra.mxu0 0
    %271 = vmatprep.subr.bf16.mxu0 0
    %272 = vmatpush1.bf16.msra.mxu0 0
    %273 = vmatprep.subr.bf16.mxu0 0
    %274 = vmatpush1.bf16.msra.mxu0 0
    %275 = vmatprep.subr.bf16.mxu0 0
    %276 = vmatpush1.bf16.msra.mxu0 %v255
    %277 = vmatprep.subr.bf16.mxu0 0
    %278 = vmatpush1.bf16.msra.mxu0 %v254
    %279 = vmatprep.subr.bf16.mxu0 0
    %280 = vmatpush1.bf16.msra.mxu0 %v253
    %281 = vmatprep.subr.bf16.mxu0 0
    %282 = vmatpush1.bf16.msra.mxu0 %v252
    %283 = vmatprep.subr.bf16.mxu0 0
    %284 = vmatpush2.bf16.msra.mxu0 0
    %285 = vmatprep.subr.bf16.mxu0 0
    %286 = vmatpush2.bf16.msra.mxu0 0
    %287 = vmatprep.subr.bf16.mxu0 0
    %288 = vmatpush2.bf16.msra.mxu0 0
    %289 = vmatprep.subr.bf16.mxu0 0
    %290 = vmatpush2.bf16.msra.mxu0 0
    %291 = vmatprep.subr.bf16.mxu0 0
    %292 = vmatpush2.bf16.msra.mxu0 0
    %293 = vmatprep.subr.bf16.mxu0 0
    %294 = vmatpush2.bf16.msra.mxu0 0
    %295 = vmatprep.subr.bf16.mxu0 0
    %296 = vmatpush2.bf16.msra.mxu0 0
    %297 = vmatprep.subr.bf16.mxu0 0
    %298 = vmatpush2.bf16.msra.mxu0 0
    %299 = vmatprep.mubr.bf16.mxu0 0
    %300 = vmatmul.mubr.bf16.gmra.mxu0 %v262
    %v301 = vpop.f32.mrf.mxu0
    %v302 = vadd.f32 0.0, %v301
    %v303 = vpop.f32.mrf.mxu0
    %v304 = vpop.f32.mrf.mxu0
    %v305 = vadd.f32 0.0, %v304
    %v306 = vpop.f32.mrf.mxu0
    %307 = vmatprep.mubr.bf16.mxu0 0
    %308 = vmatmul.mubr.bf16.gmra.mxu0 %v265
    %v309 = vpop.f32.mrf.mxu0
    %v310 = vadd.f32 0.0, %v309
    %v311 = vpop.f32.mrf.mxu0
    %v312 = vpop.f32.mrf.mxu0
    %v313 = vadd.f32 0.0, %v312
    %v314 = vpop.f32.mrf.mxu0
    %315 = vdwg.mxu0
    %vm316 = vcmp.ge.s32.totalorder %v206, 1
    %vm317 = vcmp.ge.s32.totalorder %v207, 1
    %vm318 = vcmp.ge.s32.totalorder %v208, 1
    %vm319 = vcmp.ge.s32.totalorder %v209, 1
    %v320 = vrot.slane %v302, 7
    %v321 = vrot.slane %v305, 7
    %v322 = vrot.slane %v310, 7
    %v323 = vrot.slane %v313, 7
    %vm324 = vcmp.lt.s32.totalorder %v200, 1
    %v325 = vsel %vm324, %v322, %v323
    %v326 = vsel %vm324, %v321, %v322
    %v327 = vsel %vm324, %v320, %v321
    %v328 = vsel %vm324, %v323, %v320
    %v329 = vsel %vm316, %v328, 0.0
    %v330 = vsel %vm317, %v327, 0.0
    %v331 = vsel %vm318, %v326, 0.0
    %v332 = vsel %vm319, %v325, 0.0
    %v341 = vunpack.c.l.b16 %v210
    %v342 = vunpack.c.l.b16 %v211
    %v343 = vunpack.c.l.b16 %v212
    %v344 = vunpack.c.l.b16 %v213
    %v345 = vunpack.c.l.b16 %v214
    %v346 = vunpack.c.l.b16 %v215
    %v347 = vunpack.c.l.b16 %v216
    %v348 = vunpack.c.l.b16 %v217
    %v349 = vpack.c.b16 %v342, %v341
    %v350 = vpack.c.b16 %v344, %v343
    %v351 = vpack.c.b16 %v346, %v345
    %v352 = vpack.c.b16 %v348, %v347
    %357 = vmatprep.subr.bf16.mxu0 0
    %358 = vmatpush1.bf16.msra.mxu0 0
    %359 = vmatprep.subr.bf16.mxu0 0
    %360 = vmatpush1.bf16.msra.mxu0 0
    %361 = vmatprep.subr.bf16.mxu0 0
    %362 = vmatpush1.bf16.msra.mxu0 0
    %363 = vmatprep.subr.bf16.mxu0 0
    %364 = vmatpush1.bf16.msra.mxu0 0
    %365 = vmatprep.subr.bf16.mxu0 0
    %366 = vmatpush1.bf16.msra.mxu0 %v352
    %367 = vmatprep.subr.bf16.mxu0 0
    %368 = vmatpush1.bf16.msra.mxu0 %v351
    %369 = vmatprep.subr.bf16.mxu0 0
    %370 = vmatpush1.bf16.msra.mxu0 %v350
    %371 = vmatprep.subr.bf16.mxu0 0
    %372 = vmatpush1.bf16.msra.mxu0 %v349
    %373 = vmatprep.subr.bf16.mxu0 0
    %374 = vmatpush2.bf16.msra.mxu0 0
    %375 = vmatprep.subr.bf16.mxu0 0
    %376 = vmatpush2.bf16.msra.mxu0 0
    %377 = vmatprep.subr.bf16.mxu0 0
    %378 = vmatpush2.bf16.msra.mxu0 0
    %379 = vmatprep.subr.bf16.mxu0 0
    %380 = vmatpush2.bf16.msra.mxu0 0
    %381 = vmatprep.subr.bf16.mxu0 0
    %382 = vmatpush2.bf16.msra.mxu0 0
    %383 = vmatprep.subr.bf16.mxu0 0
    %384 = vmatpush2.bf16.msra.mxu0 0
    %385 = vmatprep.subr.bf16.mxu0 0
    %386 = vmatpush2.bf16.msra.mxu0 0
    %387 = vmatprep.subr.bf16.mxu0 0
    %388 = vmatpush2.bf16.msra.mxu0 0
    %389 = vmatprep.mubr.bf16.mxu0 0
    %390 = vmatmul.mubr.bf16.gmra.mxu0 %v262
    %v391 = vpop.f32.mrf.mxu0
    %v392 = vadd.f32 %v329, %v391
    %v393 = vpop.f32.mrf.mxu0
    %v394 = vpop.f32.mrf.mxu0
    %v395 = vadd.f32 %v330, %v394
    %v396 = vpop.f32.mrf.mxu0
    %397 = vmatprep.mubr.bf16.mxu0 0
    %398 = vmatmul.mubr.bf16.gmra.mxu0 %v265
    %v399 = vpop.f32.mrf.mxu0
    %v400 = vadd.f32 %v331, %v399
    %v401 = vpop.f32.mrf.mxu0
    %v402 = vpop.f32.mrf.mxu0
    %v403 = vadd.f32 %v332, %v402
    %v404 = vpop.f32.mrf.mxu0
    %405 = vdwg.mxu0
    %v406 = vld [vmem:[#allocation6] sm:$0x1]
    %v408 = vlaneseq
    %v409 = vshrl.u32 %v408, 7
    %v410 = vsub.s32 0, %v409
    %v411 = vrot.slane %v406, %v410
    %v413 = vadd.f32 %v392, %v411
    %v414 = vadd.f32 %v395, %v411
    %v415 = vadd.f32 %v400, %v411
    %v416 = vadd.f32 %v403, %v411
    %vm417 = vcmp.gt.f32.partialorder %v413, 0.0
    %vm418 = vcmp.gt.f32.partialorder %v414, 0.0
    %vm419 = vcmp.gt.f32.partialorder %v415, 0.0
    %vm420 = vcmp.gt.f32.partialorder %v416, 0.0
    %v421 = vmin.f32 %v413, 0.0
    %v422 = vmin.f32 %v414, 0.0
    %v423 = vmin.f32 %v415, 0.0
    %v424 = vmin.f32 %v416, 0.0
    %v425 = vmul.f32 %v421, 1.442695
    %v426 = vpow.pop %v425
    %v427 = vmul.f32 %v422, 1.442695
    %v428 = vpow.pop %v427
    %v429 = vmul.f32 %v423, 1.442695
    %v430 = vpow.pop %v429
    %v431 = vmul.f32 %v424, 1.442695
    %v432 = vpow.pop %v431
    %v433 = vsub.f32 %v426, 1.0
    %v434 = vsub.f32 %v428, 1.0
    %v435 = vsub.f32 %v430, 1.0
    %v436 = vsub.f32 %v432, 1.0
    %v437 = vsel %vm417, %v413, %v433
    %v438 = vsel %vm418, %v414, %v434
    %v439 = vsel %vm419, %v415, %v435
    %v440 = vsel %vm420, %v416, %v436
    %v441 = vpack.c.bf16 %v438, %v437
    %v442 = vpack.c.bf16 %v440, %v439
    %443 = vrot.lane.b32.xlu0 %v437, 32
    %v444 = vpop.permute.xlu0 %443
    %445 = vrot.lane.b32.xlu0 %v438, 32
    %v446 = vpop.permute.xlu0 %445
    %447 = vrot.lane.b32.xlu0 %v439, 32
    %v448 = vpop.permute.xlu0 %447
    %449 = vrot.lane.b32.xlu0 %v440, 32
    %v450 = vpop.permute.xlu0 %449
    %v451 = vrot.slane %v444, 7
    %v452 = vrot.slane %v446, 7
    %v453 = vrot.slane %v448, 7
    %v454 = vrot.slane %v450, 7
    %v455 = vsel %vm324, %v453, %v454
    %v456 = vsel %vm324, %v452, %v453
    %v457 = vsel %vm324, %v451, %v452
    %v458 = vsel %vm324, %v454, %v451
    %v459 = vsel %vm316, %v458, 0.0
    %v460 = vsel %vm317, %v457, 0.0
    %v461 = vsel %vm318, %v456, 0.0
    %v462 = vsel %vm319, %v455, 0.0
    %vm463 = vcmp.ge.s32.totalorder %v205, 32
    %v464 = vsel %vm463, %v444, %v459
    %v465 = vsel %vm463, %v446, %v460
    %v466 = vsel %vm463, %v448, %v461
    %v467 = vsel %vm463, %v450, %v462
    %v468 = vpack.c.bf16 %v465, %v464
    %v469 = vpack.c.bf16 %v467, %v466
    %470 = vrot.lane.b32.xlu0 %v437, 64
    %v471 = vpop.permute.xlu0 %470
    %472 = vrot.lane.b32.xlu0 %v438, 64
    %v473 = vpop.permute.xlu0 %472
    %474 = vrot.lane.b32.xlu0 %v439, 64
    %v475 = vpop.permute.xlu0 %474
    %476 = vrot.lane.b32.xlu0 %v440, 64
    %v477 = vpop.permute.xlu0 %476
    %v478 = vrot.slane %v471, 7
    %v479 = vrot.slane %v473, 7
    %v480 = vrot.slane %v475, 7
    %v481 = vrot.slane %v477, 7
    %v482 = vsel %vm324, %v480, %v481
    %v483 = vsel %vm324, %v479, %v480
    %v484 = vsel %vm324, %v478, %v479
    %v485 = vsel %vm324, %v481, %v478
    %v486 = vsel %vm316, %v485, 0.0
    %v487 = vsel %vm317, %v484, 0.0
    %v488 = vsel %vm318, %v483, 0.0
    %v489 = vsel %vm319, %v482, 0.0
    %vm490 = vcmp.ge.s32.totalorder %v205, 64
    %v491 = vsel %vm490, %v471, %v486
    %v492 = vsel %vm490, %v473, %v487
    %v493 = vsel %vm490, %v475, %v488
    %v494 = vsel %vm490, %v477, %v489
    %v495 = vpack.c.bf16 %v492, %v491
    %v496 = vpack.c.bf16 %v494, %v493
    %497 = vrot.lane.b32.xlu0 %v437, 96
    %v498 = vpop.permute.xlu0 %497
    %499 = vrot.lane.b32.xlu0 %v438, 96
    %v500 = vpop.permute.xlu0 %499
    %501 = vrot.lane.b32.xlu0 %v439, 96
    %v502 = vpop.permute.xlu0 %501
    %503 = vrot.lane.b32.xlu0 %v440, 96
    %v504 = vpop.permute.xlu0 %503
    %v505 = vrot.slane %v498, 7
    %v506 = vrot.slane %v500, 7
    %v507 = vrot.slane %v502, 7
    %v508 = vrot.slane %v504, 7
    %v509 = vsel %vm324, %v507, %v508
    %v510 = vsel %vm324, %v506, %v507
    %v511 = vsel %vm324, %v505, %v506
    %v512 = vsel %vm324, %v508, %v505
    %v513 = vsel %vm316, %v512, 0.0
    %v514 = vsel %vm317, %v511, 0.0
    %v515 = vsel %vm318, %v510, 0.0
    %v516 = vsel %vm319, %v509, 0.0
    %vm517 = vcmp.ge.s32.totalorder %v205, 96
    %v518 = vsel %vm517, %v498, %v513
    %v519 = vsel %vm517, %v500, %v514
    %v520 = vsel %vm517, %v502, %v515
    %v521 = vsel %vm517, %v504, %v516
    %v522 = vpack.c.bf16 %v519, %v518
    %v523 = vpack.c.bf16 %v521, %v520
    %v524 = vrot.slane %v437, 7
    %v525 = vrot.slane %v438, 7
    %v526 = vrot.slane %v439, 7
    %v527 = vrot.slane %v440, 7
    %v528 = vsel %vm324, %v526, %v527
    %v529 = vsel %vm324, %v525, %v526
    %v530 = vsel %vm324, %v524, %v525
    %v531 = vsel %vm324, %v527, %v524
    %v532 = vsel %vm316, %v531, 0.0
    %v533 = vsel %vm317, %v530, 0.0
    %v534 = vsel %vm318, %v529, 0.0
    %v535 = vsel %vm319, %v528, 0.0
    %v536 = vpack.c.bf16 %v533, %v532
    %v537 = vpack.c.bf16 %v535, %v534
    %vm538 = vcmp.ge.s32.totalorder %v206, 2
    %vm539 = vcmp.ge.s32.totalorder %v207, 2
    %vm540 = vcmp.ge.s32.totalorder %v208, 2
    %vm541 = vcmp.ge.s32.totalorder %v209, 2
    %v542 = vrot.slane %v444, 6
    %v543 = vrot.slane %v446, 6
    %v544 = vrot.slane %v448, 6
    %v545 = vrot.slane %v450, 6
    %vm546 = vcmp.lt.s32.totalorder %v200, 2
    %v547 = vsel %vm546, %v544, %v545
    %v548 = vsel %vm546, %v543, %v544
    %v549 = vsel %vm546, %v542, %v543
    %v550 = vsel %vm546, %v545, %v542
    %v551 = vsel %vm538, %v550, 0.0
    %v552 = vsel %vm539, %v549, 0.0
    %v553 = vsel %vm540, %v548, 0.0
    %v554 = vsel %vm541, %v547, 0.0
    %v555 = vsel %vm463, %v459, %v551
    %v556 = vsel %vm463, %v460, %v552
    %v557 = vsel %vm463, %v461, %v553
    %v558 = vsel %vm463, %v462, %v554
    %v559 = vpack.c.bf16 %v556, %v555
    %v560 = vpack.c.bf16 %v558, %v557
    %v561 = vrot.slane %v471, 6
    %v562 = vrot.slane %v473, 6
    %v563 = vrot.slane %v475, 6
    %v564 = vrot.slane %v477, 6
    %v565 = vsel %vm546, %v563, %v564
    %v566 = vsel %vm546, %v562, %v563
    %v567 = vsel %vm546, %v561, %v562
    %v568 = vsel %vm546, %v564, %v561
    %v569 = vsel %vm538, %v568, 0.0
    %v570 = vsel %vm539, %v567, 0.0
    %v571 = vsel %vm540, %v566, 0.0
    %v572 = vsel %vm541, %v565, 0.0
    %v573 = vsel %vm490, %v486, %v569
    %v574 = vsel %vm490, %v487, %v570
    %v575 = vsel %vm490, %v488, %v571
    %v576 = vsel %vm490, %v489, %v572
    %v577 = vpack.c.bf16 %v574, %v573
    %v578 = vpack.c.bf16 %v576, %v575
    %v579 = vld [vmem:[#allocation7] sm:$0xf]
    %v580 = vld [vmem:[#allocation7 + $0x4] sm:$0xf]
    %v581 = vld [vmem:[#allocation7 + $0x8] sm:$0xf]
    %v582 = vld [vmem:[#allocation7 + $0xc] sm:$0xf]
    %v583 = vld [vmem:[#allocation7 + $0x10] sm:$0xf]
    %v584 = vld [vmem:[#allocation7 + $0x14] sm:$0xf]
    %v585 = vld [vmem:[#allocation7 + $0x18] sm:$0xf]
    %v586 = vld [vmem:[#allocation7 + $0x1c] sm:$0xf]
    %v587 = vld [vmem:[#allocation7 + $0x20] sm:$0xf]
    %v588 = vld [vmem:[#allocation7 + $0x24] sm:$0xf]
    %v589 = vld [vmem:[#allocation7 + $0x28] sm:$0xf]
    %v590 = vld [vmem:[#allocation7 + $0x2c] sm:$0xf]
    %v591 = vld [vmem:[#allocation7 + $0x30] sm:$0xf]
    %v592 = vld [vmem:[#allocation7 + $0x34] sm:$0xf]
    %v593 = vld [vmem:[#allocation7 + $0x38] sm:$0xf]
    %v594 = vld [vmem:[#allocation7 + $0x3c] sm:$0xf]
    %v595 = vld [vmem:[#allocation7 + $0x40] sm:$0xf]
    %v596 = vld [vmem:[#allocation7 + $0x44] sm:$0xf]
    %v597 = vld [vmem:[#allocation7 + $0x48] sm:$0xf]
    %v598 = vld [vmem:[#allocation7 + $0x4c] sm:$0xf]
    %v599 = vld [vmem:[#allocation7 + $0x50] sm:$0xf]
    %v600 = vld [vmem:[#allocation7 + $0x54] sm:$0xf]
    %v601 = vld [vmem:[#allocation7 + $0x58] sm:$0xf]
    %v602 = vld [vmem:[#allocation7 + $0x5c] sm:$0xf]
    %v603 = vld [vmem:[#allocation7 + $0x60] sm:$0xf]
    %v604 = vld [vmem:[#allocation7 + $0x64] sm:$0xf]
    %v605 = vld [vmem:[#allocation7 + $0x68] sm:$0xf]
    %v606 = vld [vmem:[#allocation7 + $0x6c] sm:$0xf]
    %v607 = vld [vmem:[#allocation7 + $0x70] sm:$0xf]
    %v608 = vld [vmem:[#allocation7 + $0x74] sm:$0xf]
    %v609 = vld [vmem:[#allocation7 + $0x78] sm:$0xf]
    %v610 = vld [vmem:[#allocation7 + $0x7c] sm:$0xf]
    %v611 = vld [vmem:[#allocation7 + $0x80] sm:$0xf]
    %v612 = vld [vmem:[#allocation7 + $0x84] sm:$0xf]
    %v613 = vld [vmem:[#allocation7 + $0x88] sm:$0xf]
    %v614 = vld [vmem:[#allocation7 + $0x8c] sm:$0xf]
    %v615 = vld [vmem:[#allocation7 + $0x90] sm:$0xf]
    %v616 = vld [vmem:[#allocation7 + $0x94] sm:$0xf]
    %v617 = vld [vmem:[#allocation7 + $0x98] sm:$0xf]
    %v618 = vld [vmem:[#allocation7 + $0x9c] sm:$0xf]
    %v619 = vld [vmem:[#allocation7 + $0xa0] sm:$0xf]
    %v620 = vld [vmem:[#allocation7 + $0xa4] sm:$0xf]
    %v621 = vld [vmem:[#allocation7 + $0xa8] sm:$0xf]
    %v622 = vld [vmem:[#allocation7 + $0xac] sm:$0xf]
    %v623 = vld [vmem:[#allocation7 + $0xb0] sm:$0xf]
    %v624 = vld [vmem:[#allocation7 + $0xb4] sm:$0xf]
    %v625 = vld [vmem:[#allocation7 + $0xb8] sm:$0xf]
    %v626 = vld [vmem:[#allocation7 + $0xbc] sm:$0xf]
    %v627 = vld [vmem:[#allocation7 + $0xc0] sm:$0xf]
    %v628 = vld [vmem:[#allocation7 + $0xc4] sm:$0xf]
    %v629 = vld [vmem:[#allocation7 + $0xc8] sm:$0xf]
    %v630 = vld [vmem:[#allocation7 + $0xcc] sm:$0xf]
    %v631 = vld [vmem:[#allocation7 + $0xd0] sm:$0xf]
    %v632 = vld [vmem:[#allocation7 + $0xd4] sm:$0xf]
    %v633 = vld [vmem:[#allocation7 + $0xd8] sm:$0xf]
    %v634 = vld [vmem:[#allocation7 + $0xdc] sm:$0xf]
    %v635 = vld [vmem:[#allocation7 + $0xe0] sm:$0xf]
    %v636 = vld [vmem:[#allocation7 + $0xe4] sm:$0xf]
    %v637 = vld [vmem:[#allocation7 + $0xe8] sm:$0xf]
    %v638 = vld [vmem:[#allocation7 + $0xec] sm:$0xf]
    %v639 = vld [vmem:[#allocation7 + $0xf0] sm:$0xf]
    %v640 = vld [vmem:[#allocation7 + $0xf4] sm:$0xf]
    %v641 = vld [vmem:[#allocation7 + $0xf8] sm:$0xf]
    %v642 = vld [vmem:[#allocation7 + $0xfc] sm:$0xf]
    %v643 = vld [vmem:[#allocation7 + $0x100] sm:$0xf]
    %v644 = vld [vmem:[#allocation7 + $0x104] sm:$0xf]
    %v645 = vld [vmem:[#allocation7 + $0x108] sm:$0xf]
    %v646 = vld [vmem:[#allocation7 + $0x10c] sm:$0xf]
    %v647 = vld [vmem:[#allocation7 + $0x110] sm:$0xf]
    %v648 = vld [vmem:[#allocation7 + $0x114] sm:$0xf]
    %v649 = vld [vmem:[#allocation7 + $0x118] sm:$0xf]
    %v650 = vld [vmem:[#allocation7 + $0x11c] sm:$0xf]
    %v651 = vld [vmem:[#allocation7 + $0x120] sm:$0xf]
    %v652 = vld [vmem:[#allocation7 + $0x124] sm:$0xf]
    %v653 = vld [vmem:[#allocation7 + $0x128] sm:$0xf]
    %v654 = vld [vmem:[#allocation7 + $0x12c] sm:$0xf]
    %v655 = vld [vmem:[#allocation7 + $0x130] sm:$0xf]
    %v656 = vld [vmem:[#allocation7 + $0x134] sm:$0xf]
    %v657 = vld [vmem:[#allocation7 + $0x138] sm:$0xf]
    %v658 = vld [vmem:[#allocation7 + $0x13c] sm:$0xf]
    %v659 = vld [vmem:[#allocation7 + $0x140] sm:$0xf]
    %v660 = vld [vmem:[#allocation7 + $0x144] sm:$0xf]
    %v661 = vld [vmem:[#allocation7 + $0x148] sm:$0xf]
    %v662 = vld [vmem:[#allocation7 + $0x14c] sm:$0xf]
    %v663 = vld [vmem:[#allocation7 + $0x150] sm:$0xf]
    %v664 = vld [vmem:[#allocation7 + $0x154] sm:$0xf]
    %v665 = vld [vmem:[#allocation7 + $0x158] sm:$0xf]
    %v666 = vld [vmem:[#allocation7 + $0x15c] sm:$0xf]
    %v667 = vld [vmem:[#allocation7 + $0x160] sm:$0xf]
    %v668 = vld [vmem:[#allocation7 + $0x164] sm:$0xf]
    %v669 = vld [vmem:[#allocation7 + $0x168] sm:$0xf]
    %v670 = vld [vmem:[#allocation7 + $0x16c] sm:$0xf]
    %v671 = vld [vmem:[#allocation7 + $0x170] sm:$0xf]
    %v672 = vld [vmem:[#allocation7 + $0x174] sm:$0xf]
    %v673 = vld [vmem:[#allocation7 + $0x178] sm:$0xf]
    %v674 = vld [vmem:[#allocation7 + $0x17c] sm:$0xf]
    %v675 = vld [vmem:[#allocation7 + $0x180] sm:$0xf]
    %v676 = vld [vmem:[#allocation7 + $0x184] sm:$0xf]
    %v677 = vld [vmem:[#allocation7 + $0x188] sm:$0xf]
    %v678 = vld [vmem:[#allocation7 + $0x18c] sm:$0xf]
    %v679 = vld [vmem:[#allocation7 + $0x190] sm:$0xf]
    %v680 = vld [vmem:[#allocation7 + $0x194] sm:$0xf]
    %v681 = vld [vmem:[#allocation7 + $0x198] sm:$0xf]
    %v682 = vld [vmem:[#allocation7 + $0x19c] sm:$0xf]
    %v683 = vld [vmem:[#allocation7 + $0x1a0] sm:$0xf]
    %v684 = vld [vmem:[#allocation7 + $0x1a4] sm:$0xf]
    %v685 = vld [vmem:[#allocation7 + $0x1a8] sm:$0xf]
    %v686 = vld [vmem:[#allocation7 + $0x1ac] sm:$0xf]
    %v687 = vld [vmem:[#allocation7 + $0x1b0] sm:$0xf]
    %v688 = vld [vmem:[#allocation7 + $0x1b4] sm:$0xf]
    %v689 = vld [vmem:[#allocation7 + $0x1b8] sm:$0xf]
    %v690 = vld [vmem:[#allocation7 + $0x1bc] sm:$0xf]
    %v691 = vld [vmem:[#allocation9] sm:$0x1]
    %v693 = vlaneseq
    %v694 = vshrl.u32 %v693, 7
    %v695 = vsub.s32 0, %v694
    %v696 = vrot.slane %v691, %v695
    %v810 = vunpack.c.l.b16 %v579
    %v811 = vunpack.c.l.b16 %v580
    %v812 = vunpack.c.l.b16 %v581
    %v813 = vunpack.c.l.b16 %v582
    %v814 = vunpack.c.l.b16 %v583
    %v815 = vunpack.c.l.b16 %v584
    %v816 = vunpack.c.l.b16 %v585
    %v817 = vunpack.c.l.b16 %v586
    %v818 = vunpack.c.l.b16 %v587
    %v819 = vunpack.c.l.b16 %v588
    %v820 = vunpack.c.l.b16 %v589
    %v821 = vunpack.c.l.b16 %v590
    %v822 = vunpack.c.l.b16 %v591
    %v823 = vunpack.c.l.b16 %v592
    %v824 = vunpack.c.l.b16 %v593
    %v825 = vunpack.c.l.b16 %v594
    %v826 = vunpack.c.l.b16 %v595
    %v827 = vunpack.c.l.b16 %v596
    %v828 = vunpack.c.l.b16 %v597
    %v829 = vunpack.c.l.b16 %v598
    %v830 = vunpack.c.l.b16 %v599
    %v831 = vunpack.c.l.b16 %v600
    %v832 = vunpack.c.l.b16 %v601
    %v833 = vunpack.c.l.b16 %v602
    %v834 = vunpack.c.l.b16 %v603
    %v835 = vunpack.c.l.b16 %v604
    %v836 = vunpack.c.l.b16 %v605
    %v837 = vunpack.c.l.b16 %v606
    %v838 = vunpack.c.l.b16 %v607
    %v839 = vunpack.c.l.b16 %v608
    %v840 = vunpack.c.l.b16 %v609
    %v841 = vunpack.c.l.b16 %v610
    %v842 = vunpack.c.l.b16 %v611
    %v843 = vunpack.c.l.b16 %v612
    %v844 = vunpack.c.l.b16 %v613
    %v845 = vunpack.c.l.b16 %v614
    %v846 = vunpack.c.l.b16 %v615
    %v847 = vunpack.c.l.b16 %v616
    %v848 = vunpack.c.l.b16 %v617
    %v849 = vunpack.c.l.b16 %v618
    %v850 = vunpack.c.l.b16 %v619
    %v851 = vunpack.c.l.b16 %v620
    %v852 = vunpack.c.l.b16 %v621
    %v853 = vunpack.c.l.b16 %v622
    %v854 = vunpack.c.l.b16 %v623
    %v855 = vunpack.c.l.b16 %v624
    %v856 = vunpack.c.l.b16 %v625
    %v857 = vunpack.c.l.b16 %v626
    %v858 = vunpack.c.l.b16 %v627
    %v859 = vunpack.c.l.b16 %v628
    %v860 = vunpack.c.l.b16 %v629
    %v861 = vunpack.c.l.b16 %v630
    %v862 = vunpack.c.l.b16 %v631
    %v863 = vunpack.c.l.b16 %v632
    %v864 = vunpack.c.l.b16 %v633
    %v865 = vunpack.c.l.b16 %v634
    %v866 = vunpack.c.l.b16 %v635
    %v867 = vunpack.c.l.b16 %v636
    %v868 = vunpack.c.l.b16 %v637
    %v869 = vunpack.c.l.b16 %v638
    %v870 = vunpack.c.l.b16 %v639
    %v871 = vunpack.c.l.b16 %v640
    %v872 = vunpack.c.l.b16 %v641
    %v873 = vunpack.c.l.b16 %v642
    %v874 = vunpack.c.l.b16 %v643
    %v875 = vunpack.c.l.b16 %v644
    %v876 = vunpack.c.l.b16 %v645
    %v877 = vunpack.c.l.b16 %v646
    %v878 = vunpack.c.l.b16 %v647
    %v879 = vunpack.c.l.b16 %v648
    %v880 = vunpack.c.l.b16 %v649
    %v881 = vunpack.c.l.b16 %v650
    %v882 = vunpack.c.l.b16 %v651
    %v883 = vunpack.c.l.b16 %v652
    %v884 = vunpack.c.l.b16 %v653
    %v885 = vunpack.c.l.b16 %v654
    %v886 = vunpack.c.l.b16 %v655
    %v887 = vunpack.c.l.b16 %v656
    %v888 = vunpack.c.l.b16 %v657
    %v889 = vunpack.c.l.b16 %v658
    %v890 = vunpack.c.l.b16 %v659
    %v891 = vunpack.c.l.b16 %v660
    %v892 = vunpack.c.l.b16 %v661
    %v893 = vunpack.c.l.b16 %v662
    %v894 = vunpack.c.l.b16 %v663
    %v895 = vunpack.c.l.b16 %v664
    %v896 = vunpack.c.l.b16 %v665
    %v897 = vunpack.c.l.b16 %v666
    %v898 = vunpack.c.l.b16 %v667
    %v899 = vunpack.c.l.b16 %v668
    %v900 = vunpack.c.l.b16 %v669
    %v901 = vunpack.c.l.b16 %v670
    %v902 = vunpack.c.l.b16 %v671
    %v903 = vunpack.c.l.b16 %v672
    %v904 = vunpack.c.l.b16 %v673
    %v905 = vunpack.c.l.b16 %v674
    %v906 = vunpack.c.l.b16 %v675
    %v907 = vunpack.c.l.b16 %v676
    %v908 = vunpack.c.l.b16 %v677
    %v909 = vunpack.c.l.b16 %v678
    %v910 = vunpack.c.l.b16 %v679
    %v911 = vunpack.c.l.b16 %v680
    %v912 = vunpack.c.l.b16 %v681
    %v913 = vunpack.c.l.b16 %v682
    %v914 = vunpack.c.l.b16 %v683
    %v915 = vunpack.c.l.b16 %v684
    %v916 = vunpack.c.l.b16 %v685
    %v917 = vunpack.c.l.b16 %v686
    %v918 = vunpack.c.l.b16 %v687
    %v919 = vunpack.c.l.b16 %v688
    %v920 = vunpack.c.l.b16 %v689
    %v921 = vunpack.c.l.b16 %v690
    %v922 = vpack.c.b16 %v811, %v810
    %v923 = vpack.c.b16 %v813, %v812
    %v924 = vpack.c.b16 %v815, %v814
    %v925 = vpack.c.b16 %v817, %v816
    %v926 = vpack.c.b16 %v819, %v818
    %v927 = vpack.c.b16 %v821, %v820
    %v928 = vpack.c.b16 %v823, %v822
    %v929 = vpack.c.b16 %v825, %v824
    %v930 = vpack.c.b16 %v827, %v826
    %v931 = vpack.c.b16 %v829, %v828
    %v932 = vpack.c.b16 %v831, %v830
    %v933 = vpack.c.b16 %v833, %v832
    %v934 = vpack.c.b16 %v835, %v834
    %v935 = vpack.c.b16 %v837, %v836
    %v936 = vpack.c.b16 %v839, %v838
    %v937 = vpack.c.b16 %v841, %v840
    %v938 = vpack.c.b16 %v843, %v842
    %v939 = vpack.c.b16 %v845, %v844
    %v940 = vpack.c.b16 %v847, %v846
    %v941 = vpack.c.b16 %v849, %v848
    %v942 = vpack.c.b16 %v851, %v850
    %v943 = vpack.c.b16 %v853, %v852
    %v944 = vpack.c.b16 %v855, %v854
    %v945 = vpack.c.b16 %v857, %v856
    %v946 = vpack.c.b16 %v859, %v858
    %v947 = vpack.c.b16 %v861, %v860
    %v948 = vpack.c.b16 %v863, %v862
    %v949 = vpack.c.b16 %v865, %v864
    %v950 = vpack.c.b16 %v867, %v866
    %v951 = vpack.c.b16 %v869, %v868
    %v952 = vpack.c.b16 %v871, %v870
    %v953 = vpack.c.b16 %v873, %v872
    %v954 = vpack.c.b16 %v875, %v874
    %v955 = vpack.c.b16 %v877, %v876
    %v956 = vpack.c.b16 %v879, %v878
    %v957 = vpack.c.b16 %v881, %v880
    %v958 = vpack.c.b16 %v883, %v882
    %v959 = vpack.c.b16 %v885, %v884
    %v960 = vpack.c.b16 %v887, %v886
    %v961 = vpack.c.b16 %v889, %v888
    %v962 = vpack.c.b16 %v891, %v890
    %v963 = vpack.c.b16 %v893, %v892
    %v964 = vpack.c.b16 %v895, %v894
    %v965 = vpack.c.b16 %v897, %v896
    %v966 = vpack.c.b16 %v899, %v898
    %v967 = vpack.c.b16 %v901, %v900
    %v968 = vpack.c.b16 %v903, %v902
    %v969 = vpack.c.b16 %v905, %v904
    %v970 = vpack.c.b16 %v907, %v906
    %v971 = vpack.c.b16 %v909, %v908
    %v972 = vpack.c.b16 %v911, %v910
    %v973 = vpack.c.b16 %v913, %v912
    %v974 = vpack.c.b16 %v915, %v914
    %v975 = vpack.c.b16 %v917, %v916
    %v976 = vpack.c.b16 %v919, %v918
    %v977 = vpack.c.b16 %v921, %v920
    %1034 = vmatprep.subr.bf16.mxu0 0
    %1035 = vmatpush1.bf16.msra.mxu0 %v929
    %1036 = vmatprep.subr.bf16.mxu0 0
    %1037 = vmatpush1.bf16.msra.mxu0 %v928
    %1038 = vmatprep.subr.bf16.mxu0 0
    %1039 = vmatpush1.bf16.msra.mxu0 %v927
    %1040 = vmatprep.subr.bf16.mxu0 0
    %1041 = vmatpush1.bf16.msra.mxu0 %v926
    %1042 = vmatprep.subr.bf16.mxu0 0
    %1043 = vmatpush1.bf16.msra.mxu0 %v925
    %1044 = vmatprep.subr.bf16.mxu0 0
    %1045 = vmatpush1.bf16.msra.mxu0 %v924
    %1046 = vmatprep.subr.bf16.mxu0 0
    %1047 = vmatpush1.bf16.msra.mxu0 %v923
    %1048 = vmatprep.subr.bf16.mxu0 0
    %1049 = vmatpush1.bf16.msra.mxu0 %v922
    %1050 = vmatprep.subr.bf16.mxu0 0
    %1051 = vmatpush2.bf16.msra.mxu0 %v937
    %1052 = vmatprep.subr.bf16.mxu0 0
    %1053 = vmatpush2.bf16.msra.mxu0 %v936
    %1054 = vmatprep.subr.bf16.mxu0 0
    %1055 = vmatpush2.bf16.msra.mxu0 %v935
    %1056 = vmatprep.subr.bf16.mxu0 0
    %1057 = vmatpush2.bf16.msra.mxu0 %v934
    %1058 = vmatprep.subr.bf16.mxu0 0
    %1059 = vmatpush2.bf16.msra.mxu0 %v933
    %1060 = vmatprep.subr.bf16.mxu0 0
    %1061 = vmatpush2.bf16.msra.mxu0 %v932
    %1062 = vmatprep.subr.bf16.mxu0 0
    %1063 = vmatpush2.bf16.msra.mxu0 %v931
    %1064 = vmatprep.subr.bf16.mxu0 0
    %1065 = vmatpush2.bf16.msra.mxu0 %v930
    %1066 = vmatprep.mubr.bf16.mxu0 %v468
    %1067 = vmatmul.mubr.bf16.gmra.mxu0 %v441
    %v1068 = vpop.f32.mrf.mxu0
    %v1069 = vadd.f32 %v696, %v1068
    %v1070 = vpop.f32.mrf.mxu0
    %v1071 = vpop.f32.mrf.mxu0
    %v1072 = vadd.f32 %v696, %v1071
    %v1073 = vpop.f32.mrf.mxu0
    %1074 = vmatprep.mubr.bf16.mxu0 %v469
    %1075 = vmatmul.mubr.bf16.gmra.mxu0 %v442
    %v1076 = vpop.f32.mrf.mxu0
    %v1077 = vadd.f32 %v696, %v1076
    %v1078 = vpop.f32.mrf.mxu0
    %v1079 = vpop.f32.mrf.mxu0
    %v1080 = vadd.f32 %v696, %v1079
    %v1081 = vpop.f32.mrf.mxu0
    %1082 = vdwg.mxu0
    %1083 = vmatprep.subr.bf16.mxu0 0
    %1084 = vmatpush1.bf16.msra.mxu0 %v945
    %1085 = vmatprep.subr.bf16.mxu0 0
    %1086 = vmatpush1.bf16.msra.mxu0 %v944
    %1087 = vmatprep.subr.bf16.mxu0 0
    %1088 = vmatpush1.bf16.msra.mxu0 %v943
    %1089 = vmatprep.subr.bf16.mxu0 0
    %1090 = vmatpush1.bf16.msra.mxu0 %v942
    %1091 = vmatprep.subr.bf16.mxu0 0
    %1092 = vmatpush1.bf16.msra.mxu0 %v941
    %1093 = vmatprep.subr.bf16.mxu0 0
    %1094 = vmatpush1.bf16.msra.mxu0 %v940
    %1095 = vmatprep.subr.bf16.mxu0 0
    %1096 = vmatpush1.bf16.msra.mxu0 %v939
    %1097 = vmatprep.subr.bf16.mxu0 0
    %1098 = vmatpush1.bf16.msra.mxu0 %v938
    %1099 = vmatprep.subr.bf16.mxu0 0
    %1100 = vmatpush2.bf16.msra.mxu0 %v953
    %1101 = vmatprep.subr.bf16.mxu0 0
    %1102 = vmatpush2.bf16.msra.mxu0 %v952
    %1103 = vmatprep.subr.bf16.mxu0 0
    %1104 = vmatpush2.bf16.msra.mxu0 %v951
    %1105 = vmatprep.subr.bf16.mxu0 0
    %1106 = vmatpush2.bf16.msra.mxu0 %v950
    %1107 = vmatprep.subr.bf16.mxu0 0
    %1108 = vmatpush2.bf16.msra.mxu0 %v949
    %1109 = vmatprep.subr.bf16.mxu0 0
    %1110 = vmatpush2.bf16.msra.mxu0 %v948
    %1111 = vmatprep.subr.bf16.mxu0 0
    %1112 = vmatpush2.bf16.msra.mxu0 %v947
    %1113 = vmatprep.subr.bf16.mxu0 0
    %1114 = vmatpush2.bf16.msra.mxu0 %v946
    %1115 = vmatprep.mubr.bf16.mxu0 %v522
    %1116 = vmatmul.mubr.bf16.gmra.mxu0 %v495
    %v1117 = vpop.f32.mrf.mxu0
    %v1118 = vadd.f32 %v1069, %v1117
    %v1119 = vpop.f32.mrf.mxu0
    %v1120 = vpop.f32.mrf.mxu0
    %v1121 = vadd.f32 %v1072, %v1120
    %v1122 = vpop.f32.mrf.mxu0
    %1123 = vmatprep.mubr.bf16.mxu0 %v523
    %1124 = vmatmul.mubr.bf16.gmra.mxu0 %v496
    %v1125 = vpop.f32.mrf.mxu0
    %v1126 = vadd.f32 %v1077, %v1125
    %v1127 = vpop.f32.mrf.mxu0
    %v1128 = vpop.f32.mrf.mxu0
    %v1129 = vadd.f32 %v1080, %v1128
    %v1130 = vpop.f32.mrf.mxu0
    %1131 = vdwg.mxu0
    %1132 = vmatprep.subr.bf16.mxu0 0
    %1133 = vmatpush1.bf16.msra.mxu0 %v961
    %1134 = vmatprep.subr.bf16.mxu0 0
    %1135 = vmatpush1.bf16.msra.mxu0 %v960
    %1136 = vmatprep.subr.bf16.mxu0 0
    %1137 = vmatpush1.bf16.msra.mxu0 %v959
    %1138 = vmatprep.subr.bf16.mxu0 0
    %1139 = vmatpush1.bf16.msra.mxu0 %v958
    %1140 = vmatprep.subr.bf16.mxu0 0
    %1141 = vmatpush1.bf16.msra.mxu0 %v957
    %1142 = vmatprep.subr.bf16.mxu0 0
    %1143 = vmatpush1.bf16.msra.mxu0 %v956
    %1144 = vmatprep.subr.bf16.mxu0 0
    %1145 = vmatpush1.bf16.msra.mxu0 %v955
    %1146 = vmatprep.subr.bf16.mxu0 0
    %1147 = vmatpush1.bf16.msra.mxu0 %v954
    %1148 = vmatprep.subr.bf16.mxu0 0
    %1149 = vmatpush2.bf16.msra.mxu0 %v969
    %1150 = vmatprep.subr.bf16.mxu0 0
    %1151 = vmatpush2.bf16.msra.mxu0 %v968
    %1152 = vmatprep.subr.bf16.mxu0 0
    %1153 = vmatpush2.bf16.msra.mxu0 %v967
    %1154 = vmatprep.subr.bf16.mxu0 0
    %1155 = vmatpush2.bf16.msra.mxu0 %v966
    %1156 = vmatprep.subr.bf16.mxu0 0
    %1157 = vmatpush2.bf16.msra.mxu0 %v965
    %1158 = vmatprep.subr.bf16.mxu0 0
    %1159 = vmatpush2.bf16.msra.mxu0 %v964
    %1160 = vmatprep.subr.bf16.mxu0 0
    %1161 = vmatpush2.bf16.msra.mxu0 %v963
    %1162 = vmatprep.subr.bf16.mxu0 0
    %1163 = vmatpush2.bf16.msra.mxu0 %v962
    %1164 = vmatprep.mubr.bf16.mxu0 %v559
    %1165 = vmatmul.mubr.bf16.gmra.mxu0 %v536
    %v1166 = vpop.f32.mrf.mxu0
    %v1167 = vadd.f32 %v1118, %v1166
    %v1168 = vpop.f32.mrf.mxu0
    %v1169 = vpop.f32.mrf.mxu0
    %v1170 = vadd.f32 %v1121, %v1169
    %v1171 = vpop.f32.mrf.mxu0
    %1172 = vmatprep.mubr.bf16.mxu0 %v560
    %1173 = vmatmul.mubr.bf16.gmra.mxu0 %v537
    %v1174 = vpop.f32.mrf.mxu0
    %v1175 = vadd.f32 %v1126, %v1174
    %v1176 = vpop.f32.mrf.mxu0
    %v1177 = vpop.f32.mrf.mxu0
    %v1178 = vadd.f32 %v1129, %v1177
    %v1179 = vpop.f32.mrf.mxu0
    %1180 = vdwg.mxu0
    %1181 = vmatprep.subr.bf16.mxu0 0
    %1182 = vmatpush1.bf16.msra.mxu0 %v977
    %1183 = vmatprep.subr.bf16.mxu0 0
    %1184 = vmatpush1.bf16.msra.mxu0 %v976
    %1185 = vmatprep.subr.bf16.mxu0 0
    %1186 = vmatpush1.bf16.msra.mxu0 %v975
    %1187 = vmatprep.subr.bf16.mxu0 0
    %1188 = vmatpush1.bf16.msra.mxu0 %v974
    %1189 = vmatprep.subr.bf16.mxu0 0
    %1190 = vmatpush1.bf16.msra.mxu0 %v973
    %1191 = vmatprep.subr.bf16.mxu0 0
    %1192 = vmatpush1.bf16.msra.mxu0 %v972
    %1193 = vmatprep.subr.bf16.mxu0 0
    %1194 = vmatpush1.bf16.msra.mxu0 %v971
    %1195 = vmatprep.subr.bf16.mxu0 0
    %1196 = vmatpush1.bf16.msra.mxu0 %v970
    %1197 = vmatprep.subr.bf16.mxu0 0
    %1198 = vmatpush2.bf16.msra.mxu0 0
    %1199 = vmatprep.subr.bf16.mxu0 0
    %1200 = vmatpush2.bf16.msra.mxu0 0
    %1201 = vmatprep.subr.bf16.mxu0 0
    %1202 = vmatpush2.bf16.msra.mxu0 0
    %1203 = vmatprep.subr.bf16.mxu0 0
    %1204 = vmatpush2.bf16.msra.mxu0 0
    %1205 = vmatprep.subr.bf16.mxu0 0
    %1206 = vmatpush2.bf16.msra.mxu0 0
    %1207 = vmatprep.subr.bf16.mxu0 0
    %1208 = vmatpush2.bf16.msra.mxu0 0
    %1209 = vmatprep.subr.bf16.mxu0 0
    %1210 = vmatpush2.bf16.msra.mxu0 0
    %1211 = vmatprep.subr.bf16.mxu0 0
    %1212 = vmatpush2.bf16.msra.mxu0 0
    %1213 = vmatprep.mubr.bf16.mxu0 0
    %1214 = vmatmul.mubr.bf16.gmra.mxu0 %v577
    %v1215 = vpop.f32.mrf.mxu0
    %v1216 = vadd.f32 %v1167, %v1215
    %v1217 = vpop.f32.mrf.mxu0
    %v1218 = vpop.f32.mrf.mxu0
    %v1219 = vadd.f32 %v1170, %v1218
    %v1220 = vpop.f32.mrf.mxu0
    %1221 = vmatprep.mubr.bf16.mxu0 0
    %1222 = vmatmul.mubr.bf16.gmra.mxu0 %v578
    %v1223 = vpop.f32.mrf.mxu0
    %v1224 = vadd.f32 %v1175, %v1223
    %v1225 = vpop.f32.mrf.mxu0
    %v1226 = vpop.f32.mrf.mxu0
    %v1227 = vadd.f32 %v1178, %v1226
    %v1228 = vpop.f32.mrf.mxu0
    %1229 = vdwg.mxu0
    %vm1230 = vcmp.gt.f32.partialorder %v1216, 0.0
    %vm1231 = vcmp.gt.f32.partialorder %v1219, 0.0
    %vm1232 = vcmp.gt.f32.partialorder %v1224, 0.0
    %vm1233 = vcmp.gt.f32.partialorder %v1227, 0.0
    %v1234 = vmin.f32 %v1216, 0.0
    %v1235 = vmin.f32 %v1219, 0.0
    %v1236 = vmin.f32 %v1224, 0.0
    %v1237 = vmin.f32 %v1227, 0.0
    %v1238 = vmul.f32 %v1234, 1.442695
    %v1239 = vpow.pop %v1238
    %v1240 = vmul.f32 %v1235, 1.442695
    %v1241 = vpow.pop %v1240
    %v1242 = vmul.f32 %v1236, 1.442695
    %v1243 = vpow.pop %v1242
    %v1244 = vmul.f32 %v1237, 1.442695
    %v1245 = vpow.pop %v1244
    %v1246 = vsub.f32 %v1239, 1.0
    %v1247 = vsub.f32 %v1241, 1.0
    %v1248 = vsub.f32 %v1243, 1.0
    %v1249 = vsub.f32 %v1245, 1.0
    %v1250 = vsel %vm1230, %v1216, %v1246
    %v1251 = vsel %vm1231, %v1219, %v1247
    %v1252 = vsel %vm1232, %v1224, %v1248
    %v1253 = vsel %vm1233, %v1227, %v1249
    %v1254 = vpack.c.bf16 %v1251, %v1250
    %v1255 = vpack.c.bf16 %v1253, %v1252
    %v1256 = vld [vmem:[#allocation10] sm:$0xf]
    %v1257 = vld [vmem:[#allocation10 + $0x4] sm:$0xf]
    %v1258 = vld [vmem:[#allocation10 + $0x8] sm:$0xf]
    %v1259 = vld [vmem:[#allocation10 + $0xc] sm:$0xf]
    %v1260 = vld [vmem:[#allocation10 + $0x10] sm:$0xf]
    %v1261 = vld [vmem:[#allocation10 + $0x14] sm:$0xf]
    %v1262 = vld [vmem:[#allocation10 + $0x18] sm:$0xf]
    %v1263 = vld [vmem:[#allocation10 + $0x1c] sm:$0xf]
    %v1264 = vld [vmem:[#allocation10 + $0x20] sm:$0xf]
    %v1265 = vld [vmem:[#allocation10 + $0x24] sm:$0xf]
    %v1266 = vld [vmem:[#allocation10 + $0x28] sm:$0xf]
    %v1267 = vld [vmem:[#allocation10 + $0x2c] sm:$0xf]
    %v1268 = vld [vmem:[#allocation10 + $0x30] sm:$0xf]
    %v1269 = vld [vmem:[#allocation10 + $0x34] sm:$0xf]
    %v1270 = vld [vmem:[#allocation10 + $0x38] sm:$0xf]
    %v1271 = vld [vmem:[#allocation10 + $0x3c] sm:$0xf]
    %v1272 = vld [vmem:[#allocation12] sm:$0x1]
    %v1274 = vlaneseq
    %v1275 = vshrl.u32 %v1274, 7
    %v1276 = vsub.s32 0, %v1275
    %v1277 = vrot.slane %v1272, %v1276
    %v1295 = vunpack.c.l.b16 %v1256
    %v1296 = vunpack.c.l.b16 %v1257
    %v1297 = vunpack.c.l.b16 %v1258
    %v1298 = vunpack.c.l.b16 %v1259
    %v1299 = vunpack.c.l.b16 %v1260
    %v1300 = vunpack.c.l.b16 %v1261
    %v1301 = vunpack.c.l.b16 %v1262
    %v1302 = vunpack.c.l.b16 %v1263
    %v1303 = vunpack.c.l.b16 %v1264
    %v1304 = vunpack.c.l.b16 %v1265
    %v1305 = vunpack.c.l.b16 %v1266
    %v1306 = vunpack.c.l.b16 %v1267
    %v1307 = vunpack.c.l.b16 %v1268
    %v1308 = vunpack.c.l.b16 %v1269
    %v1309 = vunpack.c.l.b16 %v1270
    %v1310 = vunpack.c.l.b16 %v1271
    %v1311 = vpack.c.b16 %v1296, %v1295
    %v1312 = vpack.c.b16 %v1298, %v1297
    %v1313 = vpack.c.b16 %v1300, %v1299
    %v1314 = vpack.c.b16 %v1302, %v1301
    %v1315 = vpack.c.b16 %v1304, %v1303
    %v1316 = vpack.c.b16 %v1306, %v1305
    %v1317 = vpack.c.b16 %v1308, %v1307
    %v1318 = vpack.c.b16 %v1310, %v1309
    %1327 = vmatprep.subr.bf16.mxu0 0
    %1328 = vmatpush1.bf16.msra.mxu0 %v1318
    %1329 = vmatprep.subr.bf16.mxu0 0
    %1330 = vmatpush1.bf16.msra.mxu0 %v1317
    %1331 = vmatprep.subr.bf16.mxu0 0
    %1332 = vmatpush1.bf16.msra.mxu0 %v1316
    %1333 = vmatprep.subr.bf16.mxu0 0
    %1334 = vmatpush1.bf16.msra.mxu0 %v1315
    %1335 = vmatprep.subr.bf16.mxu0 0
    %1336 = vmatpush1.bf16.msra.mxu0 %v1314
    %1337 = vmatprep.subr.bf16.mxu0 0
    %1338 = vmatpush1.bf16.msra.mxu0 %v1313
    %1339 = vmatprep.subr.bf16.mxu0 0
    %1340 = vmatpush1.bf16.msra.mxu0 %v1312
    %1341 = vmatprep.subr.bf16.mxu0 0
    %1342 = vmatpush1.bf16.msra.mxu0 %v1311
    %1343 = vmatprep.subr.bf16.mxu0 0
    %1344 = vmatpush2.bf16.msra.mxu0 0
    %1345 = vmatprep.subr.bf16.mxu0 0
    %1346 = vmatpush2.bf16.msra.mxu0 0
    %1347 = vmatprep.subr.bf16.mxu0 0
    %1348 = vmatpush2.bf16.msra.mxu0 0
    %1349 = vmatprep.subr.bf16.mxu0 0
    %1350 = vmatpush2.bf16.msra.mxu0 0
    %1351 = vmatprep.subr.bf16.mxu0 0
    %1352 = vmatpush2.bf16.msra.mxu0 0
    %1353 = vmatprep.subr.bf16.mxu0 0
    %1354 = vmatpush2.bf16.msra.mxu0 0
    %1355 = vmatprep.subr.bf16.mxu0 0
    %1356 = vmatpush2.bf16.msra.mxu0 0
    %1357 = vmatprep.subr.bf16.mxu0 0
    %1358 = vmatpush2.bf16.msra.mxu0 0
    %1359 = vmatprep.mubr.bf16.mxu0 0
    %1360 = vmatmul.mubr.bf16.gmra.mxu0 %v1254
    %v1361 = vpop.f32.mrf.mxu0
    %v1362 = vadd.f32 %v1277, %v1361
    %v1363 = vpop.f32.mrf.mxu0
    %v1364 = vpop.f32.mrf.mxu0
    %v1365 = vadd.f32 %v1277, %v1364
    %v1366 = vpop.f32.mrf.mxu0
    %1367 = vmatprep.mubr.bf16.mxu0 0
    %1368 = vmatmul.mubr.bf16.gmra.mxu0 %v1255
    %v1369 = vpop.f32.mrf.mxu0
    %v1370 = vadd.f32 %v1277, %v1369
    %v1371 = vpop.f32.mrf.mxu0
    %v1372 = vpop.f32.mrf.mxu0
    %v1373 = vadd.f32 %v1277, %v1372
    %v1374 = vpop.f32.mrf.mxu0
    %1375 = vdwg.mxu0
    %v1376 = vadd.f32 %v437, %v1362
    %v1377 = vadd.f32 %v438, %v1365
    %v1378 = vadd.f32 %v439, %v1370
    %v1379 = vadd.f32 %v440, %v1373
    %vm1380 = vcmp.gt.f32.partialorder %v1376, 0.0
    %vm1381 = vcmp.gt.f32.partialorder %v1377, 0.0
    %vm1382 = vcmp.gt.f32.partialorder %v1378, 0.0
    %vm1383 = vcmp.gt.f32.partialorder %v1379, 0.0
    %v1384 = vmin.f32 %v1376, 0.0
    %v1385 = vmin.f32 %v1377, 0.0
    %v1386 = vmin.f32 %v1378, 0.0
    %v1387 = vmin.f32 %v1379, 0.0
    %v1388 = vmul.f32 %v1384, 1.442695
    %v1389 = vpow.pop %v1388
    %v1390 = vmul.f32 %v1385, 1.442695
    %v1391 = vpow.pop %v1390
    %v1392 = vmul.f32 %v1386, 1.442695
    %v1393 = vpow.pop %v1392
    %v1394 = vmul.f32 %v1387, 1.442695
    %v1395 = vpow.pop %v1394
    %v1396 = vsub.f32 %v1389, 1.0
    %v1397 = vsub.f32 %v1391, 1.0
    %v1398 = vsub.f32 %v1393, 1.0
    %v1399 = vsub.f32 %v1395, 1.0
    %v1400 = vsel %vm1380, %v1376, %v1396
    %v1401 = vsel %vm1381, %v1377, %v1397
    %v1402 = vsel %vm1382, %v1378, %v1398
    %v1403 = vsel %vm1383, %v1379, %v1399
    %v1404 = vpack.c.bf16 %v1401, %v1400
    %v1405 = vpack.c.bf16 %v1403, %v1402
    %1406 = vrot.lane.b32.xlu0 %v1400, 96
    %v1407 = vpop.permute.xlu0 %1406
    %1408 = vrot.lane.b32.xlu0 %v1401, 96
    %v1409 = vpop.permute.xlu0 %1408
    %1410 = vrot.lane.b32.xlu0 %v1402, 96
    %v1411 = vpop.permute.xlu0 %1410
    %1412 = vrot.lane.b32.xlu0 %v1403, 96
    %v1413 = vpop.permute.xlu0 %1412
    %v1414 = vrot.slane %v1407, 7
    %v1415 = vrot.slane %v1409, 7
    %v1416 = vrot.slane %v1411, 7
    %v1417 = vrot.slane %v1413, 7
    %v1418 = vsel %vm324, %v1416, %v1417
    %v1419 = vsel %vm324, %v1415, %v1416
    %v1420 = vsel %vm324, %v1414, %v1415
    %v1421 = vsel %vm324, %v1417, %v1414
    %v1422 = vsel %vm316, %v1421, 0.0
    %v1423 = vsel %vm317, %v1420, 0.0
    %v1424 = vsel %vm318, %v1419, 0.0
    %v1425 = vsel %vm319, %v1418, 0.0
    %v1426 = vsel %vm517, %v1407, %v1422
    %v1427 = vsel %vm517, %v1409, %v1423
    %v1428 = vsel %vm517, %v1411, %v1424
    %v1429 = vsel %vm517, %v1413, %v1425
    %v1430 = vpack.c.bf16 %v1427, %v1426
    %v1431 = vpack.c.bf16 %v1429, %v1428
    %1432 = vrot.lane.b32.xlu0 %v1400, 64
    %v1433 = vpop.permute.xlu0 %1432
    %1434 = vrot.lane.b32.xlu0 %v1401, 64
    %v1435 = vpop.permute.xlu0 %1434
    %1436 = vrot.lane.b32.xlu0 %v1402, 64
    %v1437 = vpop.permute.xlu0 %1436
    %1438 = vrot.lane.b32.xlu0 %v1403, 64
    %v1439 = vpop.permute.xlu0 %1438
    %v1440 = vrot.slane %v1433, 7
    %v1441 = vrot.slane %v1435, 7
    %v1442 = vrot.slane %v1437, 7
    %v1443 = vrot.slane %v1439, 7
    %v1444 = vsel %vm324, %v1442, %v1443
    %v1445 = vsel %vm324, %v1441, %v1442
    %v1446 = vsel %vm324, %v1440, %v1441
    %v1447 = vsel %vm324, %v1443, %v1440
    %v1448 = vsel %vm316, %v1447, 0.0
    %v1449 = vsel %vm317, %v1446, 0.0
    %v1450 = vsel %vm318, %v1445, 0.0
    %v1451 = vsel %vm319, %v1444, 0.0
    %v1452 = vrot.slane %v1433, 6
    %v1453 = vrot.slane %v1435, 6
    %v1454 = vrot.slane %v1437, 6
    %v1455 = vrot.slane %v1439, 6
    %v1456 = vsel %vm546, %v1454, %v1455
    %v1457 = vsel %vm546, %v1453, %v1454
    %v1458 = vsel %vm546, %v1452, %v1453
    %v1459 = vsel %vm546, %v1455, %v1452
    %v1460 = vsel %vm538, %v1459, 0.0
    %v1461 = vsel %vm539, %v1458, 0.0
    %v1462 = vsel %vm540, %v1457, 0.0
    %v1463 = vsel %vm541, %v1456, 0.0
    %v1464 = vsel %vm490, %v1448, %v1460
    %v1465 = vsel %vm490, %v1449, %v1461
    %v1466 = vsel %vm490, %v1450, %v1462
    %v1467 = vsel %vm490, %v1451, %v1463
    %v1468 = vpack.c.bf16 %v1465, %v1464
    %v1469 = vpack.c.bf16 %v1467, %v1466
    %1470 = vrot.lane.b32.xlu0 %v1400, 32
    %v1471 = vpop.permute.xlu0 %1470
    %1472 = vrot.lane.b32.xlu0 %v1401, 32
    %v1473 = vpop.permute.xlu0 %1472
    %1474 = vrot.lane.b32.xlu0 %v1402, 32
    %v1475 = vpop.permute.xlu0 %1474
    %1476 = vrot.lane.b32.xlu0 %v1403, 32
    %v1477 = vpop.permute.xlu0 %1476
    %v1478 = vrot.slane %v1471, 6
    %v1479 = vrot.slane %v1473, 6
    %v1480 = vrot.slane %v1475, 6
    %v1481 = vrot.slane %v1477, 6
    %v1482 = vsel %vm546, %v1480, %v1481
    %v1483 = vsel %vm546, %v1479, %v1480
    %v1484 = vsel %vm546, %v1478, %v1479
    %v1485 = vsel %vm546, %v1481, %v1478
    %v1486 = vsel %vm538, %v1485, 0.0
    %v1487 = vsel %vm539, %v1484, 0.0
    %v1488 = vsel %vm540, %v1483, 0.0
    %v1489 = vsel %vm541, %v1482, 0.0
    %vm1490 = vcmp.ge.s32.totalorder %v206, 3
    %vm1491 = vcmp.ge.s32.totalorder %v207, 3
    %vm1492 = vcmp.ge.s32.totalorder %v208, 3
    %vm1493 = vcmp.ge.s32.totalorder %v209, 3
    %v1494 = vrot.slane %v1471, 5
    %v1495 = vrot.slane %v1473, 5
    %v1496 = vrot.slane %v1475, 5
    %v1497 = vrot.slane %v1477, 5
    %vm1498 = vcmp.lt.s32.totalorder %v200, 3
    %v1499 = vsel %vm1498, %v1496, %v1497
    %v1500 = vsel %vm1498, %v1495, %v1496
    %v1501 = vsel %vm1498, %v1494, %v1495
    %v1502 = vsel %vm1498, %v1497, %v1494
    %v1503 = vsel %vm1490, %v1502, 0.0
    %v1504 = vsel %vm1491, %v1501, 0.0
    %v1505 = vsel %vm1492, %v1500, 0.0
    %v1506 = vsel %vm1493, %v1499, 0.0
    %v1507 = vsel %vm463, %v1486, %v1503
    %v1508 = vsel %vm463, %v1487, %v1504
    %v1509 = vsel %vm463, %v1488, %v1505
    %v1510 = vsel %vm463, %v1489, %v1506
    %v1511 = vpack.c.bf16 %v1508, %v1507
    %v1512 = vpack.c.bf16 %v1510, %v1509
    %v1513 = vrot.slane %v1400, 5
    %v1514 = vrot.slane %v1401, 5
    %v1515 = vrot.slane %v1402, 5
    %v1516 = vrot.slane %v1403, 5
    %v1517 = vsel %vm1498, %v1515, %v1516
    %v1518 = vsel %vm1498, %v1514, %v1515
    %v1519 = vsel %vm1498, %v1513, %v1514
    %v1520 = vsel %vm1498, %v1516, %v1513
    %v1521 = vsel %vm1490, %v1520, 0.0
    %v1522 = vsel %vm1491, %v1519, 0.0
    %v1523 = vsel %vm1492, %v1518, 0.0
    %v1524 = vsel %vm1493, %v1517, 0.0
    %v1525 = vpack.c.bf16 %v1522, %v1521
    %v1526 = vpack.c.bf16 %v1524, %v1523
    %v1527 = vrot.slane %v1407, 5
    %v1528 = vrot.slane %v1409, 5
    %v1529 = vrot.slane %v1411, 5
    %v1530 = vrot.slane %v1413, 5
    %v1531 = vsel %vm1498, %v1529, %v1530
    %v1532 = vsel %vm1498, %v1528, %v1529
    %v1533 = vsel %vm1498, %v1527, %v1528
    %v1534 = vsel %vm1498, %v1530, %v1527
    %v1535 = vsel %vm1490, %v1534, 0.0
    %v1536 = vsel %vm1491, %v1533, 0.0
    %v1537 = vsel %vm1492, %v1532, 0.0
    %v1538 = vsel %vm1493, %v1531, 0.0
    %vm1539 = vcmp.ge.s32.totalorder %v206, 4
    %vm1540 = vcmp.ge.s32.totalorder %v207, 4
    %vm1541 = vcmp.ge.s32.totalorder %v208, 4
    %vm1542 = vcmp.ge.s32.totalorder %v209, 4
    %v1543 = vrot.slane %v1407, 4
    %v1544 = vrot.slane %v1409, 4
    %v1545 = vrot.slane %v1411, 4
    %v1546 = vrot.slane %v1413, 4
    %vm1547 = vcmp.lt.s32.totalorder %v200, 4
    %v1548 = vsel %vm1547, %v1545, %v1546
    %v1549 = vsel %vm1547, %v1544, %v1545
    %v1550 = vsel %vm1547, %v1543, %v1544
    %v1551 = vsel %vm1547, %v1546, %v1543
    %v1552 = vsel %vm1539, %v1551, 0.0
    %v1553 = vsel %vm1540, %v1550, 0.0
    %v1554 = vsel %vm1541, %v1549, 0.0
    %v1555 = vsel %vm1542, %v1548, 0.0
    %v1556 = vsel %vm517, %v1535, %v1552
    %v1557 = vsel %vm517, %v1536, %v1553
    %v1558 = vsel %vm517, %v1537, %v1554
    %v1559 = vsel %vm517, %v1538, %v1555
    %v1560 = vpack.c.bf16 %v1557, %v1556
    %v1561 = vpack.c.bf16 %v1559, %v1558
    %v1562 = vrot.slane %v1433, 4
    %v1563 = vrot.slane %v1435, 4
    %v1564 = vrot.slane %v1437, 4
    %v1565 = vrot.slane %v1439, 4
    %v1566 = vsel %vm1547, %v1564, %v1565
    %v1567 = vsel %vm1547, %v1563, %v1564
    %v1568 = vsel %vm1547, %v1562, %v1563
    %v1569 = vsel %vm1547, %v1565, %v1562
    %v1570 = vsel %vm1539, %v1569, 0.0
    %v1571 = vsel %vm1540, %v1568, 0.0
    %v1572 = vsel %vm1541, %v1567, 0.0
    %v1573 = vsel %vm1542, %v1566, 0.0
    %vm1574 = vcmp.ge.s32.totalorder %v206, 5
    %vm1575 = vcmp.ge.s32.totalorder %v207, 5
    %vm1576 = vcmp.ge.s32.totalorder %v208, 5
    %vm1577 = vcmp.ge.s32.totalorder %v209, 5
    %v1578 = vrot.slane %v1433, 3
    %v1579 = vrot.slane %v1435, 3
    %v1580 = vrot.slane %v1437, 3
    %v1581 = vrot.slane %v1439, 3
    %vm1582 = vcmp.lt.s32.totalorder %v200, 5
    %v1583 = vsel %vm1582, %v1580, %v1581
    %v1584 = vsel %vm1582, %v1579, %v1580
    %v1585 = vsel %vm1582, %v1578, %v1579
    %v1586 = vsel %vm1582, %v1581, %v1578
    %v1587 = vsel %vm1574, %v1586, 0.0
    %v1588 = vsel %vm1575, %v1585, 0.0
    %v1589 = vsel %vm1576, %v1584, 0.0
    %v1590 = vsel %vm1577, %v1583, 0.0
    %v1591 = vsel %vm490, %v1570, %v1587
    %v1592 = vsel %vm490, %v1571, %v1588
    %v1593 = vsel %vm490, %v1572, %v1589
    %v1594 = vsel %vm490, %v1573, %v1590
    %v1595 = vpack.c.bf16 %v1592, %v1591
    %v1596 = vpack.c.bf16 %v1594, %v1593
    %v1597 = vld [vmem:[#allocation13] sm:$0xf]
    %v1598 = vld [vmem:[#allocation13 + $0x4] sm:$0xf]
    %v1599 = vld [vmem:[#allocation13 + $0x8] sm:$0xf]
    %v1600 = vld [vmem:[#allocation13 + $0xc] sm:$0xf]
    %v1601 = vld [vmem:[#allocation13 + $0x10] sm:$0xf]
    %v1602 = vld [vmem:[#allocation13 + $0x14] sm:$0xf]
    %v1603 = vld [vmem:[#allocation13 + $0x18] sm:$0xf]
    %v1604 = vld [vmem:[#allocation13 + $0x1c] sm:$0xf]
    %v1605 = vld [vmem:[#allocation13 + $0x20] sm:$0xf]
    %v1606 = vld [vmem:[#allocation13 + $0x24] sm:$0xf]
    %v1607 = vld [vmem:[#allocation13 + $0x28] sm:$0xf]
    %v1608 = vld [vmem:[#allocation13 + $0x2c] sm:$0xf]
    %v1609 = vld [vmem:[#allocation13 + $0x30] sm:$0xf]
    %v1610 = vld [vmem:[#allocation13 + $0x34] sm:$0xf]
    %v1611 = vld [vmem:[#allocation13 + $0x38] sm:$0xf]
    %v1612 = vld [vmem:[#allocation13 + $0x3c] sm:$0xf]
    %v1613 = vld [vmem:[#allocation13 + $0x40] sm:$0xf]
    %v1614 = vld [vmem:[#allocation13 + $0x44] sm:$0xf]
    %v1615 = vld [vmem:[#allocation13 + $0x48] sm:$0xf]
    %v1616 = vld [vmem:[#allocation13 + $0x4c] sm:$0xf]
    %v1617 = vld [vmem:[#allocation13 + $0x50] sm:$0xf]
    %v1618 = vld [vmem:[#allocation13 + $0x54] sm:$0xf]
    %v1619 = vld [vmem:[#allocation13 + $0x58] sm:$0xf]
    %v1620 = vld [vmem:[#allocation13 + $0x5c] sm:$0xf]
    %v1621 = vld [vmem:[#allocation13 + $0x60] sm:$0xf]
    %v1622 = vld [vmem:[#allocation13 + $0x64] sm:$0xf]
    %v1623 = vld [vmem:[#allocation13 + $0x68] sm:$0xf]
    %v1624 = vld [vmem:[#allocation13 + $0x6c] sm:$0xf]
    %v1625 = vld [vmem:[#allocation13 + $0x70] sm:$0xf]
    %v1626 = vld [vmem:[#allocation13 + $0x74] sm:$0xf]
    %v1627 = vld [vmem:[#allocation13 + $0x78] sm:$0xf]
    %v1628 = vld [vmem:[#allocation13 + $0x7c] sm:$0xf]
    %v1629 = vld [vmem:[#allocation13 + $0x80] sm:$0xf]
    %v1630 = vld [vmem:[#allocation13 + $0x84] sm:$0xf]
    %v1631 = vld [vmem:[#allocation13 + $0x88] sm:$0xf]
    %v1632 = vld [vmem:[#allocation13 + $0x8c] sm:$0xf]
    %v1633 = vld [vmem:[#allocation13 + $0x90] sm:$0xf]
    %v1634 = vld [vmem:[#allocation13 + $0x94] sm:$0xf]
    %v1635 = vld [vmem:[#allocation13 + $0x98] sm:$0xf]
    %v1636 = vld [vmem:[#allocation13 + $0x9c] sm:$0xf]
    %v1637 = vld [vmem:[#allocation13 + $0xa0] sm:$0xf]
    %v1638 = vld [vmem:[#allocation13 + $0xa4] sm:$0xf]
    %v1639 = vld [vmem:[#allocation13 + $0xa8] sm:$0xf]
    %v1640 = vld [vmem:[#allocation13 + $0xac] sm:$0xf]
    %v1641 = vld [vmem:[#allocation13 + $0xb0] sm:$0xf]
    %v1642 = vld [vmem:[#allocation13 + $0xb4] sm:$0xf]
    %v1643 = vld [vmem:[#allocation13 + $0xb8] sm:$0xf]
    %v1644 = vld [vmem:[#allocation13 + $0xbc] sm:$0xf]
    %v1645 = vld [vmem:[#allocation13 + $0xc0] sm:$0xf]
    %v1646 = vld [vmem:[#allocation13 + $0xc4] sm:$0xf]
    %v1647 = vld [vmem:[#allocation13 + $0xc8] sm:$0xf]
    %v1648 = vld [vmem:[#allocation13 + $0xcc] sm:$0xf]
    %v1649 = vld [vmem:[#allocation13 + $0xd0] sm:$0xf]
    %v1650 = vld [vmem:[#allocation13 + $0xd4] sm:$0xf]
    %v1651 = vld [vmem:[#allocation13 + $0xd8] sm:$0xf]
    %v1652 = vld [vmem:[#allocation13 + $0xdc] sm:$0xf]
    %v1653 = vld [vmem:[#allocation13 + $0xe0] sm:$0xf]
    %v1654 = vld [vmem:[#allocation13 + $0xe4] sm:$0xf]
    %v1655 = vld [vmem:[#allocation13 + $0xe8] sm:$0xf]
    %v1656 = vld [vmem:[#allocation13 + $0xec] sm:$0xf]
    %v1657 = vld [vmem:[#allocation13 + $0xf0] sm:$0xf]
    %v1658 = vld [vmem:[#allocation13 + $0xf4] sm:$0xf]
    %v1659 = vld [vmem:[#allocation13 + $0xf8] sm:$0xf]
    %v1660 = vld [vmem:[#allocation13 + $0xfc] sm:$0xf]
    %v1661 = vld [vmem:[#allocation13 + $0x100] sm:$0xf]
    %v1662 = vld [vmem:[#allocation13 + $0x104] sm:$0xf]
    %v1663 = vld [vmem:[#allocation13 + $0x108] sm:$0xf]
    %v1664 = vld [vmem:[#allocation13 + $0x10c] sm:$0xf]
    %v1665 = vld [vmem:[#allocation13 + $0x110] sm:$0xf]
    %v1666 = vld [vmem:[#allocation13 + $0x114] sm:$0xf]
    %v1667 = vld [vmem:[#allocation13 + $0x118] sm:$0xf]
    %v1668 = vld [vmem:[#allocation13 + $0x11c] sm:$0xf]
    %v1669 = vld [vmem:[#allocation13 + $0x120] sm:$0xf]
    %v1670 = vld [vmem:[#allocation13 + $0x124] sm:$0xf]
    %v1671 = vld [vmem:[#allocation13 + $0x128] sm:$0xf]
    %v1672 = vld [vmem:[#allocation13 + $0x12c] sm:$0xf]
    %v1673 = vld [vmem:[#allocation13 + $0x130] sm:$0xf]
    %v1674 = vld [vmem:[#allocation13 + $0x134] sm:$0xf]
    %v1675 = vld [vmem:[#allocation13 + $0x138] sm:$0xf]
    %v1676 = vld [vmem:[#allocation13 + $0x13c] sm:$0xf]
    %v1677 = vld [vmem:[#allocation13 + $0x140] sm:$0xf]
    %v1678 = vld [vmem:[#allocation13 + $0x144] sm:$0xf]
    %v1679 = vld [vmem:[#allocation13 + $0x148] sm:$0xf]
    %v1680 = vld [vmem:[#allocation13 + $0x14c] sm:$0xf]
    %v1681 = vld [vmem:[#allocation13 + $0x150] sm:$0xf]
    %v1682 = vld [vmem:[#allocation13 + $0x154] sm:$0xf]
    %v1683 = vld [vmem:[#allocation13 + $0x158] sm:$0xf]
    %v1684 = vld [vmem:[#allocation13 + $0x15c] sm:$0xf]
    %v1685 = vld [vmem:[#allocation13 + $0x160] sm:$0xf]
    %v1686 = vld [vmem:[#allocation13 + $0x164] sm:$0xf]
    %v1687 = vld [vmem:[#allocation13 + $0x168] sm:$0xf]
    %v1688 = vld [vmem:[#allocation13 + $0x16c] sm:$0xf]
    %v1689 = vld [vmem:[#allocation13 + $0x170] sm:$0xf]
    %v1690 = vld [vmem:[#allocation13 + $0x174] sm:$0xf]
    %v1691 = vld [vmem:[#allocation13 + $0x178] sm:$0xf]
    %v1692 = vld [vmem:[#allocation13 + $0x17c] sm:$0xf]
    %v1693 = vld [vmem:[#allocation13 + $0x180] sm:$0xf]
    %v1694 = vld [vmem:[#allocation13 + $0x184] sm:$0xf]
    %v1695 = vld [vmem:[#allocation13 + $0x188] sm:$0xf]
    %v1696 = vld [vmem:[#allocation13 + $0x18c] sm:$0xf]
    %v1697 = vld [vmem:[#allocation13 + $0x190] sm:$0xf]
    %v1698 = vld [vmem:[#allocation13 + $0x194] sm:$0xf]
    %v1699 = vld [vmem:[#allocation13 + $0x198] sm:$0xf]
    %v1700 = vld [vmem:[#allocation13 + $0x19c] sm:$0xf]
    %v1701 = vld [vmem:[#allocation13 + $0x1a0] sm:$0xf]
    %v1702 = vld [vmem:[#allocation13 + $0x1a4] sm:$0xf]
    %v1703 = vld [vmem:[#allocation13 + $0x1a8] sm:$0xf]
    %v1704 = vld [vmem:[#allocation13 + $0x1ac] sm:$0xf]
    %v1705 = vld [vmem:[#allocation13 + $0x1b0] sm:$0xf]
    %v1706 = vld [vmem:[#allocation13 + $0x1b4] sm:$0xf]
    %v1707 = vld [vmem:[#allocation13 + $0x1b8] sm:$0xf]
    %v1708 = vld [vmem:[#allocation13 + $0x1bc] sm:$0xf]
    %v1709 = vld [vmem:[#allocation15] sm:$0x1]
    %v1711 = vlaneseq
    %v1712 = vshrl.u32 %v1711, 7
    %v1713 = vsub.s32 0, %v1712
    %v1714 = vrot.slane %v1709, %v1713
    %v1828 = vunpack.c.l.b16 %v1597
    %v1829 = vunpack.c.l.b16 %v1598
    %v1830 = vunpack.c.l.b16 %v1599
    %v1831 = vunpack.c.l.b16 %v1600
    %v1832 = vunpack.c.l.b16 %v1601
    %v1833 = vunpack.c.l.b16 %v1602
    %v1834 = vunpack.c.l.b16 %v1603
    %v1835 = vunpack.c.l.b16 %v1604
    %v1836 = vunpack.c.l.b16 %v1605
    %v1837 = vunpack.c.l.b16 %v1606
    %v1838 = vunpack.c.l.b16 %v1607
    %v1839 = vunpack.c.l.b16 %v1608
    %v1840 = vunpack.c.l.b16 %v1609
    %v1841 = vunpack.c.l.b16 %v1610
    %v1842 = vunpack.c.l.b16 %v1611
    %v1843 = vunpack.c.l.b16 %v1612
    %v1844 = vunpack.c.l.b16 %v1613
    %v1845 = vunpack.c.l.b16 %v1614
    %v1846 = vunpack.c.l.b16 %v1615
    %v1847 = vunpack.c.l.b16 %v1616
    %v1848 = vunpack.c.l.b16 %v1617
    %v1849 = vunpack.c.l.b16 %v1618
    %v1850 = vunpack.c.l.b16 %v1619
    %v1851 = vunpack.c.l.b16 %v1620
    %v1852 = vunpack.c.l.b16 %v1621
    %v1853 = vunpack.c.l.b16 %v1622
    %v1854 = vunpack.c.l.b16 %v1623
    %v1855 = vunpack.c.l.b16 %v1624
    %v1856 = vunpack.c.l.b16 %v1625
    %v1857 = vunpack.c.l.b16 %v1626
    %v1858 = vunpack.c.l.b16 %v1627
    %v1859 = vunpack.c.l.b16 %v1628
    %v1860 = vunpack.c.l.b16 %v1629
    %v1861 = vunpack.c.l.b16 %v1630
    %v1862 = vunpack.c.l.b16 %v1631
    %v1863 = vunpack.c.l.b16 %v1632
    %v1864 = vunpack.c.l.b16 %v1633
    %v1865 = vunpack.c.l.b16 %v1634
    %v1866 = vunpack.c.l.b16 %v1635
    %v1867 = vunpack.c.l.b16 %v1636
    %v1868 = vunpack.c.l.b16 %v1637
    %v1869 = vunpack.c.l.b16 %v1638
    %v1870 = vunpack.c.l.b16 %v1639
    %v1871 = vunpack.c.l.b16 %v1640
    %v1872 = vunpack.c.l.b16 %v1641
    %v1873 = vunpack.c.l.b16 %v1642
    %v1874 = vunpack.c.l.b16 %v1643
    %v1875 = vunpack.c.l.b16 %v1644
    %v1876 = vunpack.c.l.b16 %v1645
    %v1877 = vunpack.c.l.b16 %v1646
    %v1878 = vunpack.c.l.b16 %v1647
    %v1879 = vunpack.c.l.b16 %v1648
    %v1880 = vunpack.c.l.b16 %v1649
    %v1881 = vunpack.c.l.b16 %v1650
    %v1882 = vunpack.c.l.b16 %v1651
    %v1883 = vunpack.c.l.b16 %v1652
    %v1884 = vunpack.c.l.b16 %v1653
    %v1885 = vunpack.c.l.b16 %v1654
    %v1886 = vunpack.c.l.b16 %v1655
    %v1887 = vunpack.c.l.b16 %v1656
    %v1888 = vunpack.c.l.b16 %v1657
    %v1889 = vunpack.c.l.b16 %v1658
    %v1890 = vunpack.c.l.b16 %v1659
    %v1891 = vunpack.c.l.b16 %v1660
    %v1892 = vunpack.c.l.b16 %v1661
    %v1893 = vunpack.c.l.b16 %v1662
    %v1894 = vunpack.c.l.b16 %v1663
    %v1895 = vunpack.c.l.b16 %v1664
    %v1896 = vunpack.c.l.b16 %v1665
    %v1897 = vunpack.c.l.b16 %v1666
    %v1898 = vunpack.c.l.b16 %v1667
    %v1899 = vunpack.c.l.b16 %v1668
    %v1900 = vunpack.c.l.b16 %v1669
    %v1901 = vunpack.c.l.b16 %v1670
    %v1902 = vunpack.c.l.b16 %v1671
    %v1903 = vunpack.c.l.b16 %v1672
    %v1904 = vunpack.c.l.b16 %v1673
    %v1905 = vunpack.c.l.b16 %v1674
    %v1906 = vunpack.c.l.b16 %v1675
    %v1907 = vunpack.c.l.b16 %v1676
    %v1908 = vunpack.c.l.b16 %v1677
    %v1909 = vunpack.c.l.b16 %v1678
    %v1910 = vunpack.c.l.b16 %v1679
    %v1911 = vunpack.c.l.b16 %v1680
    %v1912 = vunpack.c.l.b16 %v1681
    %v1913 = vunpack.c.l.b16 %v1682
    %v1914 = vunpack.c.l.b16 %v1683
    %v1915 = vunpack.c.l.b16 %v1684
    %v1916 = vunpack.c.l.b16 %v1685
    %v1917 = vunpack.c.l.b16 %v1686
    %v1918 = vunpack.c.l.b16 %v1687
    %v1919 = vunpack.c.l.b16 %v1688
    %v1920 = vunpack.c.l.b16 %v1689
    %v1921 = vunpack.c.l.b16 %v1690
    %v1922 = vunpack.c.l.b16 %v1691
    %v1923 = vunpack.c.l.b16 %v1692
    %v1924 = vunpack.c.l.b16 %v1693
    %v1925 = vunpack.c.l.b16 %v1694
    %v1926 = vunpack.c.l.b16 %v1695
    %v1927 = vunpack.c.l.b16 %v1696
    %v1928 = vunpack.c.l.b16 %v1697
    %v1929 = vunpack.c.l.b16 %v1698
    %v1930 = vunpack.c.l.b16 %v1699
    %v1931 = vunpack.c.l.b16 %v1700
    %v1932 = vunpack.c.l.b16 %v1701
    %v1933 = vunpack.c.l.b16 %v1702
    %v1934 = vunpack.c.l.b16 %v1703
    %v1935 = vunpack.c.l.b16 %v1704
    %v1936 = vunpack.c.l.b16 %v1705
    %v1937 = vunpack.c.l.b16 %v1706
    %v1938 = vunpack.c.l.b16 %v1707
    %v1939 = vunpack.c.l.b16 %v1708
    %v1940 = vpack.c.b16 %v1829, %v1828
    %v1941 = vpack.c.b16 %v1831, %v1830
    %v1942 = vpack.c.b16 %v1833, %v1832
    %v1943 = vpack.c.b16 %v1835, %v1834
    %v1944 = vpack.c.b16 %v1837, %v1836
    %v1945 = vpack.c.b16 %v1839, %v1838
    %v1946 = vpack.c.b16 %v1841, %v1840
    %v1947 = vpack.c.b16 %v1843, %v1842
    %v1948 = vpack.c.b16 %v1845, %v1844
    %v1949 = vpack.c.b16 %v1847, %v1846
    %v1950 = vpack.c.b16 %v1849, %v1848
    %v1951 = vpack.c.b16 %v1851, %v1850
    %v1952 = vpack.c.b16 %v1853, %v1852
    %v1953 = vpack.c.b16 %v1855, %v1854
    %v1954 = vpack.c.b16 %v1857, %v1856
    %v1955 = vpack.c.b16 %v1859, %v1858
    %v1956 = vpack.c.b16 %v1861, %v1860
    %v1957 = vpack.c.b16 %v1863, %v1862
    %v1958 = vpack.c.b16 %v1865, %v1864
    %v1959 = vpack.c.b16 %v1867, %v1866
    %v1960 = vpack.c.b16 %v1869, %v1868
    %v1961 = vpack.c.b16 %v1871, %v1870
    %v1962 = vpack.c.b16 %v1873, %v1872
    %v1963 = vpack.c.b16 %v1875, %v1874
    %v1964 = vpack.c.b16 %v1877, %v1876
    %v1965 = vpack.c.b16 %v1879, %v1878
    %v1966 = vpack.c.b16 %v1881, %v1880
    %v1967 = vpack.c.b16 %v1883, %v1882
    %v1968 = vpack.c.b16 %v1885, %v1884
    %v1969 = vpack.c.b16 %v1887, %v1886
    %v1970 = vpack.c.b16 %v1889, %v1888
    %v1971 = vpack.c.b16 %v1891, %v1890
    %v1972 = vpack.c.b16 %v1893, %v1892
    %v1973 = vpack.c.b16 %v1895, %v1894
    %v1974 = vpack.c.b16 %v1897, %v1896
    %v1975 = vpack.c.b16 %v1899, %v1898
    %v1976 = vpack.c.b16 %v1901, %v1900
    %v1977 = vpack.c.b16 %v1903, %v1902
    %v1978 = vpack.c.b16 %v1905, %v1904
    %v1979 = vpack.c.b16 %v1907, %v1906
    %v1980 = vpack.c.b16 %v1909, %v1908
    %v1981 = vpack.c.b16 %v1911, %v1910
    %v1982 = vpack.c.b16 %v1913, %v1912
    %v1983 = vpack.c.b16 %v1915, %v1914
    %v1984 = vpack.c.b16 %v1917, %v1916
    %v1985 = vpack.c.b16 %v1919, %v1918
    %v1986 = vpack.c.b16 %v1921, %v1920
    %v1987 = vpack.c.b16 %v1923, %v1922
    %v1988 = vpack.c.b16 %v1925, %v1924
    %v1989 = vpack.c.b16 %v1927, %v1926
    %v1990 = vpack.c.b16 %v1929, %v1928
    %v1991 = vpack.c.b16 %v1931, %v1930
    %v1992 = vpack.c.b16 %v1933, %v1932
    %v1993 = vpack.c.b16 %v1935, %v1934
    %v1994 = vpack.c.b16 %v1937, %v1936
    %v1995 = vpack.c.b16 %v1939, %v1938
    %2052 = vmatprep.subr.bf16.mxu0 0
    %2053 = vmatpush1.bf16.msra.mxu0 %v1947
    %2054 = vmatprep.subr.bf16.mxu0 0
    %2055 = vmatpush1.bf16.msra.mxu0 %v1946
    %2056 = vmatprep.subr.bf16.mxu0 0
    %2057 = vmatpush1.bf16.msra.mxu0 %v1945
    %2058 = vmatprep.subr.bf16.mxu0 0
    %2059 = vmatpush1.bf16.msra.mxu0 %v1944
    %2060 = vmatprep.subr.bf16.mxu0 0
    %2061 = vmatpush1.bf16.msra.mxu0 %v1943
    %2062 = vmatprep.subr.bf16.mxu0 0
    %2063 = vmatpush1.bf16.msra.mxu0 %v1942
    %2064 = vmatprep.subr.bf16.mxu0 0
    %2065 = vmatpush1.bf16.msra.mxu0 %v1941
    %2066 = vmatprep.subr.bf16.mxu0 0
    %2067 = vmatpush1.bf16.msra.mxu0 %v1940
    %2068 = vmatprep.subr.bf16.mxu0 0
    %2069 = vmatpush2.bf16.msra.mxu0 %v1955
    %2070 = vmatprep.subr.bf16.mxu0 0
    %2071 = vmatpush2.bf16.msra.mxu0 %v1954
    %2072 = vmatprep.subr.bf16.mxu0 0
    %2073 = vmatpush2.bf16.msra.mxu0 %v1953
    %2074 = vmatprep.subr.bf16.mxu0 0
    %2075 = vmatpush2.bf16.msra.mxu0 %v1952
    %2076 = vmatprep.subr.bf16.mxu0 0
    %2077 = vmatpush2.bf16.msra.mxu0 %v1951
    %2078 = vmatprep.subr.bf16.mxu0 0
    %2079 = vmatpush2.bf16.msra.mxu0 %v1950
    %2080 = vmatprep.subr.bf16.mxu0 0
    %2081 = vmatpush2.bf16.msra.mxu0 %v1949
    %2082 = vmatprep.subr.bf16.mxu0 0
    %2083 = vmatpush2.bf16.msra.mxu0 %v1948
    %2084 = vmatprep.mubr.bf16.mxu0 %v1430
    %2085 = vmatmul.mubr.bf16.gmra.mxu0 %v1404
    %v2086 = vpop.f32.mrf.mxu0
    %v2087 = vadd.f32 %v1714, %v2086
    %v2088 = vpop.f32.mrf.mxu0
    %v2089 = vpop.f32.mrf.mxu0
    %v2090 = vadd.f32 %v1714, %v2089
    %v2091 = vpop.f32.mrf.mxu0
    %2092 = vmatprep.mubr.bf16.mxu0 %v1431
    %2093 = vmatmul.mubr.bf16.gmra.mxu0 %v1405
    %v2094 = vpop.f32.mrf.mxu0
    %v2095 = vadd.f32 %v1714, %v2094
    %v2096 = vpop.f32.mrf.mxu0
    %v2097 = vpop.f32.mrf.mxu0
    %v2098 = vadd.f32 %v1714, %v2097
    %v2099 = vpop.f32.mrf.mxu0
    %2100 = vdwg.mxu0
    %2101 = vmatprep.subr.bf16.mxu0 0
    %2102 = vmatpush1.bf16.msra.mxu0 %v1963
    %2103 = vmatprep.subr.bf16.mxu0 0
    %2104 = vmatpush1.bf16.msra.mxu0 %v1962
    %2105 = vmatprep.subr.bf16.mxu0 0
    %2106 = vmatpush1.bf16.msra.mxu0 %v1961
    %2107 = vmatprep.subr.bf16.mxu0 0
    %2108 = vmatpush1.bf16.msra.mxu0 %v1960
    %2109 = vmatprep.subr.bf16.mxu0 0
    %2110 = vmatpush1.bf16.msra.mxu0 %v1959
    %2111 = vmatprep.subr.bf16.mxu0 0
    %2112 = vmatpush1.bf16.msra.mxu0 %v1958
    %2113 = vmatprep.subr.bf16.mxu0 0
    %2114 = vmatpush1.bf16.msra.mxu0 %v1957
    %2115 = vmatprep.subr.bf16.mxu0 0
    %2116 = vmatpush1.bf16.msra.mxu0 %v1956
    %2117 = vmatprep.subr.bf16.mxu0 0
    %2118 = vmatpush2.bf16.msra.mxu0 %v1971
    %2119 = vmatprep.subr.bf16.mxu0 0
    %2120 = vmatpush2.bf16.msra.mxu0 %v1970
    %2121 = vmatprep.subr.bf16.mxu0 0
    %2122 = vmatpush2.bf16.msra.mxu0 %v1969
    %2123 = vmatprep.subr.bf16.mxu0 0
    %2124 = vmatpush2.bf16.msra.mxu0 %v1968
    %2125 = vmatprep.subr.bf16.mxu0 0
    %2126 = vmatpush2.bf16.msra.mxu0 %v1967
    %2127 = vmatprep.subr.bf16.mxu0 0
    %2128 = vmatpush2.bf16.msra.mxu0 %v1966
    %2129 = vmatprep.subr.bf16.mxu0 0
    %2130 = vmatpush2.bf16.msra.mxu0 %v1965
    %2131 = vmatprep.subr.bf16.mxu0 0
    %2132 = vmatpush2.bf16.msra.mxu0 %v1964
    %2133 = vmatprep.mubr.bf16.mxu0 %v1511
    %2134 = vmatmul.mubr.bf16.gmra.mxu0 %v1468
    %v2135 = vpop.f32.mrf.mxu0
    %v2136 = vadd.f32 %v2087, %v2135
    %v2137 = vpop.f32.mrf.mxu0
    %v2138 = vpop.f32.mrf.mxu0
    %v2139 = vadd.f32 %v2090, %v2138
    %v2140 = vpop.f32.mrf.mxu0
    %2141 = vmatprep.mubr.bf16.mxu0 %v1512
    %2142 = vmatmul.mubr.bf16.gmra.mxu0 %v1469
    %v2143 = vpop.f32.mrf.mxu0
    %v2144 = vadd.f32 %v2095, %v2143
    %v2145 = vpop.f32.mrf.mxu0
    %v2146 = vpop.f32.mrf.mxu0
    %v2147 = vadd.f32 %v2098, %v2146
    %v2148 = vpop.f32.mrf.mxu0
    %2149 = vdwg.mxu0
    %2150 = vmatprep.subr.bf16.mxu0 0
    %2151 = vmatpush1.bf16.msra.mxu0 %v1979
    %2152 = vmatprep.subr.bf16.mxu0 0
    %2153 = vmatpush1.bf16.msra.mxu0 %v1978
    %2154 = vmatprep.subr.bf16.mxu0 0
    %2155 = vmatpush1.bf16.msra.mxu0 %v1977
    %2156 = vmatprep.subr.bf16.mxu0 0
    %2157 = vmatpush1.bf16.msra.mxu0 %v1976
    %2158 = vmatprep.subr.bf16.mxu0 0
    %2159 = vmatpush1.bf16.msra.mxu0 %v1975
    %2160 = vmatprep.subr.bf16.mxu0 0
    %2161 = vmatpush1.bf16.msra.mxu0 %v1974
    %2162 = vmatprep.subr.bf16.mxu0 0
    %2163 = vmatpush1.bf16.msra.mxu0 %v1973
    %2164 = vmatprep.subr.bf16.mxu0 0
    %2165 = vmatpush1.bf16.msra.mxu0 %v1972
    %2166 = vmatprep.subr.bf16.mxu0 0
    %2167 = vmatpush2.bf16.msra.mxu0 %v1987
    %2168 = vmatprep.subr.bf16.mxu0 0
    %2169 = vmatpush2.bf16.msra.mxu0 %v1986
    %2170 = vmatprep.subr.bf16.mxu0 0
    %2171 = vmatpush2.bf16.msra.mxu0 %v1985
    %2172 = vmatprep.subr.bf16.mxu0 0
    %2173 = vmatpush2.bf16.msra.mxu0 %v1984
    %2174 = vmatprep.subr.bf16.mxu0 0
    %2175 = vmatpush2.bf16.msra.mxu0 %v1983
    %2176 = vmatprep.subr.bf16.mxu0 0
    %2177 = vmatpush2.bf16.msra.mxu0 %v1982
    %2178 = vmatprep.subr.bf16.mxu0 0
    %2179 = vmatpush2.bf16.msra.mxu0 %v1981
    %2180 = vmatprep.subr.bf16.mxu0 0
    %2181 = vmatpush2.bf16.msra.mxu0 %v1980
    %2182 = vmatprep.mubr.bf16.mxu0 %v1560
    %2183 = vmatmul.mubr.bf16.gmra.mxu0 %v1525
    %v2184 = vpop.f32.mrf.mxu0
    %v2185 = vadd.f32 %v2136, %v2184
    %v2186 = vpop.f32.mrf.mxu0
    %v2187 = vpop.f32.mrf.mxu0
    %v2188 = vadd.f32 %v2139, %v2187
    %v2189 = vpop.f32.mrf.mxu0
    %2190 = vmatprep.mubr.bf16.mxu0 %v1561
    %2191 = vmatmul.mubr.bf16.gmra.mxu0 %v1526
    %v2192 = vpop.f32.mrf.mxu0
    %v2193 = vadd.f32 %v2144, %v2192
    %v2194 = vpop.f32.mrf.mxu0
    %v2195 = vpop.f32.mrf.mxu0
    %v2196 = vadd.f32 %v2147, %v2195
    %v2197 = vpop.f32.mrf.mxu0
    %2198 = vdwg.mxu0
    %2199 = vmatprep.subr.bf16.mxu0 0
    %2200 = vmatpush1.bf16.msra.mxu0 %v1995
    %2201 = vmatprep.subr.bf16.mxu0 0
    %2202 = vmatpush1.bf16.msra.mxu0 %v1994
    %2203 = vmatprep.subr.bf16.mxu0 0
    %2204 = vmatpush1.bf16.msra.mxu0 %v1993
    %2205 = vmatprep.subr.bf16.mxu0 0
    %2206 = vmatpush1.bf16.msra.mxu0 %v1992
    %2207 = vmatprep.subr.bf16.mxu0 0
    %2208 = vmatpush1.bf16.msra.mxu0 %v1991
    %2209 = vmatprep.subr.bf16.mxu0 0
    %2210 = vmatpush1.bf16.msra.mxu0 %v1990
    %2211 = vmatprep.subr.bf16.mxu0 0
    %2212 = vmatpush1.bf16.msra.mxu0 %v1989
    %2213 = vmatprep.subr.bf16.mxu0 0
    %2214 = vmatpush1.bf16.msra.mxu0 %v1988
    %2215 = vmatprep.subr.bf16.mxu0 0
    %2216 = vmatpush2.bf16.msra.mxu0 0
    %2217 = vmatprep.subr.bf16.mxu0 0
    %2218 = vmatpush2.bf16.msra.mxu0 0
    %2219 = vmatprep.subr.bf16.mxu0 0
    %2220 = vmatpush2.bf16.msra.mxu0 0
    %2221 = vmatprep.subr.bf16.mxu0 0
    %2222 = vmatpush2.bf16.msra.mxu0 0
    %2223 = vmatprep.subr.bf16.mxu0 0
    %2224 = vmatpush2.bf16.msra.mxu0 0
    %2225 = vmatprep.subr.bf16.mxu0 0
    %2226 = vmatpush2.bf16.msra.mxu0 0
    %2227 = vmatprep.subr.bf16.mxu0 0
    %2228 = vmatpush2.bf16.msra.mxu0 0
    %2229 = vmatprep.subr.bf16.mxu0 0
    %2230 = vmatpush2.bf16.msra.mxu0 0
    %2231 = vmatprep.mubr.bf16.mxu0 0
    %2232 = vmatmul.mubr.bf16.gmra.mxu0 %v1595
    %v2233 = vpop.f32.mrf.mxu0
    %v2234 = vadd.f32 %v2185, %v2233
    %v2235 = vpop.f32.mrf.mxu0
    %v2236 = vpop.f32.mrf.mxu0
    %v2237 = vadd.f32 %v2188, %v2236
    %v2238 = vpop.f32.mrf.mxu0
    %2239 = vmatprep.mubr.bf16.mxu0 0
    %2240 = vmatmul.mubr.bf16.gmra.mxu0 %v1596
    %v2241 = vpop.f32.mrf.mxu0
    %v2242 = vadd.f32 %v2193, %v2241
    %v2243 = vpop.f32.mrf.mxu0
    %v2244 = vpop.f32.mrf.mxu0
    %v2245 = vadd.f32 %v2196, %v2244
    %v2246 = vpop.f32.mrf.mxu0
    %2247 = vdwg.mxu0
    %vm2248 = vcmp.gt.f32.partialorder %v2234, 0.0
    %vm2249 = vcmp.gt.f32.partialorder %v2237, 0.0
    %vm2250 = vcmp.gt.f32.partialorder %v2242, 0.0
    %vm2251 = vcmp.gt.f32.partialorder %v2245, 0.0
    %v2252 = vmin.f32 %v2234, 0.0
    %v2253 = vmin.f32 %v2237, 0.0
    %v2254 = vmin.f32 %v2242, 0.0
    %v2255 = vmin.f32 %v2245, 0.0
    %v2256 = vmul.f32 %v2252, 1.442695
    %v2257 = vpow.pop %v2256
    %v2258 = vmul.f32 %v2253, 1.442695
    %v2259 = vpow.pop %v2258
    %v2260 = vmul.f32 %v2254, 1.442695
    %v2261 = vpow.pop %v2260
    %v2262 = vmul.f32 %v2255, 1.442695
    %v2263 = vpow.pop %v2262
    %v2264 = vsub.f32 %v2257, 1.0
    %v2265 = vsub.f32 %v2259, 1.0
    %v2266 = vsub.f32 %v2261, 1.0
    %v2267 = vsub.f32 %v2263, 1.0
    %v2268 = vsel %vm2248, %v2234, %v2264
    %v2269 = vsel %vm2249, %v2237, %v2265
    %v2270 = vsel %vm2250, %v2242, %v2266
    %v2271 = vsel %vm2251, %v2245, %v2267
    %v2272 = vpack.c.bf16 %v2269, %v2268
    %v2273 = vpack.c.bf16 %v2271, %v2270
    %v2274 = vld [vmem:[%s10] sm:$0xf]
    %v2275 = vld [vmem:[%s10 + $0x4] sm:$0xf]
    %v2276 = vld [vmem:[%s10 + $0x8] sm:$0xf]
    %v2277 = vld [vmem:[%s10 + $0xc] sm:$0xf]
    %v2278 = vld [vmem:[%s10 + $0x10] sm:$0xf]
    %v2279 = vld [vmem:[%s10 + $0x14] sm:$0xf]
    %v2280 = vld [vmem:[%s10 + $0x18] sm:$0xf]
    %v2281 = vld [vmem:[%s10 + $0x1c] sm:$0xf]
    %v2282 = vld [vmem:[%s10 + $0x20] sm:$0xf]
    %v2283 = vld [vmem:[%s10 + $0x24] sm:$0xf]
    %v2284 = vld [vmem:[%s10 + $0x28] sm:$0xf]
    %v2285 = vld [vmem:[%s10 + $0x2c] sm:$0xf]
    %v2286 = vld [vmem:[%s10 + $0x30] sm:$0xf]
    %v2287 = vld [vmem:[%s10 + $0x34] sm:$0xf]
    %v2288 = vld [vmem:[%s10 + $0x38] sm:$0xf]
    %v2289 = vld [vmem:[%s10 + $0x3c] sm:$0xf]
    %v2290 = vld [vmem:[%s11] sm:$0x1]
    %v2292 = vlaneseq
    %v2293 = vshrl.u32 %v2292, 7
    %v2294 = vsub.s32 0, %v2293
    %v2295 = vrot.slane %v2290, %v2294
    %v2313 = vunpack.c.l.b16 %v2274
    %v2314 = vunpack.c.l.b16 %v2275
    %v2315 = vunpack.c.l.b16 %v2276
    %v2316 = vunpack.c.l.b16 %v2277
    %v2317 = vunpack.c.l.b16 %v2278
    %v2318 = vunpack.c.l.b16 %v2279
    %v2319 = vunpack.c.l.b16 %v2280
    %v2320 = vunpack.c.l.b16 %v2281
    %v2321 = vunpack.c.l.b16 %v2282
    %v2322 = vunpack.c.l.b16 %v2283
    %v2323 = vunpack.c.l.b16 %v2284
    %v2324 = vunpack.c.l.b16 %v2285
    %v2325 = vunpack.c.l.b16 %v2286
    %v2326 = vunpack.c.l.b16 %v2287
    %v2327 = vunpack.c.l.b16 %v2288
    %v2328 = vunpack.c.l.b16 %v2289
    %v2329 = vpack.c.b16 %v2314, %v2313
    %v2330 = vpack.c.b16 %v2316, %v2315
    %v2331 = vpack.c.b16 %v2318, %v2317
    %v2332 = vpack.c.b16 %v2320, %v2319
    %v2333 = vpack.c.b16 %v2322, %v2321
    %v2334 = vpack.c.b16 %v2324, %v2323
    %v2335 = vpack.c.b16 %v2326, %v2325
    %v2336 = vpack.c.b16 %v2328, %v2327
    %2345 = vmatprep.subr.bf16.mxu0 0
    %2346 = vmatpush1.bf16.msra.mxu0 %v2336
    %2347 = vmatprep.subr.bf16.mxu0 0
    %2348 = vmatpush1.bf16.msra.mxu0 %v2335
    %2349 = vmatprep.subr.bf16.mxu0 0
    %2350 = vmatpush1.bf16.msra.mxu0 %v2334
    %2351 = vmatprep.subr.bf16.mxu0 0
    %2352 = vmatpush1.bf16.msra.mxu0 %v2333
    %2353 = vmatprep.subr.bf16.mxu0 0
    %2354 = vmatpush1.bf16.msra.mxu0 %v2332
    %2355 = vmatprep.subr.bf16.mxu0 0
    %2356 = vmatpush1.bf16.msra.mxu0 %v2331
    %2357 = vmatprep.subr.bf16.mxu0 0
    %2358 = vmatpush1.bf16.msra.mxu0 %v2330
    %2359 = vmatprep.subr.bf16.mxu0 0
    %2360 = vmatpush1.bf16.msra.mxu0 %v2329
    %2361 = vmatprep.subr.bf16.mxu0 0
    %2362 = vmatpush2.bf16.msra.mxu0 0
    %2363 = vmatprep.subr.bf16.mxu0 0
    %2364 = vmatpush2.bf16.msra.mxu0 0
    %2365 = vmatprep.subr.bf16.mxu0 0
    %2366 = vmatpush2.bf16.msra.mxu0 0
    %2367 = vmatprep.subr.bf16.mxu0 0
    %2368 = vmatpush2.bf16.msra.mxu0 0
    %2369 = vmatprep.subr.bf16.mxu0 0
    %2370 = vmatpush2.bf16.msra.mxu0 0
    %2371 = vmatprep.subr.bf16.mxu0 0
    %2372 = vmatpush2.bf16.msra.mxu0 0
    %2373 = vmatprep.subr.bf16.mxu0 0
    %2374 = vmatpush2.bf16.msra.mxu0 0
    %2375 = vmatprep.subr.bf16.mxu0 0
    %2376 = vmatpush2.bf16.msra.mxu0 0
    %2377 = vmatprep.mubr.bf16.mxu0 0
    %2378 = vmatmul.mubr.bf16.gmra.mxu0 %v2272
    %v2379 = vpop.f32.mrf.mxu0
    %v2380 = vadd.f32 %v2295, %v2379
    %v2381 = vpop.f32.mrf.mxu0
    %v2382 = vpop.f32.mrf.mxu0
    %v2383 = vadd.f32 %v2295, %v2382
    %v2384 = vpop.f32.mrf.mxu0
    %2385 = vmatprep.mubr.bf16.mxu0 0
    %2386 = vmatmul.mubr.bf16.gmra.mxu0 %v2273
    %v2387 = vpop.f32.mrf.mxu0
    %v2388 = vadd.f32 %v2295, %v2387
    %v2389 = vpop.f32.mrf.mxu0
    %v2390 = vpop.f32.mrf.mxu0
    %v2391 = vadd.f32 %v2295, %v2390
    %v2392 = vpop.f32.mrf.mxu0
    %2393 = vdwg.mxu0
    %v2394 = vadd.f32 %v1400, %v2380
    %v2395 = vadd.f32 %v1401, %v2383
    %v2396 = vadd.f32 %v1402, %v2388
    %v2397 = vadd.f32 %v1403, %v2391
    %vm2398 = vcmp.gt.f32.partialorder %v2394, 0.0
    %vm2399 = vcmp.gt.f32.partialorder %v2395, 0.0
    %vm2400 = vcmp.gt.f32.partialorder %v2396, 0.0
    %vm2401 = vcmp.gt.f32.partialorder %v2397, 0.0
    %v2402 = vmin.f32 %v2394, 0.0
    %v2403 = vmin.f32 %v2395, 0.0
    %v2404 = vmin.f32 %v2396, 0.0
    %v2405 = vmin.f32 %v2397, 0.0
    %v2406 = vmul.f32 %v2402, 1.442695
    %v2407 = vpow.pop %v2406
    %v2408 = vmul.f32 %v2403, 1.442695
    %v2409 = vpow.pop %v2408
    %v2410 = vmul.f32 %v2404, 1.442695
    %v2411 = vpow.pop %v2410
    %v2412 = vmul.f32 %v2405, 1.442695
    %v2413 = vpow.pop %v2412
    %v2414 = vsub.f32 %v2407, 1.0
    %v2415 = vsub.f32 %v2409, 1.0
    %v2416 = vsub.f32 %v2411, 1.0
    %v2417 = vsub.f32 %v2413, 1.0
    %v2418 = vsel %vm2398, %v2394, %v2414
    %v2419 = vsel %vm2399, %v2395, %v2415
    %v2420 = vsel %vm2400, %v2396, %v2416
    %v2421 = vsel %vm2401, %v2397, %v2417
    %v2422 = vpack.c.bf16 %v2419, %v2418
    %v2423 = vpack.c.bf16 %v2421, %v2420
    %2424 = vrot.lane.b32.xlu0 %v2418, 32
    %v2425 = vpop.permute.xlu0 %2424
    %2426 = vrot.lane.b32.xlu0 %v2419, 32
    %v2427 = vpop.permute.xlu0 %2426
    %2428 = vrot.lane.b32.xlu0 %v2420, 32
    %v2429 = vpop.permute.xlu0 %2428
    %2430 = vrot.lane.b32.xlu0 %v2421, 32
    %v2431 = vpop.permute.xlu0 %2430
    %v2432 = vrot.slane %v2425, 6
    %v2433 = vrot.slane %v2427, 6
    %v2434 = vrot.slane %v2429, 6
    %v2435 = vrot.slane %v2431, 6
    %v2436 = vsel %vm546, %v2434, %v2435
    %v2437 = vsel %vm546, %v2433, %v2434
    %v2438 = vsel %vm546, %v2432, %v2433
    %v2439 = vsel %vm546, %v2435, %v2432
    %v2440 = vsel %vm538, %v2439, 0.0
    %v2441 = vsel %vm539, %v2438, 0.0
    %v2442 = vsel %vm540, %v2437, 0.0
    %v2443 = vsel %vm541, %v2436, 0.0
    %v2444 = vrot.slane %v2425, 5
    %v2445 = vrot.slane %v2427, 5
    %v2446 = vrot.slane %v2429, 5
    %v2447 = vrot.slane %v2431, 5
    %v2448 = vsel %vm1498, %v2446, %v2447
    %v2449 = vsel %vm1498, %v2445, %v2446
    %v2450 = vsel %vm1498, %v2444, %v2445
    %v2451 = vsel %vm1498, %v2447, %v2444
    %v2452 = vsel %vm1490, %v2451, 0.0
    %v2453 = vsel %vm1491, %v2450, 0.0
    %v2454 = vsel %vm1492, %v2449, 0.0
    %v2455 = vsel %vm1493, %v2448, 0.0
    %v2456 = vsel %vm463, %v2440, %v2452
    %v2457 = vsel %vm463, %v2441, %v2453
    %v2458 = vsel %vm463, %v2442, %v2454
    %v2459 = vsel %vm463, %v2443, %v2455
    %v2460 = vpack.c.bf16 %v2457, %v2456
    %v2461 = vpack.c.bf16 %v2459, %v2458
    %2462 = vrot.lane.b32.xlu0 %v2418, 64
    %v2463 = vpop.permute.xlu0 %2462
    %2464 = vrot.lane.b32.xlu0 %v2419, 64
    %v2465 = vpop.permute.xlu0 %2464
    %2466 = vrot.lane.b32.xlu0 %v2420, 64
    %v2467 = vpop.permute.xlu0 %2466
    %2468 = vrot.lane.b32.xlu0 %v2421, 64
    %v2469 = vpop.permute.xlu0 %2468
    %v2470 = vrot.slane %v2463, 4
    %v2471 = vrot.slane %v2465, 4
    %v2472 = vrot.slane %v2467, 4
    %v2473 = vrot.slane %v2469, 4
    %v2474 = vsel %vm1547, %v2472, %v2473
    %v2475 = vsel %vm1547, %v2471, %v2472
    %v2476 = vsel %vm1547, %v2470, %v2471
    %v2477 = vsel %vm1547, %v2473, %v2470
    %v2478 = vsel %vm1539, %v2477, 0.0
    %v2479 = vsel %vm1540, %v2476, 0.0
    %v2480 = vsel %vm1541, %v2475, 0.0
    %v2481 = vsel %vm1542, %v2474, 0.0
    %v2482 = vrot.slane %v2463, 3
    %v2483 = vrot.slane %v2465, 3
    %v2484 = vrot.slane %v2467, 3
    %v2485 = vrot.slane %v2469, 3
    %v2486 = vsel %vm1582, %v2484, %v2485
    %v2487 = vsel %vm1582, %v2483, %v2484
    %v2488 = vsel %vm1582, %v2482, %v2483
    %v2489 = vsel %vm1582, %v2485, %v2482
    %v2490 = vsel %vm1574, %v2489, 0.0
    %v2491 = vsel %vm1575, %v2488, 0.0
    %v2492 = vsel %vm1576, %v2487, 0.0
    %v2493 = vsel %vm1577, %v2486, 0.0
    %v2494 = vsel %vm490, %v2478, %v2490
    %v2495 = vsel %vm490, %v2479, %v2491
    %v2496 = vsel %vm490, %v2480, %v2492
    %v2497 = vsel %vm490, %v2481, %v2493
    %v2498 = vpack.c.bf16 %v2495, %v2494
    %v2499 = vpack.c.bf16 %v2497, %v2496
    %2500 = vrot.lane.b32.xlu0 %v2418, 96
    %v2501 = vpop.permute.xlu0 %2500
    %2502 = vrot.lane.b32.xlu0 %v2419, 96
    %v2503 = vpop.permute.xlu0 %2502
    %2504 = vrot.lane.b32.xlu0 %v2420, 96
    %v2505 = vpop.permute.xlu0 %2504
    %2506 = vrot.lane.b32.xlu0 %v2421, 96
    %v2507 = vpop.permute.xlu0 %2506
    %vm2508 = vcmp.ge.s32.totalorder %v206, 6
    %vm2509 = vcmp.ge.s32.totalorder %v207, 6
    %vm2510 = vcmp.ge.s32.totalorder %v208, 6
    %vm2511 = vcmp.ge.s32.totalorder %v209, 6
    %v2512 = vrot.slane %v2501, 2
    %v2513 = vrot.slane %v2503, 2
    %v2514 = vrot.slane %v2505, 2
    %v2515 = vrot.slane %v2507, 2
    %vm2516 = vcmp.lt.s32.totalorder %v200, 6
    %v2517 = vsel %vm2516, %v2514, %v2515
    %v2518 = vsel %vm2516, %v2513, %v2514
    %v2519 = vsel %vm2516, %v2512, %v2513
    %v2520 = vsel %vm2516, %v2515, %v2512
    %v2521 = vsel %vm2508, %v2520, 0.0
    %v2522 = vsel %vm2509, %v2519, 0.0
    %v2523 = vsel %vm2510, %v2518, 0.0
    %v2524 = vsel %vm2511, %v2517, 0.0
    %vm2525 = vcmp.ge.s32.totalorder %v206, 7
    %vm2526 = vcmp.ge.s32.totalorder %v207, 7
    %vm2527 = vcmp.ge.s32.totalorder %v208, 7
    %vm2528 = vcmp.ge.s32.totalorder %v209, 7
    %v2529 = vrot.slane %v2501, 1
    %v2530 = vrot.slane %v2503, 1
    %v2531 = vrot.slane %v2505, 1
    %v2532 = vrot.slane %v2507, 1
    %vm2533 = vcmp.lt.s32.totalorder %v200, 7
    %v2534 = vsel %vm2533, %v2531, %v2532
    %v2535 = vsel %vm2533, %v2530, %v2531
    %v2536 = vsel %vm2533, %v2529, %v2530
    %v2537 = vsel %vm2533, %v2532, %v2529
    %v2538 = vsel %vm2525, %v2537, 0.0
    %v2539 = vsel %vm2526, %v2536, 0.0
    %v2540 = vsel %vm2527, %v2535, 0.0
    %v2541 = vsel %vm2528, %v2534, 0.0
    %v2542 = vsel %vm517, %v2521, %v2538
    %v2543 = vsel %vm517, %v2522, %v2539
    %v2544 = vsel %vm517, %v2523, %v2540
    %v2545 = vsel %vm517, %v2524, %v2541
    %v2546 = vpack.c.bf16 %v2543, %v2542
    %v2547 = vpack.c.bf16 %v2545, %v2544
    %vm2548 = vcmp.ge.s32.totalorder %v206, 9
    %vm2549 = vcmp.ge.s32.totalorder %v207, 9
    %vm2550 = vcmp.ge.s32.totalorder %v208, 9
    %vm2551 = vcmp.ge.s32.totalorder %v209, 9
    %v2552 = vrot.slane %v2418, 7
    %v2553 = vrot.slane %v2419, 7
    %v2554 = vrot.slane %v2420, 7
    %v2555 = vrot.slane %v2421, 7
    %v2556 = vsel %vm324, %v2554, %v2555
    %v2557 = vsel %vm324, %v2553, %v2554
    %v2558 = vsel %vm324, %v2552, %v2553
    %v2559 = vsel %vm324, %v2555, %v2552
    %v2560 = vsel %vm2548, %v2556, 0.0
    %v2561 = vsel %vm2549, %v2559, 0.0
    %v2562 = vsel %vm2550, %v2558, 0.0
    %v2563 = vsel %vm2551, %v2557, 0.0
    %v2564 = vpack.c.bf16 %v2561, %v2560
    %v2565 = vpack.c.bf16 %v2563, %v2562
    %vm2566 = vcmp.ge.s32.totalorder %v206, 11
    %vm2567 = vcmp.ge.s32.totalorder %v207, 11
    %vm2568 = vcmp.ge.s32.totalorder %v208, 11
    %vm2569 = vcmp.ge.s32.totalorder %v209, 11
    %v2570 = vsel %vm2566, %v2448, 0.0
    %v2571 = vsel %vm2567, %v2451, 0.0
    %v2572 = vsel %vm2568, %v2450, 0.0
    %v2573 = vsel %vm2569, %v2449, 0.0
    %vm2574 = vcmp.ge.s32.totalorder %v206, 12
    %vm2575 = vcmp.ge.s32.totalorder %v207, 12
    %vm2576 = vcmp.ge.s32.totalorder %v208, 12
    %vm2577 = vcmp.ge.s32.totalorder %v209, 12
    %v2578 = vrot.slane %v2425, 4
    %v2579 = vrot.slane %v2427, 4
    %v2580 = vrot.slane %v2429, 4
    %v2581 = vrot.slane %v2431, 4
    %v2582 = vsel %vm1547, %v2580, %v2581
    %v2583 = vsel %vm1547, %v2579, %v2580
    %v2584 = vsel %vm1547, %v2578, %v2579
    %v2585 = vsel %vm1547, %v2581, %v2578
    %v2586 = vsel %vm2574, %v2582, 0.0
    %v2587 = vsel %vm2575, %v2585, 0.0
    %v2588 = vsel %vm2576, %v2584, 0.0
    %v2589 = vsel %vm2577, %v2583, 0.0
    %v2590 = vsel %vm463, %v2570, %v2586
    %v2591 = vsel %vm463, %v2571, %v2587
    %v2592 = vsel %vm463, %v2572, %v2588
    %v2593 = vsel %vm463, %v2573, %v2589
    %v2594 = vpack.c.bf16 %v2591, %v2590
    %v2595 = vpack.c.bf16 %v2593, %v2592
    %vm2596 = vcmp.ge.s32.totalorder %v206, 13
    %vm2597 = vcmp.ge.s32.totalorder %v207, 13
    %vm2598 = vcmp.ge.s32.totalorder %v208, 13
    %vm2599 = vcmp.ge.s32.totalorder %v209, 13
    %v2600 = vsel %vm2596, %v2486, 0.0
    %v2601 = vsel %vm2597, %v2489, 0.0
    %v2602 = vsel %vm2598, %v2488, 0.0
    %v2603 = vsel %vm2599, %v2487, 0.0
    %vm2604 = vcmp.ge.s32.totalorder %v206, 14
    %vm2605 = vcmp.ge.s32.totalorder %v207, 14
    %vm2606 = vcmp.ge.s32.totalorder %v208, 14
    %vm2607 = vcmp.ge.s32.totalorder %v209, 14
    %v2608 = vrot.slane %v2463, 2
    %v2609 = vrot.slane %v2465, 2
    %v2610 = vrot.slane %v2467, 2
    %v2611 = vrot.slane %v2469, 2
    %v2612 = vsel %vm2516, %v2610, %v2611
    %v2613 = vsel %vm2516, %v2609, %v2610
    %v2614 = vsel %vm2516, %v2608, %v2609
    %v2615 = vsel %vm2516, %v2611, %v2608
    %v2616 = vsel %vm2604, %v2612, 0.0
    %v2617 = vsel %vm2605, %v2615, 0.0
    %v2618 = vsel %vm2606, %v2614, 0.0
    %v2619 = vsel %vm2607, %v2613, 0.0
    %v2620 = vsel %vm490, %v2600, %v2616
    %v2621 = vsel %vm490, %v2601, %v2617
    %v2622 = vsel %vm490, %v2602, %v2618
    %v2623 = vsel %vm490, %v2603, %v2619
    %v2624 = vpack.c.bf16 %v2621, %v2620
    %v2625 = vpack.c.bf16 %v2623, %v2622
    %v2626 = vld [vmem:[#allocation16] sm:$0xf]
    %v2627 = vld [vmem:[#allocation16 + $0x4] sm:$0xf]
    %v2628 = vld [vmem:[#allocation16 + $0x8] sm:$0xf]
    %v2629 = vld [vmem:[#allocation16 + $0xc] sm:$0xf]
    %v2630 = vld [vmem:[#allocation16 + $0x10] sm:$0xf]
    %v2631 = vld [vmem:[#allocation16 + $0x14] sm:$0xf]
    %v2632 = vld [vmem:[#allocation16 + $0x18] sm:$0xf]
    %v2633 = vld [vmem:[#allocation16 + $0x1c] sm:$0xf]
    %v2634 = vld [vmem:[#allocation16 + $0x20] sm:$0xf]
    %v2635 = vld [vmem:[#allocation16 + $0x24] sm:$0xf]
    %v2636 = vld [vmem:[#allocation16 + $0x28] sm:$0xf]
    %v2637 = vld [vmem:[#allocation16 + $0x2c] sm:$0xf]
    %v2638 = vld [vmem:[#allocation16 + $0x30] sm:$0xf]
    %v2639 = vld [vmem:[#allocation16 + $0x34] sm:$0xf]
    %v2640 = vld [vmem:[#allocation16 + $0x38] sm:$0xf]
    %v2641 = vld [vmem:[#allocation16 + $0x3c] sm:$0xf]
    %v2642 = vld [vmem:[#allocation16 + $0x40] sm:$0xf]
    %v2643 = vld [vmem:[#allocation16 + $0x44] sm:$0xf]
    %v2644 = vld [vmem:[#allocation16 + $0x48] sm:$0xf]
    %v2645 = vld [vmem:[#allocation16 + $0x4c] sm:$0xf]
    %v2646 = vld [vmem:[#allocation16 + $0x50] sm:$0xf]
    %v2647 = vld [vmem:[#allocation16 + $0x54] sm:$0xf]
    %v2648 = vld [vmem:[#allocation16 + $0x58] sm:$0xf]
    %v2649 = vld [vmem:[#allocation16 + $0x5c] sm:$0xf]
    %v2650 = vld [vmem:[#allocation16 + $0x60] sm:$0xf]
    %v2651 = vld [vmem:[#allocation16 + $0x64] sm:$0xf]
    %v2652 = vld [vmem:[#allocation16 + $0x68] sm:$0xf]
    %v2653 = vld [vmem:[#allocation16 + $0x6c] sm:$0xf]
    %v2654 = vld [vmem:[#allocation16 + $0x70] sm:$0xf]
    %v2655 = vld [vmem:[#allocation16 + $0x74] sm:$0xf]
    %v2656 = vld [vmem:[#allocation16 + $0x78] sm:$0xf]
    %v2657 = vld [vmem:[#allocation16 + $0x7c] sm:$0xf]
    %v2658 = vld [vmem:[#allocation16 + $0x80] sm:$0xf]
    %v2659 = vld [vmem:[#allocation16 + $0x84] sm:$0xf]
    %v2660 = vld [vmem:[#allocation16 + $0x88] sm:$0xf]
    %v2661 = vld [vmem:[#allocation16 + $0x8c] sm:$0xf]
    %v2662 = vld [vmem:[#allocation16 + $0x90] sm:$0xf]
    %v2663 = vld [vmem:[#allocation16 + $0x94] sm:$0xf]
    %v2664 = vld [vmem:[#allocation16 + $0x98] sm:$0xf]
    %v2665 = vld [vmem:[#allocation16 + $0x9c] sm:$0xf]
    %v2666 = vld [vmem:[#allocation16 + $0xa0] sm:$0xf]
    %v2667 = vld [vmem:[#allocation16 + $0xa4] sm:$0xf]
    %v2668 = vld [vmem:[#allocation16 + $0xa8] sm:$0xf]
    %v2669 = vld [vmem:[#allocation16 + $0xac] sm:$0xf]
    %v2670 = vld [vmem:[#allocation16 + $0xb0] sm:$0xf]
    %v2671 = vld [vmem:[#allocation16 + $0xb4] sm:$0xf]
    %v2672 = vld [vmem:[#allocation16 + $0xb8] sm:$0xf]
    %v2673 = vld [vmem:[#allocation16 + $0xbc] sm:$0xf]
    %v2674 = vld [vmem:[#allocation16 + $0xc0] sm:$0xf]
    %v2675 = vld [vmem:[#allocation16 + $0xc4] sm:$0xf]
    %v2676 = vld [vmem:[#allocation16 + $0xc8] sm:$0xf]
    %v2677 = vld [vmem:[#allocation16 + $0xcc] sm:$0xf]
    %v2678 = vld [vmem:[#allocation16 + $0xd0] sm:$0xf]
    %v2679 = vld [vmem:[#allocation16 + $0xd4] sm:$0xf]
    %v2680 = vld [vmem:[#allocation16 + $0xd8] sm:$0xf]
    %v2681 = vld [vmem:[#allocation16 + $0xdc] sm:$0xf]
    %v2682 = vld [vmem:[#allocation16 + $0xe0] sm:$0xf]
    %v2683 = vld [vmem:[#allocation16 + $0xe4] sm:$0xf]
    %v2684 = vld [vmem:[#allocation16 + $0xe8] sm:$0xf]
    %v2685 = vld [vmem:[#allocation16 + $0xec] sm:$0xf]
    %v2686 = vld [vmem:[#allocation16 + $0xf0] sm:$0xf]
    %v2687 = vld [vmem:[#allocation16 + $0xf4] sm:$0xf]
    %v2688 = vld [vmem:[#allocation16 + $0xf8] sm:$0xf]
    %v2689 = vld [vmem:[#allocation16 + $0xfc] sm:$0xf]
    %v2690 = vld [vmem:[#allocation16 + $0x100] sm:$0xf]
    %v2691 = vld [vmem:[#allocation16 + $0x104] sm:$0xf]
    %v2692 = vld [vmem:[#allocation16 + $0x108] sm:$0xf]
    %v2693 = vld [vmem:[#allocation16 + $0x10c] sm:$0xf]
    %v2694 = vld [vmem:[#allocation16 + $0x110] sm:$0xf]
    %v2695 = vld [vmem:[#allocation16 + $0x114] sm:$0xf]
    %v2696 = vld [vmem:[#allocation16 + $0x118] sm:$0xf]
    %v2697 = vld [vmem:[#allocation16 + $0x11c] sm:$0xf]
    %v2698 = vld [vmem:[#allocation16 + $0x120] sm:$0xf]
    %v2699 = vld [vmem:[#allocation16 + $0x124] sm:$0xf]
    %v2700 = vld [vmem:[#allocation16 + $0x128] sm:$0xf]
    %v2701 = vld [vmem:[#allocation16 + $0x12c] sm:$0xf]
    %v2702 = vld [vmem:[#allocation16 + $0x130] sm:$0xf]
    %v2703 = vld [vmem:[#allocation16 + $0x134] sm:$0xf]
    %v2704 = vld [vmem:[#allocation16 + $0x138] sm:$0xf]
    %v2705 = vld [vmem:[#allocation16 + $0x13c] sm:$0xf]
    %v2706 = vld [vmem:[#allocation16 + $0x140] sm:$0xf]
    %v2707 = vld [vmem:[#allocation16 + $0x144] sm:$0xf]
    %v2708 = vld [vmem:[#allocation16 + $0x148] sm:$0xf]
    %v2709 = vld [vmem:[#allocation16 + $0x14c] sm:$0xf]
    %v2710 = vld [vmem:[#allocation16 + $0x150] sm:$0xf]
    %v2711 = vld [vmem:[#allocation16 + $0x154] sm:$0xf]
    %v2712 = vld [vmem:[#allocation16 + $0x158] sm:$0xf]
    %v2713 = vld [vmem:[#allocation16 + $0x15c] sm:$0xf]
    %v2714 = vld [vmem:[#allocation16 + $0x160] sm:$0xf]
    %v2715 = vld [vmem:[#allocation16 + $0x164] sm:$0xf]
    %v2716 = vld [vmem:[#allocation16 + $0x168] sm:$0xf]
    %v2717 = vld [vmem:[#allocation16 + $0x16c] sm:$0xf]
    %v2718 = vld [vmem:[#allocation16 + $0x170] sm:$0xf]
    %v2719 = vld [vmem:[#allocation16 + $0x174] sm:$0xf]
    %v2720 = vld [vmem:[#allocation16 + $0x178] sm:$0xf]
    %v2721 = vld [vmem:[#allocation16 + $0x17c] sm:$0xf]
    %v2722 = vld [vmem:[#allocation16 + $0x180] sm:$0xf]
    %v2723 = vld [vmem:[#allocation16 + $0x184] sm:$0xf]
    %v2724 = vld [vmem:[#allocation16 + $0x188] sm:$0xf]
    %v2725 = vld [vmem:[#allocation16 + $0x18c] sm:$0xf]
    %v2726 = vld [vmem:[#allocation16 + $0x190] sm:$0xf]
    %v2727 = vld [vmem:[#allocation16 + $0x194] sm:$0xf]
    %v2728 = vld [vmem:[#allocation16 + $0x198] sm:$0xf]
    %v2729 = vld [vmem:[#allocation16 + $0x19c] sm:$0xf]
    %v2730 = vld [vmem:[#allocation16 + $0x1a0] sm:$0xf]
    %v2731 = vld [vmem:[#allocation16 + $0x1a4] sm:$0xf]
    %v2732 = vld [vmem:[#allocation16 + $0x1a8] sm:$0xf]
    %v2733 = vld [vmem:[#allocation16 + $0x1ac] sm:$0xf]
    %v2734 = vld [vmem:[#allocation16 + $0x1b0] sm:$0xf]
    %v2735 = vld [vmem:[#allocation16 + $0x1b4] sm:$0xf]
    %v2736 = vld [vmem:[#allocation16 + $0x1b8] sm:$0xf]
    %v2737 = vld [vmem:[#allocation16 + $0x1bc] sm:$0xf]
    %v2738 = vld [vmem:[%s13] sm:$0x1]
    %v2740 = vlaneseq
    %v2741 = vshrl.u32 %v2740, 7
    %v2742 = vsub.s32 0, %v2741
    %v2743 = vrot.slane %v2738, %v2742
    %v2857 = vunpack.c.l.b16 %v2626
    %v2858 = vunpack.c.l.b16 %v2627
    %v2859 = vunpack.c.l.b16 %v2628
    %v2860 = vunpack.c.l.b16 %v2629
    %v2861 = vunpack.c.l.b16 %v2630
    %v2862 = vunpack.c.l.b16 %v2631
    %v2863 = vunpack.c.l.b16 %v2632
    %v2864 = vunpack.c.l.b16 %v2633
    %v2865 = vunpack.c.l.b16 %v2634
    %v2866 = vunpack.c.l.b16 %v2635
    %v2867 = vunpack.c.l.b16 %v2636
    %v2868 = vunpack.c.l.b16 %v2637
    %v2869 = vunpack.c.l.b16 %v2638
    %v2870 = vunpack.c.l.b16 %v2639
    %v2871 = vunpack.c.l.b16 %v2640
    %v2872 = vunpack.c.l.b16 %v2641
    %v2873 = vunpack.c.l.b16 %v2642
    %v2874 = vunpack.c.l.b16 %v2643
    %v2875 = vunpack.c.l.b16 %v2644
    %v2876 = vunpack.c.l.b16 %v2645
    %v2877 = vunpack.c.l.b16 %v2646
    %v2878 = vunpack.c.l.b16 %v2647
    %v2879 = vunpack.c.l.b16 %v2648
    %v2880 = vunpack.c.l.b16 %v2649
    %v2881 = vunpack.c.l.b16 %v2650
    %v2882 = vunpack.c.l.b16 %v2651
    %v2883 = vunpack.c.l.b16 %v2652
    %v2884 = vunpack.c.l.b16 %v2653
    %v2885 = vunpack.c.l.b16 %v2654
    %v2886 = vunpack.c.l.b16 %v2655
    %v2887 = vunpack.c.l.b16 %v2656
    %v2888 = vunpack.c.l.b16 %v2657
    %v2889 = vunpack.c.l.b16 %v2658
    %v2890 = vunpack.c.l.b16 %v2659
    %v2891 = vunpack.c.l.b16 %v2660
    %v2892 = vunpack.c.l.b16 %v2661
    %v2893 = vunpack.c.l.b16 %v2662
    %v2894 = vunpack.c.l.b16 %v2663
    %v2895 = vunpack.c.l.b16 %v2664
    %v2896 = vunpack.c.l.b16 %v2665
    %v2897 = vunpack.c.l.b16 %v2666
    %v2898 = vunpack.c.l.b16 %v2667
    %v2899 = vunpack.c.l.b16 %v2668
    %v2900 = vunpack.c.l.b16 %v2669
    %v2901 = vunpack.c.l.b16 %v2670
    %v2902 = vunpack.c.l.b16 %v2671
    %v2903 = vunpack.c.l.b16 %v2672
    %v2904 = vunpack.c.l.b16 %v2673
    %v2905 = vunpack.c.l.b16 %v2674
    %v2906 = vunpack.c.l.b16 %v2675
    %v2907 = vunpack.c.l.b16 %v2676
    %v2908 = vunpack.c.l.b16 %v2677
    %v2909 = vunpack.c.l.b16 %v2678
    %v2910 = vunpack.c.l.b16 %v2679
    %v2911 = vunpack.c.l.b16 %v2680
    %v2912 = vunpack.c.l.b16 %v2681
    %v2913 = vunpack.c.l.b16 %v2682
    %v2914 = vunpack.c.l.b16 %v2683
    %v2915 = vunpack.c.l.b16 %v2684
    %v2916 = vunpack.c.l.b16 %v2685
    %v2917 = vunpack.c.l.b16 %v2686
    %v2918 = vunpack.c.l.b16 %v2687
    %v2919 = vunpack.c.l.b16 %v2688
    %v2920 = vunpack.c.l.b16 %v2689
    %v2921 = vunpack.c.l.b16 %v2690
    %v2922 = vunpack.c.l.b16 %v2691
    %v2923 = vunpack.c.l.b16 %v2692
    %v2924 = vunpack.c.l.b16 %v2693
    %v2925 = vunpack.c.l.b16 %v2694
    %v2926 = vunpack.c.l.b16 %v2695
    %v2927 = vunpack.c.l.b16 %v2696
    %v2928 = vunpack.c.l.b16 %v2697
    %v2929 = vunpack.c.l.b16 %v2698
    %v2930 = vunpack.c.l.b16 %v2699
    %v2931 = vunpack.c.l.b16 %v2700
    %v2932 = vunpack.c.l.b16 %v2701
    %v2933 = vunpack.c.l.b16 %v2702
    %v2934 = vunpack.c.l.b16 %v2703
    %v2935 = vunpack.c.l.b16 %v2704
    %v2936 = vunpack.c.l.b16 %v2705
    %v2937 = vunpack.c.l.b16 %v2706
    %v2938 = vunpack.c.l.b16 %v2707
    %v2939 = vunpack.c.l.b16 %v2708
    %v2940 = vunpack.c.l.b16 %v2709
    %v2941 = vunpack.c.l.b16 %v2710
    %v2942 = vunpack.c.l.b16 %v2711
    %v2943 = vunpack.c.l.b16 %v2712
    %v2944 = vunpack.c.l.b16 %v2713
    %v2945 = vunpack.c.l.b16 %v2714
    %v2946 = vunpack.c.l.b16 %v2715
    %v2947 = vunpack.c.l.b16 %v2716
    %v2948 = vunpack.c.l.b16 %v2717
    %v2949 = vunpack.c.l.b16 %v2718
    %v2950 = vunpack.c.l.b16 %v2719
    %v2951 = vunpack.c.l.b16 %v2720
    %v2952 = vunpack.c.l.b16 %v2721
    %v2953 = vunpack.c.l.b16 %v2722
    %v2954 = vunpack.c.l.b16 %v2723
    %v2955 = vunpack.c.l.b16 %v2724
    %v2956 = vunpack.c.l.b16 %v2725
    %v2957 = vunpack.c.l.b16 %v2726
    %v2958 = vunpack.c.l.b16 %v2727
    %v2959 = vunpack.c.l.b16 %v2728
    %v2960 = vunpack.c.l.b16 %v2729
    %v2961 = vunpack.c.l.b16 %v2730
    %v2962 = vunpack.c.l.b16 %v2731
    %v2963 = vunpack.c.l.b16 %v2732
    %v2964 = vunpack.c.l.b16 %v2733
    %v2965 = vunpack.c.l.b16 %v2734
    %v2966 = vunpack.c.l.b16 %v2735
    %v2967 = vunpack.c.l.b16 %v2736
    %v2968 = vunpack.c.l.b16 %v2737
    %v2969 = vpack.c.b16 %v2858, %v2857
    %v2970 = vpack.c.b16 %v2860, %v2859
    %v2971 = vpack.c.b16 %v2862, %v2861
    %v2972 = vpack.c.b16 %v2864, %v2863
    %v2973 = vpack.c.b16 %v2866, %v2865
    %v2974 = vpack.c.b16 %v2868, %v2867
    %v2975 = vpack.c.b16 %v2870, %v2869
    %v2976 = vpack.c.b16 %v2872, %v2871
    %v2977 = vpack.c.b16 %v2874, %v2873
    %v2978 = vpack.c.b16 %v2876, %v2875
    %v2979 = vpack.c.b16 %v2878, %v2877
    %v2980 = vpack.c.b16 %v2880, %v2879
    %v2981 = vpack.c.b16 %v2882, %v2881
    %v2982 = vpack.c.b16 %v2884, %v2883
    %v2983 = vpack.c.b16 %v2886, %v2885
    %v2984 = vpack.c.b16 %v2888, %v2887
    %v2985 = vpack.c.b16 %v2890, %v2889
    %v2986 = vpack.c.b16 %v2892, %v2891
    %v2987 = vpack.c.b16 %v2894, %v2893
    %v2988 = vpack.c.b16 %v2896, %v2895
    %v2989 = vpack.c.b16 %v2898, %v2897
    %v2990 = vpack.c.b16 %v2900, %v2899
    %v2991 = vpack.c.b16 %v2902, %v2901
    %v2992 = vpack.c.b16 %v2904, %v2903
    %v2993 = vpack.c.b16 %v2906, %v2905
    %v2994 = vpack.c.b16 %v2908, %v2907
    %v2995 = vpack.c.b16 %v2910, %v2909
    %v2996 = vpack.c.b16 %v2912, %v2911
    %v2997 = vpack.c.b16 %v2914, %v2913
    %v2998 = vpack.c.b16 %v2916, %v2915
    %v2999 = vpack.c.b16 %v2918, %v2917
    %v3000 = vpack.c.b16 %v2920, %v2919
    %v3001 = vpack.c.b16 %v2922, %v2921
    %v3002 = vpack.c.b16 %v2924, %v2923
    %v3003 = vpack.c.b16 %v2926, %v2925
    %v3004 = vpack.c.b16 %v2928, %v2927
    %v3005 = vpack.c.b16 %v2930, %v2929
    %v3006 = vpack.c.b16 %v2932, %v2931
    %v3007 = vpack.c.b16 %v2934, %v2933
    %v3008 = vpack.c.b16 %v2936, %v2935
    %v3009 = vpack.c.b16 %v2938, %v2937
    %v3010 = vpack.c.b16 %v2940, %v2939
    %v3011 = vpack.c.b16 %v2942, %v2941
    %v3012 = vpack.c.b16 %v2944, %v2943
    %v3013 = vpack.c.b16 %v2946, %v2945
    %v3014 = vpack.c.b16 %v2948, %v2947
    %v3015 = vpack.c.b16 %v2950, %v2949
    %v3016 = vpack.c.b16 %v2952, %v2951
    %v3017 = vpack.c.b16 %v2954, %v2953
    %v3018 = vpack.c.b16 %v2956, %v2955
    %v3019 = vpack.c.b16 %v2958, %v2957
    %v3020 = vpack.c.b16 %v2960, %v2959
    %v3021 = vpack.c.b16 %v2962, %v2961
    %v3022 = vpack.c.b16 %v2964, %v2963
    %v3023 = vpack.c.b16 %v2966, %v2965
    %v3024 = vpack.c.b16 %v2968, %v2967
    %3081 = vmatprep.subr.bf16.mxu0 0
    %3082 = vmatpush1.bf16.msra.mxu0 %v2976
    %3083 = vmatprep.subr.bf16.mxu0 0
    %3084 = vmatpush1.bf16.msra.mxu0 %v2975
    %3085 = vmatprep.subr.bf16.mxu0 0
    %3086 = vmatpush1.bf16.msra.mxu0 %v2974
    %3087 = vmatprep.subr.bf16.mxu0 0
    %3088 = vmatpush1.bf16.msra.mxu0 %v2973
    %3089 = vmatprep.subr.bf16.mxu0 0
    %3090 = vmatpush1.bf16.msra.mxu0 %v2972
    %3091 = vmatprep.subr.bf16.mxu0 0
    %3092 = vmatpush1.bf16.msra.mxu0 %v2971
    %3093 = vmatprep.subr.bf16.mxu0 0
    %3094 = vmatpush1.bf16.msra.mxu0 %v2970
    %3095 = vmatprep.subr.bf16.mxu0 0
    %3096 = vmatpush1.bf16.msra.mxu0 %v2969
    %3097 = vmatprep.subr.bf16.mxu0 0
    %3098 = vmatpush2.bf16.msra.mxu0 %v2984
    %3099 = vmatprep.subr.bf16.mxu0 0
    %3100 = vmatpush2.bf16.msra.mxu0 %v2983
    %3101 = vmatprep.subr.bf16.mxu0 0
    %3102 = vmatpush2.bf16.msra.mxu0 %v2982
    %3103 = vmatprep.subr.bf16.mxu0 0
    %3104 = vmatpush2.bf16.msra.mxu0 %v2981
    %3105 = vmatprep.subr.bf16.mxu0 0
    %3106 = vmatpush2.bf16.msra.mxu0 %v2980
    %3107 = vmatprep.subr.bf16.mxu0 0
    %3108 = vmatpush2.bf16.msra.mxu0 %v2979
    %3109 = vmatprep.subr.bf16.mxu0 0
    %3110 = vmatpush2.bf16.msra.mxu0 %v2978
    %3111 = vmatprep.subr.bf16.mxu0 0
    %3112 = vmatpush2.bf16.msra.mxu0 %v2977
    %3113 = vmatprep.mubr.bf16.mxu0 %v2460
    %3114 = vmatmul.mubr.bf16.gmra.mxu0 %v2422
    %v3115 = vpop.f32.mrf.mxu0
    %v3116 = vadd.f32 %v2743, %v3115
    %v3117 = vpop.f32.mrf.mxu0
    %v3118 = vpop.f32.mrf.mxu0
    %v3119 = vadd.f32 %v2743, %v3118
    %v3120 = vpop.f32.mrf.mxu0
    %3121 = vmatprep.mubr.bf16.mxu0 %v2461
    %3122 = vmatmul.mubr.bf16.gmra.mxu0 %v2423
    %v3123 = vpop.f32.mrf.mxu0
    %v3124 = vadd.f32 %v2743, %v3123
    %v3125 = vpop.f32.mrf.mxu0
    %v3126 = vpop.f32.mrf.mxu0
    %v3127 = vadd.f32 %v2743, %v3126
    %v3128 = vpop.f32.mrf.mxu0
    %3129 = vdwg.mxu0
    %3130 = vmatprep.subr.bf16.mxu0 0
    %3131 = vmatpush1.bf16.msra.mxu0 %v2992
    %3132 = vmatprep.subr.bf16.mxu0 0
    %3133 = vmatpush1.bf16.msra.mxu0 %v2991
    %3134 = vmatprep.subr.bf16.mxu0 0
    %3135 = vmatpush1.bf16.msra.mxu0 %v2990
    %3136 = vmatprep.subr.bf16.mxu0 0
    %3137 = vmatpush1.bf16.msra.mxu0 %v2989
    %3138 = vmatprep.subr.bf16.mxu0 0
    %3139 = vmatpush1.bf16.msra.mxu0 %v2988
    %3140 = vmatprep.subr.bf16.mxu0 0
    %3141 = vmatpush1.bf16.msra.mxu0 %v2987
    %3142 = vmatprep.subr.bf16.mxu0 0
    %3143 = vmatpush1.bf16.msra.mxu0 %v2986
    %3144 = vmatprep.subr.bf16.mxu0 0
    %3145 = vmatpush1.bf16.msra.mxu0 %v2985
    %3146 = vmatprep.subr.bf16.mxu0 0
    %3147 = vmatpush2.bf16.msra.mxu0 %v3000
    %3148 = vmatprep.subr.bf16.mxu0 0
    %3149 = vmatpush2.bf16.msra.mxu0 %v2999
    %3150 = vmatprep.subr.bf16.mxu0 0
    %3151 = vmatpush2.bf16.msra.mxu0 %v2998
    %3152 = vmatprep.subr.bf16.mxu0 0
    %3153 = vmatpush2.bf16.msra.mxu0 %v2997
    %3154 = vmatprep.subr.bf16.mxu0 0
    %3155 = vmatpush2.bf16.msra.mxu0 %v2996
    %3156 = vmatprep.subr.bf16.mxu0 0
    %3157 = vmatpush2.bf16.msra.mxu0 %v2995
    %3158 = vmatprep.subr.bf16.mxu0 0
    %3159 = vmatpush2.bf16.msra.mxu0 %v2994
    %3160 = vmatprep.subr.bf16.mxu0 0
    %3161 = vmatpush2.bf16.msra.mxu0 %v2993
    %3162 = vmatprep.mubr.bf16.mxu0 %v2546
    %3163 = vmatmul.mubr.bf16.gmra.mxu0 %v2498
    %v3164 = vpop.f32.mrf.mxu0
    %v3165 = vadd.f32 %v3116, %v3164
    %v3166 = vpop.f32.mrf.mxu0
    %v3167 = vpop.f32.mrf.mxu0
    %v3168 = vadd.f32 %v3119, %v3167
    %v3169 = vpop.f32.mrf.mxu0
    %3170 = vmatprep.mubr.bf16.mxu0 %v2547
    %3171 = vmatmul.mubr.bf16.gmra.mxu0 %v2499
    %v3172 = vpop.f32.mrf.mxu0
    %v3173 = vadd.f32 %v3124, %v3172
    %v3174 = vpop.f32.mrf.mxu0
    %v3175 = vpop.f32.mrf.mxu0
    %v3176 = vadd.f32 %v3127, %v3175
    %v3177 = vpop.f32.mrf.mxu0
    %3178 = vdwg.mxu0
    %3179 = vmatprep.subr.bf16.mxu0 0
    %3180 = vmatpush1.bf16.msra.mxu0 %v3008
    %3181 = vmatprep.subr.bf16.mxu0 0
    %3182 = vmatpush1.bf16.msra.mxu0 %v3007
    %3183 = vmatprep.subr.bf16.mxu0 0
    %3184 = vmatpush1.bf16.msra.mxu0 %v3006
    %3185 = vmatprep.subr.bf16.mxu0 0
    %3186 = vmatpush1.bf16.msra.mxu0 %v3005
    %3187 = vmatprep.subr.bf16.mxu0 0
    %3188 = vmatpush1.bf16.msra.mxu0 %v3004
    %3189 = vmatprep.subr.bf16.mxu0 0
    %3190 = vmatpush1.bf16.msra.mxu0 %v3003
    %3191 = vmatprep.subr.bf16.mxu0 0
    %3192 = vmatpush1.bf16.msra.mxu0 %v3002
    %3193 = vmatprep.subr.bf16.mxu0 0
    %3194 = vmatpush1.bf16.msra.mxu0 %v3001
    %3195 = vmatprep.subr.bf16.mxu0 0
    %3196 = vmatpush2.bf16.msra.mxu0 %v3016
    %3197 = vmatprep.subr.bf16.mxu0 0
    %3198 = vmatpush2.bf16.msra.mxu0 %v3015
    %3199 = vmatprep.subr.bf16.mxu0 0
    %3200 = vmatpush2.bf16.msra.mxu0 %v3014
    %3201 = vmatprep.subr.bf16.mxu0 0
    %3202 = vmatpush2.bf16.msra.mxu0 %v3013
    %3203 = vmatprep.subr.bf16.mxu0 0
    %3204 = vmatpush2.bf16.msra.mxu0 %v3012
    %3205 = vmatprep.subr.bf16.mxu0 0
    %3206 = vmatpush2.bf16.msra.mxu0 %v3011
    %3207 = vmatprep.subr.bf16.mxu0 0
    %3208 = vmatpush2.bf16.msra.mxu0 %v3010
    %3209 = vmatprep.subr.bf16.mxu0 0
    %3210 = vmatpush2.bf16.msra.mxu0 %v3009
    %3211 = vmatprep.mubr.bf16.mxu0 %v2594
    %3212 = vmatmul.mubr.bf16.gmra.mxu0 %v2564
    %v3213 = vpop.f32.mrf.mxu0
    %v3214 = vadd.f32 %v3165, %v3213
    %v3215 = vpop.f32.mrf.mxu0
    %v3216 = vpop.f32.mrf.mxu0
    %v3217 = vadd.f32 %v3168, %v3216
    %v3218 = vpop.f32.mrf.mxu0
    %3219 = vmatprep.mubr.bf16.mxu0 %v2595
    %3220 = vmatmul.mubr.bf16.gmra.mxu0 %v2565
    %v3221 = vpop.f32.mrf.mxu0
    %v3222 = vadd.f32 %v3173, %v3221
    %v3223 = vpop.f32.mrf.mxu0
    %v3224 = vpop.f32.mrf.mxu0
    %v3225 = vadd.f32 %v3176, %v3224
    %v3226 = vpop.f32.mrf.mxu0
    %3227 = vdwg.mxu0
    %3228 = vmatprep.subr.bf16.mxu0 0
    %3229 = vmatpush1.bf16.msra.mxu0 %v3024
    %3230 = vmatprep.subr.bf16.mxu0 0
    %3231 = vmatpush1.bf16.msra.mxu0 %v3023
    %3232 = vmatprep.subr.bf16.mxu0 0
    %3233 = vmatpush1.bf16.msra.mxu0 %v3022
    %3234 = vmatprep.subr.bf16.mxu0 0
    %3235 = vmatpush1.bf16.msra.mxu0 %v3021
    %3236 = vmatprep.subr.bf16.mxu0 0
    %3237 = vmatpush1.bf16.msra.mxu0 %v3020
    %3238 = vmatprep.subr.bf16.mxu0 0
    %3239 = vmatpush1.bf16.msra.mxu0 %v3019
    %3240 = vmatprep.subr.bf16.mxu0 0
    %3241 = vmatpush1.bf16.msra.mxu0 %v3018
    %3242 = vmatprep.subr.bf16.mxu0 0
    %3243 = vmatpush1.bf16.msra.mxu0 %v3017
    %3244 = vmatprep.subr.bf16.mxu0 0
    %3245 = vmatpush2.bf16.msra.mxu0 0
    %3246 = vmatprep.subr.bf16.mxu0 0
    %3247 = vmatpush2.bf16.msra.mxu0 0
    %3248 = vmatprep.subr.bf16.mxu0 0
    %3249 = vmatpush2.bf16.msra.mxu0 0
    %3250 = vmatprep.subr.bf16.mxu0 0
    %3251 = vmatpush2.bf16.msra.mxu0 0
    %3252 = vmatprep.subr.bf16.mxu0 0
    %3253 = vmatpush2.bf16.msra.mxu0 0
    %3254 = vmatprep.subr.bf16.mxu0 0
    %3255 = vmatpush2.bf16.msra.mxu0 0
    %3256 = vmatprep.subr.bf16.mxu0 0
    %3257 = vmatpush2.bf16.msra.mxu0 0
    %3258 = vmatprep.subr.bf16.mxu0 0
    %3259 = vmatpush2.bf16.msra.mxu0 0
    %3260 = vmatprep.mubr.bf16.mxu0 0
    %3261 = vmatmul.mubr.bf16.gmra.mxu0 %v2624
    %v3262 = vpop.f32.mrf.mxu0
    %v3263 = vadd.f32 %v3214, %v3262
    %v3264 = vpop.f32.mrf.mxu0
    %v3265 = vpop.f32.mrf.mxu0
    %v3266 = vadd.f32 %v3217, %v3265
    %v3267 = vpop.f32.mrf.mxu0
    %3268 = vmatprep.mubr.bf16.mxu0 0
    %3269 = vmatmul.mubr.bf16.gmra.mxu0 %v2625
    %v3270 = vpop.f32.mrf.mxu0
    %v3271 = vadd.f32 %v3222, %v3270
    %v3272 = vpop.f32.mrf.mxu0
    %v3273 = vpop.f32.mrf.mxu0
    %v3274 = vadd.f32 %v3225, %v3273
    %v3275 = vpop.f32.mrf.mxu0
    %3276 = vdwg.mxu0
    %vm3277 = vcmp.gt.f32.partialorder %v3263, 0.0
    %vm3278 = vcmp.gt.f32.partialorder %v3266, 0.0
    %vm3279 = vcmp.gt.f32.partialorder %v3271, 0.0
    %vm3280 = vcmp.gt.f32.partialorder %v3274, 0.0
    %v3281 = vmin.f32 %v3263, 0.0
    %v3282 = vmin.f32 %v3266, 0.0
    %v3283 = vmin.f32 %v3271, 0.0
    %v3284 = vmin.f32 %v3274, 0.0
    %v3285 = vmul.f32 %v3281, 1.442695
    %v3286 = vpow.pop %v3285
    %v3287 = vmul.f32 %v3282, 1.442695
    %v3288 = vpow.pop %v3287
    %v3289 = vmul.f32 %v3283, 1.442695
    %v3290 = vpow.pop %v3289
    %v3291 = vmul.f32 %v3284, 1.442695
    %v3292 = vpow.pop %v3291
    %v3293 = vsub.f32 %v3286, 1.0
    %v3294 = vsub.f32 %v3288, 1.0
    %v3295 = vsub.f32 %v3290, 1.0
    %v3296 = vsub.f32 %v3292, 1.0
    %v3297 = vsel %vm3277, %v3263, %v3293
    %v3298 = vsel %vm3278, %v3266, %v3294
    %v3299 = vsel %vm3279, %v3271, %v3295
    %v3300 = vsel %vm3280, %v3274, %v3296
    %v3301 = vpack.c.bf16 %v3298, %v3297
    %v3302 = vpack.c.bf16 %v3300, %v3299
    %v3303 = vld [vmem:[#allocation18] sm:$0xf]
    %v3304 = vld [vmem:[#allocation18 + $0x4] sm:$0xf]
    %v3305 = vld [vmem:[#allocation18 + $0x8] sm:$0xf]
    %v3306 = vld [vmem:[#allocation18 + $0xc] sm:$0xf]
    %v3307 = vld [vmem:[#allocation18 + $0x10] sm:$0xf]
    %v3308 = vld [vmem:[#allocation18 + $0x14] sm:$0xf]
    %v3309 = vld [vmem:[#allocation18 + $0x18] sm:$0xf]
    %v3310 = vld [vmem:[#allocation18 + $0x1c] sm:$0xf]
    %v3311 = vld [vmem:[#allocation18 + $0x20] sm:$0xf]
    %v3312 = vld [vmem:[#allocation18 + $0x24] sm:$0xf]
    %v3313 = vld [vmem:[#allocation18 + $0x28] sm:$0xf]
    %v3314 = vld [vmem:[#allocation18 + $0x2c] sm:$0xf]
    %v3315 = vld [vmem:[#allocation18 + $0x30] sm:$0xf]
    %v3316 = vld [vmem:[#allocation18 + $0x34] sm:$0xf]
    %v3317 = vld [vmem:[#allocation18 + $0x38] sm:$0xf]
    %v3318 = vld [vmem:[#allocation18 + $0x3c] sm:$0xf]
    %v3319 = vld [vmem:[%s15] sm:$0x1]
    %v3321 = vlaneseq
    %v3322 = vshrl.u32 %v3321, 7
    %v3323 = vsub.s32 0, %v3322
    %v3324 = vrot.slane %v3319, %v3323
    %v3342 = vunpack.c.l.b16 %v3303
    %v3343 = vunpack.c.l.b16 %v3304
    %v3344 = vunpack.c.l.b16 %v3305
    %v3345 = vunpack.c.l.b16 %v3306
    %v3346 = vunpack.c.l.b16 %v3307
    %v3347 = vunpack.c.l.b16 %v3308
    %v3348 = vunpack.c.l.b16 %v3309
    %v3349 = vunpack.c.l.b16 %v3310
    %v3350 = vunpack.c.l.b16 %v3311
    %v3351 = vunpack.c.l.b16 %v3312
    %v3352 = vunpack.c.l.b16 %v3313
    %v3353 = vunpack.c.l.b16 %v3314
    %v3354 = vunpack.c.l.b16 %v3315
    %v3355 = vunpack.c.l.b16 %v3316
    %v3356 = vunpack.c.l.b16 %v3317
    %v3357 = vunpack.c.l.b16 %v3318
    %v3358 = vpack.c.b16 %v3343, %v3342
    %v3359 = vpack.c.b16 %v3345, %v3344
    %v3360 = vpack.c.b16 %v3347, %v3346
    %v3361 = vpack.c.b16 %v3349, %v3348
    %v3362 = vpack.c.b16 %v3351, %v3350
    %v3363 = vpack.c.b16 %v3353, %v3352
    %v3364 = vpack.c.b16 %v3355, %v3354
    %v3365 = vpack.c.b16 %v3357, %v3356
    %3374 = vmatprep.subr.bf16.mxu0 0
    %3375 = vmatpush1.bf16.msra.mxu0 %v3365
    %3376 = vmatprep.subr.bf16.mxu0 0
    %3377 = vmatpush1.bf16.msra.mxu0 %v3364
    %3378 = vmatprep.subr.bf16.mxu0 0
    %3379 = vmatpush1.bf16.msra.mxu0 %v3363
    %3380 = vmatprep.subr.bf16.mxu0 0
    %3381 = vmatpush1.bf16.msra.mxu0 %v3362
    %3382 = vmatprep.subr.bf16.mxu0 0
    %3383 = vmatpush1.bf16.msra.mxu0 %v3361
    %3384 = vmatprep.subr.bf16.mxu0 0
    %3385 = vmatpush1.bf16.msra.mxu0 %v3360
    %3386 = vmatprep.subr.bf16.mxu0 0
    %3387 = vmatpush1.bf16.msra.mxu0 %v3359
    %3388 = vmatprep.subr.bf16.mxu0 0
    %3389 = vmatpush1.bf16.msra.mxu0 %v3358
    %3390 = vmatprep.subr.bf16.mxu0 0
    %3391 = vmatpush2.bf16.msra.mxu0 0
    %3392 = vmatprep.subr.bf16.mxu0 0
    %3393 = vmatpush2.bf16.msra.mxu0 0
    %3394 = vmatprep.subr.bf16.mxu0 0
    %3395 = vmatpush2.bf16.msra.mxu0 0
    %3396 = vmatprep.subr.bf16.mxu0 0
    %3397 = vmatpush2.bf16.msra.mxu0 0
    %3398 = vmatprep.subr.bf16.mxu0 0
    %3399 = vmatpush2.bf16.msra.mxu0 0
    %3400 = vmatprep.subr.bf16.mxu0 0
    %3401 = vmatpush2.bf16.msra.mxu0 0
    %3402 = vmatprep.subr.bf16.mxu0 0
    %3403 = vmatpush2.bf16.msra.mxu0 0
    %3404 = vmatprep.subr.bf16.mxu0 0
    %3405 = vmatpush2.bf16.msra.mxu0 0
    %3406 = vmatprep.mubr.bf16.mxu0 0
    %3407 = vmatmul.mubr.bf16.gmra.mxu0 %v3301
    %v3408 = vpop.f32.mrf.mxu0
    %v3409 = vadd.f32 %v3324, %v3408
    %v3410 = vpop.f32.mrf.mxu0
    %v3411 = vpop.f32.mrf.mxu0
    %v3412 = vadd.f32 %v3324, %v3411
    %v3413 = vpop.f32.mrf.mxu0
    %3414 = vmatprep.mubr.bf16.mxu0 0
    %3415 = vmatmul.mubr.bf16.gmra.mxu0 %v3302
    %v3416 = vpop.f32.mrf.mxu0
    %v3417 = vadd.f32 %v3324, %v3416
    %v3418 = vpop.f32.mrf.mxu0
    %v3419 = vpop.f32.mrf.mxu0
    %v3420 = vadd.f32 %v3324, %v3419
    %v3421 = vpop.f32.mrf.mxu0
    %3422 = vdwg.mxu0
    %v3423 = vadd.f32 %v2418, %v3409
    %v3424 = vadd.f32 %v2419, %v3412
    %v3425 = vadd.f32 %v2420, %v3417
    %v3426 = vadd.f32 %v2421, %v3420
    %3427 = vst [vmem:[%s16] sm:$0xff] %v3423
    %3428 = vst [vmem:[%s16 + $0x8] sm:$0xff] %v3424
    %3429 = vst [vmem:[%s16 + $0x10] sm:$0xff] %v3425
    %3430 = vst [vmem:[%s16 + $0x18] sm:$0xff] %v3426
    // Predicated region
    $region110: #{decoder_block_forward.1} parent=1 // pred_check
      _
    $region111: #{decoder_block_forward.1} parent=1 // pred_check_branch
      %3432 = sbr.rel (0) target = $region113
    $region112: #{decoder_block_forward.1} parent=1 // pred_region
      _
    $region113: #{decoder_block_forward.1} parent=1 // pred_fallthru
      _
    // Predicated region
    $region114: #{decoder_block_forward.1} parent=1 // pred_check
      _
    $region115: #{decoder_block_forward.1} parent=1 // pred_check_branch
      %3434 = sbr.rel (0) target = $region117
    $region116: #{decoder_block_forward.1} parent=1 // pred_region
      _
    $region117: #{decoder_block_forward.1} parent=1 // pred_fallthru
      _
    %3435 = vsyncpa [#allocation3], 1
    %3436 = vsyncpa [#allocation5], 1
    %3437 = vsyncpa [#allocation8], 1
    %3438 = vsyncpa [#allocation11], 1
    %3439 = vsyncpa [#allocation14], 1
    %3440 = vsyncpa [#allocation17], 1

</llo_original>
